<compile_context>
chip_gen: v6e
topology: v6e:2x2x1
jax: 0.10.0
libtpu: 0.0.40
codegen_flags: <defaults>
</compile_context>

<pallas_src>
import functools
import math

import jax
import jax.numpy as jnp
from jax.experimental import pallas as pl
from jax.experimental.pallas import tpu as pltpu


# ----------------------------- padding helpers ------------------------------

def _round_up(x, m):
    return ((x + m - 1) // m) * m


def _pad2(x, rows, cols):
    return jnp.zeros((rows, cols), jnp.float32).at[
        : x.shape[0], : x.shape[1]].set(x.astype(jnp.float32))


# ----------------------------- fused kernel ---------------------------------

def _greedy_decode_kernel(src_e_ref, src_mask_ref, sem_ref, ex_ref,
                          tgt_emb_ref, enc_w_ref, enc_b_ref,
                          wsq_ref, wsk_ref, wsv_ref,
                          wq_ref, wk_ref, wv_ref, wo_ref,
                          wg_ref, bg_ref,
                          ys_ref,
                          *, d_model, vocab, n_ext, max_tgt_len, start_pos,
                          t_pad):
    f32 = jnp.float32
    neg = float(jnp.finfo(jnp.float32).min)
    scale = 1.0 / math.sqrt(d_model)          # true (unpadded) model dim

    def dot(a, b):
        return jnp.dot(a, b, preferred_element_type=f32)

    def dot_nt(a, b):                          # a @ b.T (contract last dims)
        return jax.lax.dot_general(a, b, (((1,), (1,)), ((), ())),
                                   preferred_element_type=f32)

    def softmax_lanes(x):
        m = jnp.max(x, axis=-1, keepdims=True)
        e = jnp.exp(x - m)
        return e * pl.reciprocal(jnp.sum(e, axis=-1, keepdims=True),
                                 approx=True)

    # ---- encode + cross-attention K/V (computed once, resident in VMEM) ----
    src_e = src_e_ref[0]                                        # (S, Dp)
    mem = jnp.maximum(dot(src_e, enc_w_ref[...]) + enc_b_ref[...], 0.0)
    k_cross = dot(mem, wk_ref[...])                             # (S, Dp)
    v_cross = dot(mem, wv_ref[...])                             # (S, Dp)

    src_mask = src_mask_ref[0]                                  # (1, S)
    sem_mask = sem_ref[0]                                       # (1, S)
    ex_ids = ex_ref[0]                                          # (S, 1) int32

    S = src_e.shape[0]
    Dp = src_e.shape[1]
    VE = wg_ref.shape[1]

    # step-invariant helpers (hoisted out of the decode loop)
    ve_iota_i = jax.lax.broadcasted_iota(jnp.int32, (1, VE), 1)
    ve_iota_f = ve_iota_i.astype(f32)
    scatter_oh = (jax.lax.broadcasted_iota(jnp.int32, (S, VE), 1)
                  == ex_ids).astype(f32)                        # (S, VE)
    t_iota = jax.lax.broadcasted_iota(jnp.int32, (1, max_tgt_len), 1)
    cache_iota = jax.lax.broadcasted_iota(jnp.int32, (t_pad, 1), 0)
    step_iota = jax.lax.broadcasted_iota(jnp.int32, (1, t_pad), 1)

    emb0 = tgt_emb_ref[pl.ds(min(start_pos, vocab - 1), 1), :]  # (1, Dp)
    ys0 = jnp.where(t_iota == 0, float(start_pos), 0.0).astype(f32)
    kc0 = jnp.zeros((t_pad, Dp), f32)
    vc0 = jnp.zeros((t_pad, Dp), f32)

    def body(step, carry):
        emb, k_cache, v_cache, ys_acc = carry

        # --- incremental masked self-attention (last row only, KV cache) ---
        q = dot(emb, wsq_ref[...])                              # (1, Dp)
        slot = (cache_iota == step).astype(f32)                 # (t_pad, 1)
        k_cache = k_cache + slot * dot(emb, wsk_ref[...])
        v_cache = v_cache + slot * dot(emb, wsv_ref[...])
        s_self = dot_nt(q, k_cache) * scale                     # (1, t_pad)
        s_self = jnp.where(step_iota <= step, s_self, neg)
        h1 = dot(softmax_lanes(s_self), v_cache) + emb          # (1, Dp)

        # --- cross attention onto cached encoder K/V ---
        q2 = dot(h1, wq_ref[...])
        s2 = dot_nt(q2, k_cross) * scale                        # (1, S)
        s2 = jnp.where(src_mask > 0.0, s2, neg)
        a_cross = softmax_lanes(s2)                             # (1, S)
        h = dot(dot(a_cross, v_cross), wo_ref[...]) + h1        # (1, Dp)

        # --- pointer-generator head (p_gen logit folded into column `vocab`) ---
        logits = dot(h, wg_ref[...]) + bg_ref[...]              # (1, VE)
        pg_logit = jnp.sum(jnp.where(ve_iota_i == vocab, logits, 0.0),
                           axis=-1, keepdims=True)              # (1, 1)
        p_gen = pl.reciprocal(1.0 + jnp.exp(-pg_logit), approx=True)
        vocab_logits = jnp.where(ve_iota_i < vocab, logits, neg)
        p_vocab = softmax_lanes(vocab_logits)                   # (1, VE)
        copy_w = (1.0 - p_gen) * a_cross * sem_mask             # (1, S)
        prob = p_gen * p_vocab + dot(copy_w, scatter_oh)        # (1, VE)
        prob = jnp.where(ve_iota_i < vocab + n_ext, prob, -1.0)

        # --- greedy argmax (first index attaining the max) ---
        m = jnp.max(prob, axis=-1, keepdims=True)
        next_tok = jnp.min(jnp.where(prob >= m, ve_iota_f, float(VE)),
                           axis=-1, keepdims=True)              # (1, 1) f32

        ys_acc = ys_acc + next_tok * (t_iota == step + 1).astype(f32)

        # --- embed next token (extended/copied ids clamped to base vocab) ---
        tok_c = jnp.minimum(next_tok, float(vocab - 1))
        emb_next = dot((ve_iota_f == tok_c).astype(f32), tgt_emb_ref[...])
        return emb_next, k_cache, v_cache, ys_acc

    _, _, _, ys_acc = jax.lax.fori_loop(
        0, max_tgt_len - 1, body, (emb0, kc0, vc0, ys0), unroll=True)

    ys_ref[0] = ys_acc.astype(jnp.int32)


# ----------------------------- wrapper ---------------------------------------

def _greedy_forward(pp, src_e, src_mask, semantic_mask, expanded_x,
                    *, d_model, vocab, n_ext, max_tgt_len, start_pos):
    B, S, Dp = src_e.shape
    VE = pp["wg_ext"].shape[1]
    t_pad = max(8, _round_up(max_tgt_len, 8))

    kernel = functools.partial(
        _greedy_decode_kernel, d_model=d_model, vocab=vocab, n_ext=n_ext,
        max_tgt_len=max_tgt_len, start_pos=start_pos, t_pad=t_pad)

    def per_batch(shape):
        return pl.BlockSpec(shape, lambda i: (i, 0, 0))

    def shared(shape):
        return pl.BlockSpec(shape, lambda i: (0, 0))

    ys3 = pl.pallas_call(
        kernel,
        out_shape=jax.ShapeDtypeStruct((B, 1, max_tgt_len), jnp.int32),
        grid=(B,),
        in_specs=[
            per_batch((1, S, Dp)),        # src_e
            per_batch((1, 1, S)),         # src_mask
            per_batch((1, 1, S)),         # semantic_mask
            per_batch((1, S, 1)),         # expanded_x
            shared((VE, Dp)),             # tgt_emb (padded)
            shared((Dp, Dp)),             # enc_w
            shared((1, Dp)),              # enc_b
            shared((Dp, Dp)),             # wsq
            shared((Dp, Dp)),             # wsk
            shared((Dp, Dp)),             # wsv
            shared((Dp, Dp)),             # wq
            shared((Dp, Dp)),             # wk
            shared((Dp, Dp)),             # wv
            shared((Dp, Dp)),             # wo
            shared((Dp, VE)),             # wg_ext (vocab logits + p_gen column)
            shared((1, VE)),              # bg_ext
        ],
        out_specs=per_batch((1, 1, max_tgt_len)),
        compiler_params=pltpu.CompilerParams(
            dimension_semantics=("parallel",)),
    )(src_e, src_mask, semantic_mask, expanded_x,
      pp["tgt_emb"], pp["enc_w"], pp["enc_b"],
      pp["wsq"], pp["wsk"], pp["wsv"],
      pp["wq"], pp["wk"], pp["wv"], pp["wo"],
      pp["wg_ext"], pp["bg_ext"])
    return ys3[:, 0, :]


def _prepare_padded_params(p, n_ext):
    d_model = p["enc_w"].shape[0]
    vocab = p["wg"].shape[1]
    Dp = _round_up(d_model, 128)
    VE = _round_up(max(vocab + n_ext, vocab + 1), 128)

    wg_ext = jnp.zeros((Dp, VE), jnp.float32)
    wg_ext = wg_ext.at[:d_model, :vocab].set(p["wg"])
    wg_ext = wg_ext.at[:d_model, vocab].set(p["wp"][:, 0])     # p_gen column
    bg_ext = jnp.zeros((1, VE), jnp.float32)
    bg_ext = bg_ext.at[:, :vocab].set(p["bg"])
    bg_ext = bg_ext.at[0, vocab].set(p["bp"][0, 0])

    return {
        "src_emb": _pad2(p["src_emb"], p["src_emb"].shape[0], Dp),
        "rel_emb": _pad2(p["rel_emb"], p["rel_emb"].shape[0], Dp),
        "tgt_emb": _pad2(p["tgt_emb"], VE, Dp),
        "enc_w": _pad2(p["enc_w"], Dp, Dp),
        "enc_b": _pad2(p["enc_b"], 1, Dp),
        "wsq": _pad2(p["wsq"], Dp, Dp),
        "wsk": _pad2(p["wsk"], Dp, Dp),
        "wsv": _pad2(p["wsv"], Dp, Dp),
        "wq": _pad2(p["wq"], Dp, Dp),
        "wk": _pad2(p["wk"], Dp, Dp),
        "wv": _pad2(p["wv"], Dp, Dp),
        "wo": _pad2(p["wo"], Dp, Dp),
        "wg_ext": wg_ext,
        "bg_ext": bg_ext,
    }


# ----------------------------- GreedyEvaluate --------------------------------

def greedy_evaluate(params, batch_data, max_tgt_len, start_pos):
    extra_vocab = batch_data["extra_vocab"]       # passed through, like torch
    d_model = params["enc_w"].shape[0]
    vocab = params["wg"].shape[1]
    n_ext = extra_vocab.shape[1]

    pp = _prepare_padded_params(params, n_ext)

    @jax.jit
    def run(pp, src, src_mask, rel_ids, expanded_x, semantic_mask):
        # one-time embedding gathers stay in plain JAX glue
        src_e = (jnp.take(pp["src_emb"], src, axis=0)
                 + jnp.take(pp["rel_emb"], rel_ids, axis=0))   # (B, S, Dp)
        return _greedy_forward(
            pp, src_e,
            src_mask.astype(jnp.float32),
            semantic_mask[:, None, :].astype(jnp.float32),
            expanded_x[:, :, None].astype(jnp.int32),
            d_model=d_model, vocab=vocab, n_ext=n_ext,
            max_tgt_len=max_tgt_len, start_pos=start_pos)

    ys = run(pp, batch_data["src"], batch_data["src_mask"],
             batch_data["rel_ids"], batch_data["expanded_x"],
             batch_data["semantic_mask"])
    return ys, extra_vocab


# ----------------------------- main ------------------------------------------

def init_params(key, vocab, num_rel, d_model):
    ks = jax.random.split(key, 16)
    n = functools.partial(jax.random.normal, dtype=jnp.float32)
    return {
        "src_emb": 0.1 * n(ks[0], (vocab, d_model)),
        "tgt_emb": 0.1 * n(ks[1], (vocab, d_model)),
        "rel_emb": 0.1 * n(ks[2], (num_rel, d_model)),
        "enc_w": 0.1 * n(ks[3], (d_model, d_model)),
        "enc_b": jnp.zeros((1, d_model), jnp.float32),
        "wsq": 0.1 * n(ks[4], (d_model, d_model)),
        "wsk": 0.1 * n(ks[5], (d_model, d_model)),
        "wsv": 0.1 * n(ks[6], (d_model, d_model)),
        "wq": 0.1 * n(ks[7], (d_model, d_model)),
        "wk": 0.1 * n(ks[8], (d_model, d_model)),
        "wv": 0.1 * n(ks[9], (d_model, d_model)),
        "wo": 0.1 * n(ks[10], (d_model, d_model)),
        "wg": 0.1 * n(ks[11], (d_model, vocab)),
        "bg": jnp.zeros((1, vocab), jnp.float32),
        "wp": 0.1 * n(ks[12], (d_model, 1)),
        "bp": jnp.zeros((1, 1), jnp.float32),
    }


if __name__ == "__main__":
    B, S, D, V, E = 2, 8, 32, 64, 4
    NUM_REL = 4
    MAX_TGT_LEN = 5
    START_POS = 1

    key = jax.random.PRNGKey(0)
    kp, k1, k2, k3, k4 = jax.random.split(key, 5)
    params = init_params(kp, V, NUM_REL, D)

    batch_data = {
        "src": jax.random.randint(k1, (B, S), 0, V, dtype=jnp.int32),
        "src_mask": jnp.ones((B, 1, S), jnp.float32),
        "rel_ids": jax.random.randint(k2, (B, S), 0, NUM_REL, dtype=jnp.int32),
        "extra_vocab": jax.random.randint(k3, (B, E), 0, V, dtype=jnp.int32),
        "expanded_x": jax.random.randint(k4, (B, S), 0, V + E, dtype=jnp.int32),
        "semantic_mask": jnp.ones((B, S), jnp.float32),
    }

    ys, extra_vocab = greedy_evaluate(params, batch_data, MAX_TGT_LEN, START_POS)
    jax.block_until_ready(ys)
    jax.block_until_ready(extra_vocab)
    assert ys.shape == (B, MAX_TGT_LEN)
    assert bool(jnp.all(ys[:, 0] == START_POS))
    assert bool(jnp.all((ys >= 0) & (ys < V + E)))
    print("KERNEL_OK")
</pallas_src>

<mosaic_0001>
module attributes {stable_mosaic.version = 11 : i64} {
  func.func @_greedy_decode_kernel(%arg0: i32, %arg1: memref<1x8x128xf32, #tpu.memory_space<vmem>>, %arg2: memref<1x1x8xf32, #tpu.memory_space<vmem>>, %arg3: memref<1x1x8xf32, #tpu.memory_space<vmem>>, %arg4: memref<1x8x1xi32, #tpu.memory_space<vmem>>, %arg5: memref<128x128xf32, #tpu.memory_space<vmem>>, %arg6: memref<128x128xf32, #tpu.memory_space<vmem>>, %arg7: memref<1x128xf32, #tpu.memory_space<vmem>>, %arg8: memref<128x128xf32, #tpu.memory_space<vmem>>, %arg9: memref<128x128xf32, #tpu.memory_space<vmem>>, %arg10: memref<128x128xf32, #tpu.memory_space<vmem>>, %arg11: memref<128x128xf32, #tpu.memory_space<vmem>>, %arg12: memref<128x128xf32, #tpu.memory_space<vmem>>, %arg13: memref<128x128xf32, #tpu.memory_space<vmem>>, %arg14: memref<128x128xf32, #tpu.memory_space<vmem>>, %arg15: memref<128x128xf32, #tpu.memory_space<vmem>>, %arg16: memref<1x128xf32, #tpu.memory_space<vmem>>, %arg17: memref<1x1x5xi32, #tpu.memory_space<vmem>>) attributes {dimension_semantics = [#tpu.dimension_semantics<parallel>], iteration_bounds = array<i64: 2>, scalar_prefetch = 0 : i64, scratch_operands = 0 : i64, tpu.core_type = #tpu.core_type<tc>, window_params = [{transform_indices = @transform_0, window_bounds = array<i64: 1, 8, 128>}, {transform_indices = @transform_1, window_bounds = array<i64: 1, 1, 8>}, {transform_indices = @transform_2, window_bounds = array<i64: 1, 1, 8>}, {transform_indices = @transform_3, window_bounds = array<i64: 1, 8, 1>}, {pipeline_mode = #tpu.pipeline_mode<synchronous>, transform_indices = @transform_4, window_bounds = array<i64: 128, 128>}, {pipeline_mode = #tpu.pipeline_mode<synchronous>, transform_indices = @transform_5, window_bounds = array<i64: 128, 128>}, {pipeline_mode = #tpu.pipeline_mode<synchronous>, transform_indices = @transform_6, window_bounds = array<i64: 1, 128>}, {pipeline_mode = #tpu.pipeline_mode<synchronous>, transform_indices = @transform_7, window_bounds = array<i64: 128, 128>}, {pipeline_mode = #tpu.pipeline_mode<synchronous>, transform_indices = @transform_8, window_bounds = array<i64: 128, 128>}, {pipeline_mode = #tpu.pipeline_mode<synchronous>, transform_indices = @transform_9, window_bounds = array<i64: 128, 128>}, {pipeline_mode = #tpu.pipeline_mode<synchronous>, transform_indices = @transform_10, window_bounds = array<i64: 128, 128>}, {pipeline_mode = #tpu.pipeline_mode<synchronous>, transform_indices = @transform_11, window_bounds = array<i64: 128, 128>}, {pipeline_mode = #tpu.pipeline_mode<synchronous>, transform_indices = @transform_12, window_bounds = array<i64: 128, 128>}, {pipeline_mode = #tpu.pipeline_mode<synchronous>, transform_indices = @transform_13, window_bounds = array<i64: 128, 128>}, {pipeline_mode = #tpu.pipeline_mode<synchronous>, transform_indices = @transform_14, window_bounds = array<i64: 128, 128>}, {pipeline_mode = #tpu.pipeline_mode<synchronous>, transform_indices = @transform_15, window_bounds = array<i64: 1, 128>}, {transform_indices = @transform_16, window_bounds = array<i64: 1, 1, 5>}]} {
    %c0 = arith.constant 0 : index
    %c0_0 = arith.constant 0 : index
    %c0_1 = arith.constant 0 : index
    %0 = vector.load %arg1[%c0, %c0_0, %c0_1] : memref<1x8x128xf32, #tpu.memory_space<vmem>>, vector<1x8x128xf32>
    %1 = vector.shape_cast %0 : vector<1x8x128xf32> to vector<8x128xf32>
    %c0_2 = arith.constant 0 : index
    %c0_3 = arith.constant 0 : index
    %2 = vector.load %arg6[%c0_2, %c0_3] : memref<128x128xf32, #tpu.memory_space<vmem>>, vector<128x128xf32>
    %cst = arith.constant dense<0.000000e+00> : vector<8x128xf32>
    %3 = tpu.matmul %1, %2, %cst {dimension_numbers = #tpu.dot_dimension_numbers<[1], [0], [0], [1], [0, 0, 1, 1], [], []>} : vector<8x128xf32>, vector<128x128xf32>, vector<8x128xf32> -> vector<8x128xf32>
    %c0_4 = arith.constant 0 : index
    %c0_5 = arith.constant 0 : index
    %4 = vector.load %arg7[%c0_4, %c0_5] : memref<1x128xf32, #tpu.memory_space<vmem>>, vector<1x128xf32>
    %5 = vector.broadcast %4 : vector<1x128xf32> to vector<8x128xf32>
    %6 = arith.addf %3, %5 : vector<8x128xf32>
    %cst_6 = arith.constant 0.000000e+00 : f32
    %7 = vector.broadcast %cst_6 : f32 to vector<8x128xf32>
    %8 = arith.maximumf %6, %7 : vector<8x128xf32>
    %c0_7 = arith.constant 0 : index
    %c0_8 = arith.constant 0 : index
    %9 = vector.load %arg12[%c0_7, %c0_8] : memref<128x128xf32, #tpu.memory_space<vmem>>, vector<128x128xf32>
    %cst_9 = arith.constant dense<0.000000e+00> : vector<8x128xf32>
    %10 = tpu.matmul %8, %9, %cst_9 {dimension_numbers = #tpu.dot_dimension_numbers<[1], [0], [0], [1], [0, 0, 1, 1], [], []>} : vector<8x128xf32>, vector<128x128xf32>, vector<8x128xf32> -> vector<8x128xf32>
    %c0_10 = arith.constant 0 : index
    %c0_11 = arith.constant 0 : index
    %11 = vector.load %arg13[%c0_10, %c0_11] : memref<128x128xf32, #tpu.memory_space<vmem>>, vector<128x128xf32>
    %cst_12 = arith.constant dense<0.000000e+00> : vector<8x128xf32>
    %12 = tpu.matmul %8, %11, %cst_12 {dimension_numbers = #tpu.dot_dimension_numbers<[1], [0], [0], [1], [0, 0, 1, 1], [], []>} : vector<8x128xf32>, vector<128x128xf32>, vector<8x128xf32> -> vector<8x128xf32>
    %c0_13 = arith.constant 0 : index
    %c0_14 = arith.constant 0 : index
    %c0_15 = arith.constant 0 : index
    %13 = vector.load %arg2[%c0_13, %c0_14, %c0_15] : memref<1x1x8xf32, #tpu.memory_space<vmem>>, vector<1x1x8xf32>
    %14 = vector.shape_cast %13 : vector<1x1x8xf32> to vector<1x8xf32>
    %c0_16 = arith.constant 0 : index
    %c0_17 = arith.constant 0 : index
    %c0_18 = arith.constant 0 : index
    %15 = vector.load %arg3[%c0_16, %c0_17, %c0_18] : memref<1x1x8xf32, #tpu.memory_space<vmem>>, vector<1x1x8xf32>
    %16 = vector.shape_cast %15 : vector<1x1x8xf32> to vector<1x8xf32>
    %c0_19 = arith.constant 0 : index
    %c0_20 = arith.constant 0 : index
    %c0_21 = arith.constant 0 : index
    %17 = vector.load %arg4[%c0_19, %c0_20, %c0_21] : memref<1x8x1xi32, #tpu.memory_space<vmem>>, vector<1x8x1xi32>
    %18 = vector.shape_cast %17 : vector<1x8x1xi32> to vector<8x1xi32>
    %19 = tpu.iota {dimensions = array<i32: 1>} : vector<1x128xi32>
    %20 = arith.sitofp %19 : vector<1x128xi32> to vector<1x128xf32>
    %21 = tpu.iota {dimensions = array<i32: 1>} : vector<8x128xi32>
    %22 = vector.broadcast %18 : vector<8x1xi32> to vector<8x128xi32>
    %23 = arith.cmpi eq, %21, %22 : vector<8x128xi32>
    %24 = arith.extui %23 : vector<8x128xi1> to vector<8x128xi32>
    %25 = arith.sitofp %24 : vector<8x128xi32> to vector<8x128xf32>
    %26 = tpu.iota {dimensions = array<i32: 1>} : vector<1x5xi32>
    %27 = tpu.iota {dimensions = array<i32: 0>} : vector<8x1xi32>
    %28 = tpu.iota {dimensions = array<i32: 1>} : vector<1x8xi32>
    %c1 = arith.constant 1 : index
    %c0_22 = arith.constant 0 : index
    %29 = vector.load %arg5[%c1, %c0_22] : memref<128x128xf32, #tpu.memory_space<vmem>>, vector<1x128xf32>
    %c0_i32 = arith.constant 0 : i32
    %30 = vector.broadcast %c0_i32 : i32 to vector<1x5xi32>
    %31 = arith.cmpi eq, %26, %30 : vector<1x5xi32>
    %cst_23 = arith.constant 1.000000e+00 : f32
    %cst_24 = arith.constant 0.000000e+00 : f32
    %32 = vector.broadcast %cst_23 : f32 to vector<1x5xf32>
    %33 = vector.broadcast %cst_24 : f32 to vector<1x5xf32>
    %34 = arith.select %31, %32, %33 : vector<1x5xi1>, vector<1x5xf32>
    %cst_25 = arith.constant 0.000000e+00 : f32
    %35 = vector.broadcast %cst_25 : f32 to vector<8x128xf32>
    %cst_26 = arith.constant 0.000000e+00 : f32
    %36 = vector.broadcast %cst_26 : f32 to vector<8x128xf32>
    %c0_i32_27 = arith.constant 0 : i32
    %c0_28 = arith.constant 0 : index
    %c0_29 = arith.constant 0 : index
    %37 = vector.load %arg8[%c0_28, %c0_29] : memref<128x128xf32, #tpu.memory_space<vmem>>, vector<128x128xf32>
    %cst_30 = arith.constant dense<0.000000e+00> : vector<1x128xf32>
    %38 = tpu.matmul %29, %37, %cst_30 {dimension_numbers = #tpu.dot_dimension_numbers<[1], [0], [0], [1], [0, 0, 1, 1], [], []>} : vector<1x128xf32>, vector<128x128xf32>, vector<1x128xf32> -> vector<1x128xf32>
    %39 = vector.broadcast %c0_i32_27 : i32 to vector<8x1xi32>
    %40 = arith.cmpi eq, %27, %39 : vector<8x1xi32>
    %41 = arith.extui %40 : vector<8x1xi1> to vector<8x1xi32>
    %42 = arith.sitofp %41 : vector<8x1xi32> to vector<8x1xf32>
    %c0_31 = arith.constant 0 : index
    %c0_32 = arith.constant 0 : index
    %43 = vector.load %arg9[%c0_31, %c0_32] : memref<128x128xf32, #tpu.memory_space<vmem>>, vector<128x128xf32>
    %cst_33 = arith.constant dense<0.000000e+00> : vector<1x128xf32>
    %44 = tpu.matmul %29, %43, %cst_33 {dimension_numbers = #tpu.dot_dimension_numbers<[1], [0], [0], [1], [0, 0, 1, 1], [], []>} : vector<1x128xf32>, vector<128x128xf32>, vector<1x128xf32> -> vector<1x128xf32>
    %45 = vector.broadcast %42 : vector<8x1xf32> to vector<8x128xf32>
    %46 = vector.broadcast %44 : vector<1x128xf32> to vector<8x128xf32>
    %47 = arith.mulf %45, %46 : vector<8x128xf32>
    %48 = arith.addf %35, %47 : vector<8x128xf32>
    %c0_34 = arith.constant 0 : index
    %c0_35 = arith.constant 0 : index
    %49 = vector.load %arg10[%c0_34, %c0_35] : memref<128x128xf32, #tpu.memory_space<vmem>>, vector<128x128xf32>
    %cst_36 = arith.constant dense<0.000000e+00> : vector<1x128xf32>
    %50 = tpu.matmul %29, %49, %cst_36 {dimension_numbers = #tpu.dot_dimension_numbers<[1], [0], [0], [1], [0, 0, 1, 1], [], []>} : vector<1x128xf32>, vector<128x128xf32>, vector<1x128xf32> -> vector<1x128xf32>
    %51 = vector.broadcast %42 : vector<8x1xf32> to vector<8x128xf32>
    %52 = vector.broadcast %50 : vector<1x128xf32> to vector<8x128xf32>
    %53 = arith.mulf %51, %52 : vector<8x128xf32>
    %54 = arith.addf %36, %53 : vector<8x128xf32>
    %cst_37 = arith.constant dense<0.000000e+00> : vector<1x8xf32>
    %55 = tpu.matmul %38, %48, %cst_37 {dimension_numbers = #tpu.dot_dimension_numbers<[1], [1], [0], [0], [0, 0, 1, 0], [], []>} : vector<1x128xf32>, vector<8x128xf32>, vector<1x8xf32> -> vector<1x8xf32>
    %cst_38 = arith.constant 0.176776692 : f32
    %56 = vector.broadcast %cst_38 : f32 to vector<1x8xf32>
    %57 = arith.mulf %55, %56 : vector<1x8xf32>
    %58 = vector.broadcast %c0_i32_27 : i32 to vector<1x8xi32>
    %59 = arith.cmpi sle, %28, %58 : vector<1x8xi32>
    %cst_39 = arith.constant -3.40282347E+38 : f32
    %60 = vector.broadcast %cst_39 : f32 to vector<1x8xf32>
    %61 = arith.select %59, %57, %60 : vector<1x8xi1>, vector<1x8xf32>
    %cst_40 = arith.constant dense<0xFF800000> : vector<1xf32>
    %62 = vector.multi_reduction <maximumf>, %61, %cst_40 [1] : vector<1x8xf32> to vector<1xf32>
    %63 = vector.shape_cast %62 : vector<1xf32> to vector<1x1xf32>
    %64 = vector.broadcast %63 : vector<1x1xf32> to vector<1x8xf32>
    %65 = arith.subf %61, %64 : vector<1x8xf32>
    %66 = math.exp %65 : vector<1x8xf32>
    %cst_41 = arith.constant dense<0.000000e+00> : vector<1xf32>
    %67 = vector.multi_reduction <add>, %66, %cst_41 [1] : vector<1x8xf32> to vector<1xf32>
    %68 = vector.shape_cast %67 : vector<1xf32> to vector<1x1xf32>
    %69 = tpu.reciprocal %68 {approx = true} : vector<1x1xf32> -> vector<1x1xf32>
    %70 = vector.broadcast %69 : vector<1x1xf32> to vector<1x8xf32>
    %71 = arith.mulf %66, %70 : vector<1x8xf32>
    %cst_42 = arith.constant dense<0.000000e+00> : vector<1x128xf32>
    %72 = tpu.matmul %71, %54, %cst_42 {dimension_numbers = #tpu.dot_dimension_numbers<[1], [0], [0], [1], [0, 0, 1, 1], [], []>} : vector<1x8xf32>, vector<8x128xf32>, vector<1x128xf32> -> vector<1x128xf32>
    %73 = arith.addf %72, %29 : vector<1x128xf32>
    %c0_43 = arith.constant 0 : index
    %c0_44 = arith.constant 0 : index
    %74 = vector.load %arg11[%c0_43, %c0_44] : memref<128x128xf32, #tpu.memory_space<vmem>>, vector<128x128xf32>
    %cst_45 = arith.constant dense<0.000000e+00> : vector<1x128xf32>
    %75 = tpu.matmul %73, %74, %cst_45 {dimension_numbers = #tpu.dot_dimension_numbers<[1], [0], [0], [1], [0, 0, 1, 1], [], []>} : vector<1x128xf32>, vector<128x128xf32>, vector<1x128xf32> -> vector<1x128xf32>
    %cst_46 = arith.constant dense<0.000000e+00> : vector<1x8xf32>
    %76 = tpu.matmul %75, %10, %cst_46 {dimension_numbers = #tpu.dot_dimension_numbers<[1], [1], [0], [0], [0, 0, 1, 0], [], []>} : vector<1x128xf32>, vector<8x128xf32>, vector<1x8xf32> -> vector<1x8xf32>
    %cst_47 = arith.constant 0.176776692 : f32
    %77 = vector.broadcast %cst_47 : f32 to vector<1x8xf32>
    %78 = arith.mulf %76, %77 : vector<1x8xf32>
    %cst_48 = arith.constant 0.000000e+00 : f32
    %79 = vector.broadcast %cst_48 : f32 to vector<1x8xf32>
    %80 = arith.cmpf ogt, %14, %79 : vector<1x8xf32>
    %cst_49 = arith.constant -3.40282347E+38 : f32
    %81 = vector.broadcast %cst_49 : f32 to vector<1x8xf32>
    %82 = arith.select %80, %78, %81 : vector<1x8xi1>, vector<1x8xf32>
    %cst_50 = arith.constant dense<0xFF800000> : vector<1xf32>
    %83 = vector.multi_reduction <maximumf>, %82, %cst_50 [1] : vector<1x8xf32> to vector<1xf32>
    %84 = vector.shape_cast %83 : vector<1xf32> to vector<1x1xf32>
    %85 = vector.broadcast %84 : vector<1x1xf32> to vector<1x8xf32>
    %86 = arith.subf %82, %85 : vector<1x8xf32>
    %87 = math.exp %86 : vector<1x8xf32>
    %cst_51 = arith.constant dense<0.000000e+00> : vector<1xf32>
    %88 = vector.multi_reduction <add>, %87, %cst_51 [1] : vector<1x8xf32> to vector<1xf32>
    %89 = vector.shape_cast %88 : vector<1xf32> to vector<1x1xf32>
    %90 = tpu.reciprocal %89 {approx = true} : vector<1x1xf32> -> vector<1x1xf32>
    %91 = vector.broadcast %90 : vector<1x1xf32> to vector<1x8xf32>
    %92 = arith.mulf %87, %91 : vector<1x8xf32>
    %cst_52 = arith.constant dense<0.000000e+00> : vector<1x128xf32>
    %93 = tpu.matmul %92, %12, %cst_52 {dimension_numbers = #tpu.dot_dimension_numbers<[1], [0], [0], [1], [0, 0, 1, 1], [], []>} : vector<1x8xf32>, vector<8x128xf32>, vector<1x128xf32> -> vector<1x128xf32>
    %c0_53 = arith.constant 0 : index
    %c0_54 = arith.constant 0 : index
    %94 = vector.load %arg14[%c0_53, %c0_54] : memref<128x128xf32, #tpu.memory_space<vmem>>, vector<128x128xf32>
    %cst_55 = arith.constant dense<0.000000e+00> : vector<1x128xf32>
    %95 = tpu.matmul %93, %94, %cst_55 {dimension_numbers = #tpu.dot_dimension_numbers<[1], [0], [0], [1], [0, 0, 1, 1], [], []>} : vector<1x128xf32>, vector<128x128xf32>, vector<1x128xf32> -> vector<1x128xf32>
    %96 = arith.addf %95, %73 : vector<1x128xf32>
    %c0_56 = arith.constant 0 : index
    %c0_57 = arith.constant 0 : index
    %97 = vector.load %arg15[%c0_56, %c0_57] : memref<128x128xf32, #tpu.memory_space<vmem>>, vector<128x128xf32>
    %cst_58 = arith.constant dense<0.000000e+00> : vector<1x128xf32>
    %98 = tpu.matmul %96, %97, %cst_58 {dimension_numbers = #tpu.dot_dimension_numbers<[1], [0], [0], [1], [0, 0, 1, 1], [], []>} : vector<1x128xf32>, vector<128x128xf32>, vector<1x128xf32> -> vector<1x128xf32>
    %c0_59 = arith.constant 0 : index
    %c0_60 = arith.constant 0 : index
    %99 = vector.load %arg16[%c0_59, %c0_60] : memref<1x128xf32, #tpu.memory_space<vmem>>, vector<1x128xf32>
    %100 = arith.addf %98, %99 : vector<1x128xf32>
    %c64_i32 = arith.constant 64 : i32
    %101 = vector.broadcast %c64_i32 : i32 to vector<1x128xi32>
    %102 = arith.cmpi eq, %19, %101 : vector<1x128xi32>
    %cst_61 = arith.constant 0.000000e+00 : f32
    %103 = vector.broadcast %cst_61 : f32 to vector<1x128xf32>
    %104 = arith.select %102, %100, %103 : vector<1x128xi1>, vector<1x128xf32>
    %cst_62 = arith.constant dense<0.000000e+00> : vector<1xf32>
    %105 = vector.multi_reduction <add>, %104, %cst_62 [1] : vector<1x128xf32> to vector<1xf32>
    %106 = vector.shape_cast %105 : vector<1xf32> to vector<1x1xf32>
    %cst_63 = arith.constant 0.000000e+00 : f32
    %107 = vector.broadcast %cst_63 : f32 to vector<1x1xf32>
    %108 = arith.subf %107, %106 : vector<1x1xf32>
    %109 = math.exp %108 : vector<1x1xf32>
    %cst_64 = arith.constant 1.000000e+00 : f32
    %110 = vector.broadcast %cst_64 : f32 to vector<1x1xf32>
    %111 = arith.addf %110, %109 : vector<1x1xf32>
    %112 = tpu.reciprocal %111 {approx = true} : vector<1x1xf32> -> vector<1x1xf32>
    %c64_i32_65 = arith.constant 64 : i32
    %113 = vector.broadcast %c64_i32_65 : i32 to vector<1x128xi32>
    %114 = arith.cmpi slt, %19, %113 : vector<1x128xi32>
    %cst_66 = arith.constant -3.40282347E+38 : f32
    %115 = vector.broadcast %cst_66 : f32 to vector<1x128xf32>
    %116 = arith.select %114, %100, %115 : vector<1x128xi1>, vector<1x128xf32>
    %cst_67 = arith.constant dense<0xFF800000> : vector<1xf32>
    %117 = vector.multi_reduction <maximumf>, %116, %cst_67 [1] : vector<1x128xf32> to vector<1xf32>
    %118 = vector.shape_cast %117 : vector<1xf32> to vector<1x1xf32>
    %119 = vector.broadcast %118 : vector<1x1xf32> to vector<1x128xf32>
    %120 = arith.subf %116, %119 : vector<1x128xf32>
    %121 = math.exp %120 : vector<1x128xf32>
    %cst_68 = arith.constant dense<0.000000e+00> : vector<1xf32>
    %122 = vector.multi_reduction <add>, %121, %cst_68 [1] : vector<1x128xf32> to vector<1xf32>
    %123 = vector.shape_cast %122 : vector<1xf32> to vector<1x1xf32>
    %124 = tpu.reciprocal %123 {approx = true} : vector<1x1xf32> -> vector<1x1xf32>
    %125 = vector.broadcast %124 : vector<1x1xf32> to vector<1x128xf32>
    %126 = arith.mulf %121, %125 : vector<1x128xf32>
    %cst_69 = arith.constant 1.000000e+00 : f32
    %127 = vector.broadcast %cst_69 : f32 to vector<1x1xf32>
    %128 = arith.subf %127, %112 : vector<1x1xf32>
    %129 = vector.broadcast %128 : vector<1x1xf32> to vector<1x8xf32>
    %130 = arith.mulf %129, %92 : vector<1x8xf32>
    %131 = arith.mulf %130, %16 : vector<1x8xf32>
    %132 = vector.broadcast %112 : vector<1x1xf32> to vector<1x128xf32>
    %133 = arith.mulf %132, %126 : vector<1x128xf32>
    %cst_70 = arith.constant dense<0.000000e+00> : vector<1x128xf32>
    %134 = tpu.matmul %131, %25, %cst_70 {dimension_numbers = #tpu.dot_dimension_numbers<[1], [0], [0], [1], [0, 0, 1, 1], [], []>} : vector<1x8xf32>, vector<8x128xf32>, vector<1x128xf32> -> vector<1x128xf32>
    %135 = arith.addf %133, %134 : vector<1x128xf32>
    %c68_i32 = arith.constant 68 : i32
    %136 = vector.broadcast %c68_i32 : i32 to vector<1x128xi32>
    %137 = arith.cmpi slt, %19, %136 : vector<1x128xi32>
    %cst_71 = arith.constant -1.000000e+00 : f32
    %138 = vector.broadcast %cst_71 : f32 to vector<1x128xf32>
    %139 = arith.select %137, %135, %138 : vector<1x128xi1>, vector<1x128xf32>
    %cst_72 = arith.constant dense<0xFF800000> : vector<1xf32>
    %140 = vector.multi_reduction <maximumf>, %139, %cst_72 [1] : vector<1x128xf32> to vector<1xf32>
    %141 = vector.shape_cast %140 : vector<1xf32> to vector<1x1xf32>
    %142 = vector.broadcast %141 : vector<1x1xf32> to vector<1x128xf32>
    %143 = arith.cmpf oge, %139, %142 : vector<1x128xf32>
    %cst_73 = arith.constant 1.280000e+02 : f32
    %144 = vector.broadcast %cst_73 : f32 to vector<1x128xf32>
    %145 = arith.select %143, %20, %144 : vector<1x128xi1>, vector<1x128xf32>
    %cst_74 = arith.constant dense<0x7F800000> : vector<1xf32>
    %146 = vector.multi_reduction <minimumf>, %145, %cst_74 [1] : vector<1x128xf32> to vector<1xf32>
    %147 = vector.shape_cast %146 : vector<1xf32> to vector<1x1xf32>
    %c1_i32 = arith.constant 1 : i32
    %148 = arith.addi %c0_i32_27, %c1_i32 : i32
    %149 = vector.broadcast %148 : i32 to vector<1x5xi32>
    %150 = arith.cmpi eq, %26, %149 : vector<1x5xi32>
    %151 = arith.extui %150 : vector<1x5xi1> to vector<1x5xi32>
    %152 = arith.sitofp %151 : vector<1x5xi32> to vector<1x5xf32>
    %153 = vector.broadcast %147 : vector<1x1xf32> to vector<1x5xf32>
    %154 = arith.mulf %153, %152 : vector<1x5xf32>
    %155 = arith.addf %34, %154 : vector<1x5xf32>
    %cst_75 = arith.constant 6.300000e+01 : f32
    %156 = vector.broadcast %cst_75 : f32 to vector<1x1xf32>
    %157 = arith.minimumf %147, %156 : vector<1x1xf32>
    %158 = vector.broadcast %157 : vector<1x1xf32> to vector<1x128xf32>
    %159 = arith.cmpf oeq, %20, %158 : vector<1x128xf32>
    %160 = arith.extui %159 : vector<1x128xi1> to vector<1x128xi32>
    %161 = arith.sitofp %160 : vector<1x128xi32> to vector<1x128xf32>
    %c0_76 = arith.constant 0 : index
    %c0_77 = arith.constant 0 : index
    %162 = vector.load %arg5[%c0_76, %c0_77] : memref<128x128xf32, #tpu.memory_space<vmem>>, vector<128x128xf32>
    %cst_78 = arith.constant dense<0.000000e+00> : vector<1x128xf32>
    %163 = tpu.matmul %161, %162, %cst_78 {dimension_numbers = #tpu.dot_dimension_numbers<[1], [0], [0], [1], [0, 0, 1, 1], [], []>} : vector<1x128xf32>, vector<128x128xf32>, vector<1x128xf32> -> vector<1x128xf32>
    %c1_i32_79 = arith.constant 1 : i32
    %c0_80 = arith.constant 0 : index
    %c0_81 = arith.constant 0 : index
    %164 = vector.load %arg8[%c0_80, %c0_81] : memref<128x128xf32, #tpu.memory_space<vmem>>, vector<128x128xf32>
    %cst_82 = arith.constant dense<0.000000e+00> : vector<1x128xf32>
    %165 = tpu.matmul %163, %164, %cst_82 {dimension_numbers = #tpu.dot_dimension_numbers<[1], [0], [0], [1], [0, 0, 1, 1], [], []>} : vector<1x128xf32>, vector<128x128xf32>, vector<1x128xf32> -> vector<1x128xf32>
    %166 = vector.broadcast %c1_i32_79 : i32 to vector<8x1xi32>
    %167 = arith.cmpi eq, %27, %166 : vector<8x1xi32>
    %168 = arith.extui %167 : vector<8x1xi1> to vector<8x1xi32>
    %169 = arith.sitofp %168 : vector<8x1xi32> to vector<8x1xf32>
    %c0_83 = arith.constant 0 : index
    %c0_84 = arith.constant 0 : index
    %170 = vector.load %arg9[%c0_83, %c0_84] : memref<128x128xf32, #tpu.memory_space<vmem>>, vector<128x128xf32>
    %cst_85 = arith.constant dense<0.000000e+00> : vector<1x128xf32>
    %171 = tpu.matmul %163, %170, %cst_85 {dimension_numbers = #tpu.dot_dimension_numbers<[1], [0], [0], [1], [0, 0, 1, 1], [], []>} : vector<1x128xf32>, vector<128x128xf32>, vector<1x128xf32> -> vector<1x128xf32>
    %172 = vector.broadcast %169 : vector<8x1xf32> to vector<8x128xf32>
    %173 = vector.broadcast %171 : vector<1x128xf32> to vector<8x128xf32>
    %174 = arith.mulf %172, %173 : vector<8x128xf32>
    %175 = arith.addf %48, %174 : vector<8x128xf32>
    %c0_86 = arith.constant 0 : index
    %c0_87 = arith.constant 0 : index
    %176 = vector.load %arg10[%c0_86, %c0_87] : memref<128x128xf32, #tpu.memory_space<vmem>>, vector<128x128xf32>
    %cst_88 = arith.constant dense<0.000000e+00> : vector<1x128xf32>
    %177 = tpu.matmul %163, %176, %cst_88 {dimension_numbers = #tpu.dot_dimension_numbers<[1], [0], [0], [1], [0, 0, 1, 1], [], []>} : vector<1x128xf32>, vector<128x128xf32>, vector<1x128xf32> -> vector<1x128xf32>
    %178 = vector.broadcast %169 : vector<8x1xf32> to vector<8x128xf32>
    %179 = vector.broadcast %177 : vector<1x128xf32> to vector<8x128xf32>
    %180 = arith.mulf %178, %179 : vector<8x128xf32>
    %181 = arith.addf %54, %180 : vector<8x128xf32>
    %cst_89 = arith.constant dense<0.000000e+00> : vector<1x8xf32>
    %182 = tpu.matmul %165, %175, %cst_89 {dimension_numbers = #tpu.dot_dimension_numbers<[1], [1], [0], [0], [0, 0, 1, 0], [], []>} : vector<1x128xf32>, vector<8x128xf32>, vector<1x8xf32> -> vector<1x8xf32>
    %cst_90 = arith.constant 0.176776692 : f32
    %183 = vector.broadcast %cst_90 : f32 to vector<1x8xf32>
    %184 = arith.mulf %182, %183 : vector<1x8xf32>
    %185 = vector.broadcast %c1_i32_79 : i32 to vector<1x8xi32>
    %186 = arith.cmpi sle, %28, %185 : vector<1x8xi32>
    %cst_91 = arith.constant -3.40282347E+38 : f32
    %187 = vector.broadcast %cst_91 : f32 to vector<1x8xf32>
    %188 = arith.select %186, %184, %187 : vector<1x8xi1>, vector<1x8xf32>
    %cst_92 = arith.constant dense<0xFF800000> : vector<1xf32>
    %189 = vector.multi_reduction <maximumf>, %188, %cst_92 [1] : vector<1x8xf32> to vector<1xf32>
    %190 = vector.shape_cast %189 : vector<1xf32> to vector<1x1xf32>
    %191 = vector.broadcast %190 : vector<1x1xf32> to vector<1x8xf32>
    %192 = arith.subf %188, %191 : vector<1x8xf32>
    %193 = math.exp %192 : vector<1x8xf32>
    %cst_93 = arith.constant dense<0.000000e+00> : vector<1xf32>
    %194 = vector.multi_reduction <add>, %193, %cst_93 [1] : vector<1x8xf32> to vector<1xf32>
    %195 = vector.shape_cast %194 : vector<1xf32> to vector<1x1xf32>
    %196 = tpu.reciprocal %195 {approx = true} : vector<1x1xf32> -> vector<1x1xf32>
    %197 = vector.broadcast %196 : vector<1x1xf32> to vector<1x8xf32>
    %198 = arith.mulf %193, %197 : vector<1x8xf32>
    %cst_94 = arith.constant dense<0.000000e+00> : vector<1x128xf32>
    %199 = tpu.matmul %198, %181, %cst_94 {dimension_numbers = #tpu.dot_dimension_numbers<[1], [0], [0], [1], [0, 0, 1, 1], [], []>} : vector<1x8xf32>, vector<8x128xf32>, vector<1x128xf32> -> vector<1x128xf32>
    %200 = arith.addf %199, %163 : vector<1x128xf32>
    %c0_95 = arith.constant 0 : index
    %c0_96 = arith.constant 0 : index
    %201 = vector.load %arg11[%c0_95, %c0_96] : memref<128x128xf32, #tpu.memory_space<vmem>>, vector<128x128xf32>
    %cst_97 = arith.constant dense<0.000000e+00> : vector<1x128xf32>
    %202 = tpu.matmul %200, %201, %cst_97 {dimension_numbers = #tpu.dot_dimension_numbers<[1], [0], [0], [1], [0, 0, 1, 1], [], []>} : vector<1x128xf32>, vector<128x128xf32>, vector<1x128xf32> -> vector<1x128xf32>
    %cst_98 = arith.constant dense<0.000000e+00> : vector<1x8xf32>
    %203 = tpu.matmul %202, %10, %cst_98 {dimension_numbers = #tpu.dot_dimension_numbers<[1], [1], [0], [0], [0, 0, 1, 0], [], []>} : vector<1x128xf32>, vector<8x128xf32>, vector<1x8xf32> -> vector<1x8xf32>
    %cst_99 = arith.constant 0.176776692 : f32
    %204 = vector.broadcast %cst_99 : f32 to vector<1x8xf32>
    %205 = arith.mulf %203, %204 : vector<1x8xf32>
    %cst_100 = arith.constant 0.000000e+00 : f32
    %206 = vector.broadcast %cst_100 : f32 to vector<1x8xf32>
    %207 = arith.cmpf ogt, %14, %206 : vector<1x8xf32>
    %cst_101 = arith.constant -3.40282347E+38 : f32
    %208 = vector.broadcast %cst_101 : f32 to vector<1x8xf32>
    %209 = arith.select %207, %205, %208 : vector<1x8xi1>, vector<1x8xf32>
    %cst_102 = arith.constant dense<0xFF800000> : vector<1xf32>
    %210 = vector.multi_reduction <maximumf>, %209, %cst_102 [1] : vector<1x8xf32> to vector<1xf32>
    %211 = vector.shape_cast %210 : vector<1xf32> to vector<1x1xf32>
    %212 = vector.broadcast %211 : vector<1x1xf32> to vector<1x8xf32>
    %213 = arith.subf %209, %212 : vector<1x8xf32>
    %214 = math.exp %213 : vector<1x8xf32>
    %cst_103 = arith.constant dense<0.000000e+00> : vector<1xf32>
    %215 = vector.multi_reduction <add>, %214, %cst_103 [1] : vector<1x8xf32> to vector<1xf32>
    %216 = vector.shape_cast %215 : vector<1xf32> to vector<1x1xf32>
    %217 = tpu.reciprocal %216 {approx = true} : vector<1x1xf32> -> vector<1x1xf32>
    %218 = vector.broadcast %217 : vector<1x1xf32> to vector<1x8xf32>
    %219 = arith.mulf %214, %218 : vector<1x8xf32>
    %cst_104 = arith.constant dense<0.000000e+00> : vector<1x128xf32>
    %220 = tpu.matmul %219, %12, %cst_104 {dimension_numbers = #tpu.dot_dimension_numbers<[1], [0], [0], [1], [0, 0, 1, 1], [], []>} : vector<1x8xf32>, vector<8x128xf32>, vector<1x128xf32> -> vector<1x128xf32>
    %c0_105 = arith.constant 0 : index
    %c0_106 = arith.constant 0 : index
    %221 = vector.load %arg14[%c0_105, %c0_106] : memref<128x128xf32, #tpu.memory_space<vmem>>, vector<128x128xf32>
    %cst_107 = arith.constant dense<0.000000e+00> : vector<1x128xf32>
    %222 = tpu.matmul %220, %221, %cst_107 {dimension_numbers = #tpu.dot_dimension_numbers<[1], [0], [0], [1], [0, 0, 1, 1], [], []>} : vector<1x128xf32>, vector<128x128xf32>, vector<1x128xf32> -> vector<1x128xf32>
    %223 = arith.addf %222, %200 : vector<1x128xf32>
    %c0_108 = arith.constant 0 : index
    %c0_109 = arith.constant 0 : index
    %224 = vector.load %arg15[%c0_108, %c0_109] : memref<128x128xf32, #tpu.memory_space<vmem>>, vector<128x128xf32>
    %cst_110 = arith.constant dense<0.000000e+00> : vector<1x128xf32>
    %225 = tpu.matmul %223, %224, %cst_110 {dimension_numbers = #tpu.dot_dimension_numbers<[1], [0], [0], [1], [0, 0, 1, 1], [], []>} : vector<1x128xf32>, vector<128x128xf32>, vector<1x128xf32> -> vector<1x128xf32>
    %c0_111 = arith.constant 0 : index
    %c0_112 = arith.constant 0 : index
    %226 = vector.load %arg16[%c0_111, %c0_112] : memref<1x128xf32, #tpu.memory_space<vmem>>, vector<1x128xf32>
    %227 = arith.addf %225, %226 : vector<1x128xf32>
    %c64_i32_113 = arith.constant 64 : i32
    %228 = vector.broadcast %c64_i32_113 : i32 to vector<1x128xi32>
    %229 = arith.cmpi eq, %19, %228 : vector<1x128xi32>
    %cst_114 = arith.constant 0.000000e+00 : f32
    %230 = vector.broadcast %cst_114 : f32 to vector<1x128xf32>
    %231 = arith.select %229, %227, %230 : vector<1x128xi1>, vector<1x128xf32>
    %cst_115 = arith.constant dense<0.000000e+00> : vector<1xf32>
    %232 = vector.multi_reduction <add>, %231, %cst_115 [1] : vector<1x128xf32> to vector<1xf32>
    %233 = vector.shape_cast %232 : vector<1xf32> to vector<1x1xf32>
    %cst_116 = arith.constant 0.000000e+00 : f32
    %234 = vector.broadcast %cst_116 : f32 to vector<1x1xf32>
    %235 = arith.subf %234, %233 : vector<1x1xf32>
    %236 = math.exp %235 : vector<1x1xf32>
    %cst_117 = arith.constant 1.000000e+00 : f32
    %237 = vector.broadcast %cst_117 : f32 to vector<1x1xf32>
    %238 = arith.addf %237, %236 : vector<1x1xf32>
    %239 = tpu.reciprocal %238 {approx = true} : vector<1x1xf32> -> vector<1x1xf32>
    %c64_i32_118 = arith.constant 64 : i32
    %240 = vector.broadcast %c64_i32_118 : i32 to vector<1x128xi32>
    %241 = arith.cmpi slt, %19, %240 : vector<1x128xi32>
    %cst_119 = arith.constant -3.40282347E+38 : f32
    %242 = vector.broadcast %cst_119 : f32 to vector<1x128xf32>
    %243 = arith.select %241, %227, %242 : vector<1x128xi1>, vector<1x128xf32>
    %cst_120 = arith.constant dense<0xFF800000> : vector<1xf32>
    %244 = vector.multi_reduction <maximumf>, %243, %cst_120 [1] : vector<1x128xf32> to vector<1xf32>
    %245 = vector.shape_cast %244 : vector<1xf32> to vector<1x1xf32>
    %246 = vector.broadcast %245 : vector<1x1xf32> to vector<1x128xf32>
    %247 = arith.subf %243, %246 : vector<1x128xf32>
    %248 = math.exp %247 : vector<1x128xf32>
    %cst_121 = arith.constant dense<0.000000e+00> : vector<1xf32>
    %249 = vector.multi_reduction <add>, %248, %cst_121 [1] : vector<1x128xf32> to vector<1xf32>
    %250 = vector.shape_cast %249 : vector<1xf32> to vector<1x1xf32>
    %251 = tpu.reciprocal %250 {approx = true} : vector<1x1xf32> -> vector<1x1xf32>
    %252 = vector.broadcast %251 : vector<1x1xf32> to vector<1x128xf32>
    %253 = arith.mulf %248, %252 : vector<1x128xf32>
    %cst_122 = arith.constant 1.000000e+00 : f32
    %254 = vector.broadcast %cst_122 : f32 to vector<1x1xf32>
    %255 = arith.subf %254, %239 : vector<1x1xf32>
    %256 = vector.broadcast %255 : vector<1x1xf32> to vector<1x8xf32>
    %257 = arith.mulf %256, %219 : vector<1x8xf32>
    %258 = arith.mulf %257, %16 : vector<1x8xf32>
    %259 = vector.broadcast %239 : vector<1x1xf32> to vector<1x128xf32>
    %260 = arith.mulf %259, %253 : vector<1x128xf32>
    %cst_123 = arith.constant dense<0.000000e+00> : vector<1x128xf32>
    %261 = tpu.matmul %258, %25, %cst_123 {dimension_numbers = #tpu.dot_dimension_numbers<[1], [0], [0], [1], [0, 0, 1, 1], [], []>} : vector<1x8xf32>, vector<8x128xf32>, vector<1x128xf32> -> vector<1x128xf32>
    %262 = arith.addf %260, %261 : vector<1x128xf32>
    %c68_i32_124 = arith.constant 68 : i32
    %263 = vector.broadcast %c68_i32_124 : i32 to vector<1x128xi32>
    %264 = arith.cmpi slt, %19, %263 : vector<1x128xi32>
    %cst_125 = arith.constant -1.000000e+00 : f32
    %265 = vector.broadcast %cst_125 : f32 to vector<1x128xf32>
    %266 = arith.select %264, %262, %265 : vector<1x128xi1>, vector<1x128xf32>
    %cst_126 = arith.constant dense<0xFF800000> : vector<1xf32>
    %267 = vector.multi_reduction <maximumf>, %266, %cst_126 [1] : vector<1x128xf32> to vector<1xf32>
    %268 = vector.shape_cast %267 : vector<1xf32> to vector<1x1xf32>
    %269 = vector.broadcast %268 : vector<1x1xf32> to vector<1x128xf32>
    %270 = arith.cmpf oge, %266, %269 : vector<1x128xf32>
    %cst_127 = arith.constant 1.280000e+02 : f32
    %271 = vector.broadcast %cst_127 : f32 to vector<1x128xf32>
    %272 = arith.select %270, %20, %271 : vector<1x128xi1>, vector<1x128xf32>
    %cst_128 = arith.constant dense<0x7F800000> : vector<1xf32>
    %273 = vector.multi_reduction <minimumf>, %272, %cst_128 [1] : vector<1x128xf32> to vector<1xf32>
    %274 = vector.shape_cast %273 : vector<1xf32> to vector<1x1xf32>
    %c1_i32_129 = arith.constant 1 : i32
    %275 = arith.addi %c1_i32_79, %c1_i32_129 : i32
    %276 = vector.broadcast %275 : i32 to vector<1x5xi32>
    %277 = arith.cmpi eq, %26, %276 : vector<1x5xi32>
    %278 = arith.extui %277 : vector<1x5xi1> to vector<1x5xi32>
    %279 = arith.sitofp %278 : vector<1x5xi32> to vector<1x5xf32>
    %280 = vector.broadcast %274 : vector<1x1xf32> to vector<1x5xf32>
    %281 = arith.mulf %280, %279 : vector<1x5xf32>
    %282 = arith.addf %155, %281 : vector<1x5xf32>
    %cst_130 = arith.constant 6.300000e+01 : f32
    %283 = vector.broadcast %cst_130 : f32 to vector<1x1xf32>
    %284 = arith.minimumf %274, %283 : vector<1x1xf32>
    %285 = vector.broadcast %284 : vector<1x1xf32> to vector<1x128xf32>
    %286 = arith.cmpf oeq, %20, %285 : vector<1x128xf32>
    %287 = arith.extui %286 : vector<1x128xi1> to vector<1x128xi32>
    %288 = arith.sitofp %287 : vector<1x128xi32> to vector<1x128xf32>
    %c0_131 = arith.constant 0 : index
    %c0_132 = arith.constant 0 : index
    %289 = vector.load %arg5[%c0_131, %c0_132] : memref<128x128xf32, #tpu.memory_space<vmem>>, vector<128x128xf32>
    %cst_133 = arith.constant dense<0.000000e+00> : vector<1x128xf32>
    %290 = tpu.matmul %288, %289, %cst_133 {dimension_numbers = #tpu.dot_dimension_numbers<[1], [0], [0], [1], [0, 0, 1, 1], [], []>} : vector<1x128xf32>, vector<128x128xf32>, vector<1x128xf32> -> vector<1x128xf32>
    %c2_i32 = arith.constant 2 : i32
    %c0_134 = arith.constant 0 : index
    %c0_135 = arith.constant 0 : index
    %291 = vector.load %arg8[%c0_134, %c0_135] : memref<128x128xf32, #tpu.memory_space<vmem>>, vector<128x128xf32>
    %cst_136 = arith.constant dense<0.000000e+00> : vector<1x128xf32>
    %292 = tpu.matmul %290, %291, %cst_136 {dimension_numbers = #tpu.dot_dimension_numbers<[1], [0], [0], [1], [0, 0, 1, 1], [], []>} : vector<1x128xf32>, vector<128x128xf32>, vector<1x128xf32> -> vector<1x128xf32>
    %293 = vector.broadcast %c2_i32 : i32 to vector<8x1xi32>
    %294 = arith.cmpi eq, %27, %293 : vector<8x1xi32>
    %295 = arith.extui %294 : vector<8x1xi1> to vector<8x1xi32>
    %296 = arith.sitofp %295 : vector<8x1xi32> to vector<8x1xf32>
    %c0_137 = arith.constant 0 : index
    %c0_138 = arith.constant 0 : index
    %297 = vector.load %arg9[%c0_137, %c0_138] : memref<128x128xf32, #tpu.memory_space<vmem>>, vector<128x128xf32>
    %cst_139 = arith.constant dense<0.000000e+00> : vector<1x128xf32>
    %298 = tpu.matmul %290, %297, %cst_139 {dimension_numbers = #tpu.dot_dimension_numbers<[1], [0], [0], [1], [0, 0, 1, 1], [], []>} : vector<1x128xf32>, vector<128x128xf32>, vector<1x128xf32> -> vector<1x128xf32>
    %299 = vector.broadcast %296 : vector<8x1xf32> to vector<8x128xf32>
    %300 = vector.broadcast %298 : vector<1x128xf32> to vector<8x128xf32>
    %301 = arith.mulf %299, %300 : vector<8x128xf32>
    %302 = arith.addf %175, %301 : vector<8x128xf32>
    %c0_140 = arith.constant 0 : index
    %c0_141 = arith.constant 0 : index
    %303 = vector.load %arg10[%c0_140, %c0_141] : memref<128x128xf32, #tpu.memory_space<vmem>>, vector<128x128xf32>
    %cst_142 = arith.constant dense<0.000000e+00> : vector<1x128xf32>
    %304 = tpu.matmul %290, %303, %cst_142 {dimension_numbers = #tpu.dot_dimension_numbers<[1], [0], [0], [1], [0, 0, 1, 1], [], []>} : vector<1x128xf32>, vector<128x128xf32>, vector<1x128xf32> -> vector<1x128xf32>
    %305 = vector.broadcast %296 : vector<8x1xf32> to vector<8x128xf32>
    %306 = vector.broadcast %304 : vector<1x128xf32> to vector<8x128xf32>
    %307 = arith.mulf %305, %306 : vector<8x128xf32>
    %308 = arith.addf %181, %307 : vector<8x128xf32>
    %cst_143 = arith.constant dense<0.000000e+00> : vector<1x8xf32>
    %309 = tpu.matmul %292, %302, %cst_143 {dimension_numbers = #tpu.dot_dimension_numbers<[1], [1], [0], [0], [0, 0, 1, 0], [], []>} : vector<1x128xf32>, vector<8x128xf32>, vector<1x8xf32> -> vector<1x8xf32>
    %cst_144 = arith.constant 0.176776692 : f32
    %310 = vector.broadcast %cst_144 : f32 to vector<1x8xf32>
    %311 = arith.mulf %309, %310 : vector<1x8xf32>
    %312 = vector.broadcast %c2_i32 : i32 to vector<1x8xi32>
    %313 = arith.cmpi sle, %28, %312 : vector<1x8xi32>
    %cst_145 = arith.constant -3.40282347E+38 : f32
    %314 = vector.broadcast %cst_145 : f32 to vector<1x8xf32>
    %315 = arith.select %313, %311, %314 : vector<1x8xi1>, vector<1x8xf32>
    %cst_146 = arith.constant dense<0xFF800000> : vector<1xf32>
    %316 = vector.multi_reduction <maximumf>, %315, %cst_146 [1] : vector<1x8xf32> to vector<1xf32>
    %317 = vector.shape_cast %316 : vector<1xf32> to vector<1x1xf32>
    %318 = vector.broadcast %317 : vector<1x1xf32> to vector<1x8xf32>
    %319 = arith.subf %315, %318 : vector<1x8xf32>
    %320 = math.exp %319 : vector<1x8xf32>
    %cst_147 = arith.constant dense<0.000000e+00> : vector<1xf32>
    %321 = vector.multi_reduction <add>, %320, %cst_147 [1] : vector<1x8xf32> to vector<1xf32>
    %322 = vector.shape_cast %321 : vector<1xf32> to vector<1x1xf32>
    %323 = tpu.reciprocal %322 {approx = true} : vector<1x1xf32> -> vector<1x1xf32>
    %324 = vector.broadcast %323 : vector<1x1xf32> to vector<1x8xf32>
    %325 = arith.mulf %320, %324 : vector<1x8xf32>
    %cst_148 = arith.constant dense<0.000000e+00> : vector<1x128xf32>
    %326 = tpu.matmul %325, %308, %cst_148 {dimension_numbers = #tpu.dot_dimension_numbers<[1], [0], [0], [1], [0, 0, 1, 1], [], []>} : vector<1x8xf32>, vector<8x128xf32>, vector<1x128xf32> -> vector<1x128xf32>
    %327 = arith.addf %326, %290 : vector<1x128xf32>
    %c0_149 = arith.constant 0 : index
    %c0_150 = arith.constant 0 : index
    %328 = vector.load %arg11[%c0_149, %c0_150] : memref<128x128xf32, #tpu.memory_space<vmem>>, vector<128x128xf32>
    %cst_151 = arith.constant dense<0.000000e+00> : vector<1x128xf32>
    %329 = tpu.matmul %327, %328, %cst_151 {dimension_numbers = #tpu.dot_dimension_numbers<[1], [0], [0], [1], [0, 0, 1, 1], [], []>} : vector<1x128xf32>, vector<128x128xf32>, vector<1x128xf32> -> vector<1x128xf32>
    %cst_152 = arith.constant dense<0.000000e+00> : vector<1x8xf32>
    %330 = tpu.matmul %329, %10, %cst_152 {dimension_numbers = #tpu.dot_dimension_numbers<[1], [1], [0], [0], [0, 0, 1, 0], [], []>} : vector<1x128xf32>, vector<8x128xf32>, vector<1x8xf32> -> vector<1x8xf32>
    %cst_153 = arith.constant 0.176776692 : f32
    %331 = vector.broadcast %cst_153 : f32 to vector<1x8xf32>
    %332 = arith.mulf %330, %331 : vector<1x8xf32>
    %cst_154 = arith.constant 0.000000e+00 : f32
    %333 = vector.broadcast %cst_154 : f32 to vector<1x8xf32>
    %334 = arith.cmpf ogt, %14, %333 : vector<1x8xf32>
    %cst_155 = arith.constant -3.40282347E+38 : f32
    %335 = vector.broadcast %cst_155 : f32 to vector<1x8xf32>
    %336 = arith.select %334, %332, %335 : vector<1x8xi1>, vector<1x8xf32>
    %cst_156 = arith.constant dense<0xFF800000> : vector<1xf32>
    %337 = vector.multi_reduction <maximumf>, %336, %cst_156 [1] : vector<1x8xf32> to vector<1xf32>
    %338 = vector.shape_cast %337 : vector<1xf32> to vector<1x1xf32>
    %339 = vector.broadcast %338 : vector<1x1xf32> to vector<1x8xf32>
    %340 = arith.subf %336, %339 : vector<1x8xf32>
    %341 = math.exp %340 : vector<1x8xf32>
    %cst_157 = arith.constant dense<0.000000e+00> : vector<1xf32>
    %342 = vector.multi_reduction <add>, %341, %cst_157 [1] : vector<1x8xf32> to vector<1xf32>
    %343 = vector.shape_cast %342 : vector<1xf32> to vector<1x1xf32>
    %344 = tpu.reciprocal %343 {approx = true} : vector<1x1xf32> -> vector<1x1xf32>
    %345 = vector.broadcast %344 : vector<1x1xf32> to vector<1x8xf32>
    %346 = arith.mulf %341, %345 : vector<1x8xf32>
    %cst_158 = arith.constant dense<0.000000e+00> : vector<1x128xf32>
    %347 = tpu.matmul %346, %12, %cst_158 {dimension_numbers = #tpu.dot_dimension_numbers<[1], [0], [0], [1], [0, 0, 1, 1], [], []>} : vector<1x8xf32>, vector<8x128xf32>, vector<1x128xf32> -> vector<1x128xf32>
    %c0_159 = arith.constant 0 : index
    %c0_160 = arith.constant 0 : index
    %348 = vector.load %arg14[%c0_159, %c0_160] : memref<128x128xf32, #tpu.memory_space<vmem>>, vector<128x128xf32>
    %cst_161 = arith.constant dense<0.000000e+00> : vector<1x128xf32>
    %349 = tpu.matmul %347, %348, %cst_161 {dimension_numbers = #tpu.dot_dimension_numbers<[1], [0], [0], [1], [0, 0, 1, 1], [], []>} : vector<1x128xf32>, vector<128x128xf32>, vector<1x128xf32> -> vector<1x128xf32>
    %350 = arith.addf %349, %327 : vector<1x128xf32>
    %c0_162 = arith.constant 0 : index
    %c0_163 = arith.constant 0 : index
    %351 = vector.load %arg15[%c0_162, %c0_163] : memref<128x128xf32, #tpu.memory_space<vmem>>, vector<128x128xf32>
    %cst_164 = arith.constant dense<0.000000e+00> : vector<1x128xf32>
    %352 = tpu.matmul %350, %351, %cst_164 {dimension_numbers = #tpu.dot_dimension_numbers<[1], [0], [0], [1], [0, 0, 1, 1], [], []>} : vector<1x128xf32>, vector<128x128xf32>, vector<1x128xf32> -> vector<1x128xf32>
    %c0_165 = arith.constant 0 : index
    %c0_166 = arith.constant 0 : index
    %353 = vector.load %arg16[%c0_165, %c0_166] : memref<1x128xf32, #tpu.memory_space<vmem>>, vector<1x128xf32>
    %354 = arith.addf %352, %353 : vector<1x128xf32>
    %c64_i32_167 = arith.constant 64 : i32
    %355 = vector.broadcast %c64_i32_167 : i32 to vector<1x128xi32>
    %356 = arith.cmpi eq, %19, %355 : vector<1x128xi32>
    %cst_168 = arith.constant 0.000000e+00 : f32
    %357 = vector.broadcast %cst_168 : f32 to vector<1x128xf32>
    %358 = arith.select %356, %354, %357 : vector<1x128xi1>, vector<1x128xf32>
    %cst_169 = arith.constant dense<0.000000e+00> : vector<1xf32>
    %359 = vector.multi_reduction <add>, %358, %cst_169 [1] : vector<1x128xf32> to vector<1xf32>
    %360 = vector.shape_cast %359 : vector<1xf32> to vector<1x1xf32>
    %cst_170 = arith.constant 0.000000e+00 : f32
    %361 = vector.broadcast %cst_170 : f32 to vector<1x1xf32>
    %362 = arith.subf %361, %360 : vector<1x1xf32>
    %363 = math.exp %362 : vector<1x1xf32>
    %cst_171 = arith.constant 1.000000e+00 : f32
    %364 = vector.broadcast %cst_171 : f32 to vector<1x1xf32>
    %365 = arith.addf %364, %363 : vector<1x1xf32>
    %366 = tpu.reciprocal %365 {approx = true} : vector<1x1xf32> -> vector<1x1xf32>
    %c64_i32_172 = arith.constant 64 : i32
    %367 = vector.broadcast %c64_i32_172 : i32 to vector<1x128xi32>
    %368 = arith.cmpi slt, %19, %367 : vector<1x128xi32>
    %cst_173 = arith.constant -3.40282347E+38 : f32
    %369 = vector.broadcast %cst_173 : f32 to vector<1x128xf32>
    %370 = arith.select %368, %354, %369 : vector<1x128xi1>, vector<1x128xf32>
    %cst_174 = arith.constant dense<0xFF800000> : vector<1xf32>
    %371 = vector.multi_reduction <maximumf>, %370, %cst_174 [1] : vector<1x128xf32> to vector<1xf32>
    %372 = vector.shape_cast %371 : vector<1xf32> to vector<1x1xf32>
    %373 = vector.broadcast %372 : vector<1x1xf32> to vector<1x128xf32>
    %374 = arith.subf %370, %373 : vector<1x128xf32>
    %375 = math.exp %374 : vector<1x128xf32>
    %cst_175 = arith.constant dense<0.000000e+00> : vector<1xf32>
    %376 = vector.multi_reduction <add>, %375, %cst_175 [1] : vector<1x128xf32> to vector<1xf32>
    %377 = vector.shape_cast %376 : vector<1xf32> to vector<1x1xf32>
    %378 = tpu.reciprocal %377 {approx = true} : vector<1x1xf32> -> vector<1x1xf32>
    %379 = vector.broadcast %378 : vector<1x1xf32> to vector<1x128xf32>
    %380 = arith.mulf %375, %379 : vector<1x128xf32>
    %cst_176 = arith.constant 1.000000e+00 : f32
    %381 = vector.broadcast %cst_176 : f32 to vector<1x1xf32>
    %382 = arith.subf %381, %366 : vector<1x1xf32>
    %383 = vector.broadcast %382 : vector<1x1xf32> to vector<1x8xf32>
    %384 = arith.mulf %383, %346 : vector<1x8xf32>
    %385 = arith.mulf %384, %16 : vector<1x8xf32>
    %386 = vector.broadcast %366 : vector<1x1xf32> to vector<1x128xf32>
    %387 = arith.mulf %386, %380 : vector<1x128xf32>
    %cst_177 = arith.constant dense<0.000000e+00> : vector<1x128xf32>
    %388 = tpu.matmul %385, %25, %cst_177 {dimension_numbers = #tpu.dot_dimension_numbers<[1], [0], [0], [1], [0, 0, 1, 1], [], []>} : vector<1x8xf32>, vector<8x128xf32>, vector<1x128xf32> -> vector<1x128xf32>
    %389 = arith.addf %387, %388 : vector<1x128xf32>
    %c68_i32_178 = arith.constant 68 : i32
    %390 = vector.broadcast %c68_i32_178 : i32 to vector<1x128xi32>
    %391 = arith.cmpi slt, %19, %390 : vector<1x128xi32>
    %cst_179 = arith.constant -1.000000e+00 : f32
    %392 = vector.broadcast %cst_179 : f32 to vector<1x128xf32>
    %393 = arith.select %391, %389, %392 : vector<1x128xi1>, vector<1x128xf32>
    %cst_180 = arith.constant dense<0xFF800000> : vector<1xf32>
    %394 = vector.multi_reduction <maximumf>, %393, %cst_180 [1] : vector<1x128xf32> to vector<1xf32>
    %395 = vector.shape_cast %394 : vector<1xf32> to vector<1x1xf32>
    %396 = vector.broadcast %395 : vector<1x1xf32> to vector<1x128xf32>
    %397 = arith.cmpf oge, %393, %396 : vector<1x128xf32>
    %cst_181 = arith.constant 1.280000e+02 : f32
    %398 = vector.broadcast %cst_181 : f32 to vector<1x128xf32>
    %399 = arith.select %397, %20, %398 : vector<1x128xi1>, vector<1x128xf32>
    %cst_182 = arith.constant dense<0x7F800000> : vector<1xf32>
    %400 = vector.multi_reduction <minimumf>, %399, %cst_182 [1] : vector<1x128xf32> to vector<1xf32>
    %401 = vector.shape_cast %400 : vector<1xf32> to vector<1x1xf32>
    %c1_i32_183 = arith.constant 1 : i32
    %402 = arith.addi %c2_i32, %c1_i32_183 : i32
    %403 = vector.broadcast %402 : i32 to vector<1x5xi32>
    %404 = arith.cmpi eq, %26, %403 : vector<1x5xi32>
    %405 = arith.extui %404 : vector<1x5xi1> to vector<1x5xi32>
    %406 = arith.sitofp %405 : vector<1x5xi32> to vector<1x5xf32>
    %407 = vector.broadcast %401 : vector<1x1xf32> to vector<1x5xf32>
    %408 = arith.mulf %407, %406 : vector<1x5xf32>
    %409 = arith.addf %282, %408 : vector<1x5xf32>
    %cst_184 = arith.constant 6.300000e+01 : f32
    %410 = vector.broadcast %cst_184 : f32 to vector<1x1xf32>
    %411 = arith.minimumf %401, %410 : vector<1x1xf32>
    %412 = vector.broadcast %411 : vector<1x1xf32> to vector<1x128xf32>
    %413 = arith.cmpf oeq, %20, %412 : vector<1x128xf32>
    %414 = arith.extui %413 : vector<1x128xi1> to vector<1x128xi32>
    %415 = arith.sitofp %414 : vector<1x128xi32> to vector<1x128xf32>
    %c0_185 = arith.constant 0 : index
    %c0_186 = arith.constant 0 : index
    %416 = vector.load %arg5[%c0_185, %c0_186] : memref<128x128xf32, #tpu.memory_space<vmem>>, vector<128x128xf32>
    %cst_187 = arith.constant dense<0.000000e+00> : vector<1x128xf32>
    %417 = tpu.matmul %415, %416, %cst_187 {dimension_numbers = #tpu.dot_dimension_numbers<[1], [0], [0], [1], [0, 0, 1, 1], [], []>} : vector<1x128xf32>, vector<128x128xf32>, vector<1x128xf32> -> vector<1x128xf32>
    %c3_i32 = arith.constant 3 : i32
    %c0_188 = arith.constant 0 : index
    %c0_189 = arith.constant 0 : index
    %418 = vector.load %arg8[%c0_188, %c0_189] : memref<128x128xf32, #tpu.memory_space<vmem>>, vector<128x128xf32>
    %cst_190 = arith.constant dense<0.000000e+00> : vector<1x128xf32>
    %419 = tpu.matmul %417, %418, %cst_190 {dimension_numbers = #tpu.dot_dimension_numbers<[1], [0], [0], [1], [0, 0, 1, 1], [], []>} : vector<1x128xf32>, vector<128x128xf32>, vector<1x128xf32> -> vector<1x128xf32>
    %420 = vector.broadcast %c3_i32 : i32 to vector<8x1xi32>
    %421 = arith.cmpi eq, %27, %420 : vector<8x1xi32>
    %422 = arith.extui %421 : vector<8x1xi1> to vector<8x1xi32>
    %423 = arith.sitofp %422 : vector<8x1xi32> to vector<8x1xf32>
    %c0_191 = arith.constant 0 : index
    %c0_192 = arith.constant 0 : index
    %424 = vector.load %arg9[%c0_191, %c0_192] : memref<128x128xf32, #tpu.memory_space<vmem>>, vector<128x128xf32>
    %cst_193 = arith.constant dense<0.000000e+00> : vector<1x128xf32>
    %425 = tpu.matmul %417, %424, %cst_193 {dimension_numbers = #tpu.dot_dimension_numbers<[1], [0], [0], [1], [0, 0, 1, 1], [], []>} : vector<1x128xf32>, vector<128x128xf32>, vector<1x128xf32> -> vector<1x128xf32>
    %426 = vector.broadcast %423 : vector<8x1xf32> to vector<8x128xf32>
    %427 = vector.broadcast %425 : vector<1x128xf32> to vector<8x128xf32>
    %428 = arith.mulf %426, %427 : vector<8x128xf32>
    %429 = arith.addf %302, %428 : vector<8x128xf32>
    %c0_194 = arith.constant 0 : index
    %c0_195 = arith.constant 0 : index
    %430 = vector.load %arg10[%c0_194, %c0_195] : memref<128x128xf32, #tpu.memory_space<vmem>>, vector<128x128xf32>
    %cst_196 = arith.constant dense<0.000000e+00> : vector<1x128xf32>
    %431 = tpu.matmul %417, %430, %cst_196 {dimension_numbers = #tpu.dot_dimension_numbers<[1], [0], [0], [1], [0, 0, 1, 1], [], []>} : vector<1x128xf32>, vector<128x128xf32>, vector<1x128xf32> -> vector<1x128xf32>
    %432 = vector.broadcast %423 : vector<8x1xf32> to vector<8x128xf32>
    %433 = vector.broadcast %431 : vector<1x128xf32> to vector<8x128xf32>
    %434 = arith.mulf %432, %433 : vector<8x128xf32>
    %435 = arith.addf %308, %434 : vector<8x128xf32>
    %cst_197 = arith.constant dense<0.000000e+00> : vector<1x8xf32>
    %436 = tpu.matmul %419, %429, %cst_197 {dimension_numbers = #tpu.dot_dimension_numbers<[1], [1], [0], [0], [0, 0, 1, 0], [], []>} : vector<1x128xf32>, vector<8x128xf32>, vector<1x8xf32> -> vector<1x8xf32>
    %cst_198 = arith.constant 0.176776692 : f32
    %437 = vector.broadcast %cst_198 : f32 to vector<1x8xf32>
    %438 = arith.mulf %436, %437 : vector<1x8xf32>
    %439 = vector.broadcast %c3_i32 : i32 to vector<1x8xi32>
    %440 = arith.cmpi sle, %28, %439 : vector<1x8xi32>
    %cst_199 = arith.constant -3.40282347E+38 : f32
    %441 = vector.broadcast %cst_199 : f32 to vector<1x8xf32>
    %442 = arith.select %440, %438, %441 : vector<1x8xi1>, vector<1x8xf32>
    %cst_200 = arith.constant dense<0xFF800000> : vector<1xf32>
    %443 = vector.multi_reduction <maximumf>, %442, %cst_200 [1] : vector<1x8xf32> to vector<1xf32>
    %444 = vector.shape_cast %443 : vector<1xf32> to vector<1x1xf32>
    %445 = vector.broadcast %444 : vector<1x1xf32> to vector<1x8xf32>
    %446 = arith.subf %442, %445 : vector<1x8xf32>
    %447 = math.exp %446 : vector<1x8xf32>
    %cst_201 = arith.constant dense<0.000000e+00> : vector<1xf32>
    %448 = vector.multi_reduction <add>, %447, %cst_201 [1] : vector<1x8xf32> to vector<1xf32>
    %449 = vector.shape_cast %448 : vector<1xf32> to vector<1x1xf32>
    %450 = tpu.reciprocal %449 {approx = true} : vector<1x1xf32> -> vector<1x1xf32>
    %451 = vector.broadcast %450 : vector<1x1xf32> to vector<1x8xf32>
    %452 = arith.mulf %447, %451 : vector<1x8xf32>
    %cst_202 = arith.constant dense<0.000000e+00> : vector<1x128xf32>
    %453 = tpu.matmul %452, %435, %cst_202 {dimension_numbers = #tpu.dot_dimension_numbers<[1], [0], [0], [1], [0, 0, 1, 1], [], []>} : vector<1x8xf32>, vector<8x128xf32>, vector<1x128xf32> -> vector<1x128xf32>
    %454 = arith.addf %453, %417 : vector<1x128xf32>
    %c0_203 = arith.constant 0 : index
    %c0_204 = arith.constant 0 : index
    %455 = vector.load %arg11[%c0_203, %c0_204] : memref<128x128xf32, #tpu.memory_space<vmem>>, vector<128x128xf32>
    %cst_205 = arith.constant dense<0.000000e+00> : vector<1x128xf32>
    %456 = tpu.matmul %454, %455, %cst_205 {dimension_numbers = #tpu.dot_dimension_numbers<[1], [0], [0], [1], [0, 0, 1, 1], [], []>} : vector<1x128xf32>, vector<128x128xf32>, vector<1x128xf32> -> vector<1x128xf32>
    %cst_206 = arith.constant dense<0.000000e+00> : vector<1x8xf32>
    %457 = tpu.matmul %456, %10, %cst_206 {dimension_numbers = #tpu.dot_dimension_numbers<[1], [1], [0], [0], [0, 0, 1, 0], [], []>} : vector<1x128xf32>, vector<8x128xf32>, vector<1x8xf32> -> vector<1x8xf32>
    %cst_207 = arith.constant 0.176776692 : f32
    %458 = vector.broadcast %cst_207 : f32 to vector<1x8xf32>
    %459 = arith.mulf %457, %458 : vector<1x8xf32>
    %cst_208 = arith.constant 0.000000e+00 : f32
    %460 = vector.broadcast %cst_208 : f32 to vector<1x8xf32>
    %461 = arith.cmpf ogt, %14, %460 : vector<1x8xf32>
    %cst_209 = arith.constant -3.40282347E+38 : f32
    %462 = vector.broadcast %cst_209 : f32 to vector<1x8xf32>
    %463 = arith.select %461, %459, %462 : vector<1x8xi1>, vector<1x8xf32>
    %cst_210 = arith.constant dense<0xFF800000> : vector<1xf32>
    %464 = vector.multi_reduction <maximumf>, %463, %cst_210 [1] : vector<1x8xf32> to vector<1xf32>
    %465 = vector.shape_cast %464 : vector<1xf32> to vector<1x1xf32>
    %466 = vector.broadcast %465 : vector<1x1xf32> to vector<1x8xf32>
    %467 = arith.subf %463, %466 : vector<1x8xf32>
    %468 = math.exp %467 : vector<1x8xf32>
    %cst_211 = arith.constant dense<0.000000e+00> : vector<1xf32>
    %469 = vector.multi_reduction <add>, %468, %cst_211 [1] : vector<1x8xf32> to vector<1xf32>
    %470 = vector.shape_cast %469 : vector<1xf32> to vector<1x1xf32>
    %471 = tpu.reciprocal %470 {approx = true} : vector<1x1xf32> -> vector<1x1xf32>
    %472 = vector.broadcast %471 : vector<1x1xf32> to vector<1x8xf32>
    %473 = arith.mulf %468, %472 : vector<1x8xf32>
    %cst_212 = arith.constant dense<0.000000e+00> : vector<1x128xf32>
    %474 = tpu.matmul %473, %12, %cst_212 {dimension_numbers = #tpu.dot_dimension_numbers<[1], [0], [0], [1], [0, 0, 1, 1], [], []>} : vector<1x8xf32>, vector<8x128xf32>, vector<1x128xf32> -> vector<1x128xf32>
    %c0_213 = arith.constant 0 : index
    %c0_214 = arith.constant 0 : index
    %475 = vector.load %arg14[%c0_213, %c0_214] : memref<128x128xf32, #tpu.memory_space<vmem>>, vector<128x128xf32>
    %cst_215 = arith.constant dense<0.000000e+00> : vector<1x128xf32>
    %476 = tpu.matmul %474, %475, %cst_215 {dimension_numbers = #tpu.dot_dimension_numbers<[1], [0], [0], [1], [0, 0, 1, 1], [], []>} : vector<1x128xf32>, vector<128x128xf32>, vector<1x128xf32> -> vector<1x128xf32>
    %477 = arith.addf %476, %454 : vector<1x128xf32>
    %c0_216 = arith.constant 0 : index
    %c0_217 = arith.constant 0 : index
    %478 = vector.load %arg15[%c0_216, %c0_217] : memref<128x128xf32, #tpu.memory_space<vmem>>, vector<128x128xf32>
    %cst_218 = arith.constant dense<0.000000e+00> : vector<1x128xf32>
    %479 = tpu.matmul %477, %478, %cst_218 {dimension_numbers = #tpu.dot_dimension_numbers<[1], [0], [0], [1], [0, 0, 1, 1], [], []>} : vector<1x128xf32>, vector<128x128xf32>, vector<1x128xf32> -> vector<1x128xf32>
    %c0_219 = arith.constant 0 : index
    %c0_220 = arith.constant 0 : index
    %480 = vector.load %arg16[%c0_219, %c0_220] : memref<1x128xf32, #tpu.memory_space<vmem>>, vector<1x128xf32>
    %481 = arith.addf %479, %480 : vector<1x128xf32>
    %c64_i32_221 = arith.constant 64 : i32
    %482 = vector.broadcast %c64_i32_221 : i32 to vector<1x128xi32>
    %483 = arith.cmpi eq, %19, %482 : vector<1x128xi32>
    %cst_222 = arith.constant 0.000000e+00 : f32
    %484 = vector.broadcast %cst_222 : f32 to vector<1x128xf32>
    %485 = arith.select %483, %481, %484 : vector<1x128xi1>, vector<1x128xf32>
    %cst_223 = arith.constant dense<0.000000e+00> : vector<1xf32>
    %486 = vector.multi_reduction <add>, %485, %cst_223 [1] : vector<1x128xf32> to vector<1xf32>
    %487 = vector.shape_cast %486 : vector<1xf32> to vector<1x1xf32>
    %cst_224 = arith.constant 0.000000e+00 : f32
    %488 = vector.broadcast %cst_224 : f32 to vector<1x1xf32>
    %489 = arith.subf %488, %487 : vector<1x1xf32>
    %490 = math.exp %489 : vector<1x1xf32>
    %cst_225 = arith.constant 1.000000e+00 : f32
    %491 = vector.broadcast %cst_225 : f32 to vector<1x1xf32>
    %492 = arith.addf %491, %490 : vector<1x1xf32>
    %493 = tpu.reciprocal %492 {approx = true} : vector<1x1xf32> -> vector<1x1xf32>
    %c64_i32_226 = arith.constant 64 : i32
    %494 = vector.broadcast %c64_i32_226 : i32 to vector<1x128xi32>
    %495 = arith.cmpi slt, %19, %494 : vector<1x128xi32>
    %cst_227 = arith.constant -3.40282347E+38 : f32
    %496 = vector.broadcast %cst_227 : f32 to vector<1x128xf32>
    %497 = arith.select %495, %481, %496 : vector<1x128xi1>, vector<1x128xf32>
    %cst_228 = arith.constant dense<0xFF800000> : vector<1xf32>
    %498 = vector.multi_reduction <maximumf>, %497, %cst_228 [1] : vector<1x128xf32> to vector<1xf32>
    %499 = vector.shape_cast %498 : vector<1xf32> to vector<1x1xf32>
    %500 = vector.broadcast %499 : vector<1x1xf32> to vector<1x128xf32>
    %501 = arith.subf %497, %500 : vector<1x128xf32>
    %502 = math.exp %501 : vector<1x128xf32>
    %cst_229 = arith.constant dense<0.000000e+00> : vector<1xf32>
    %503 = vector.multi_reduction <add>, %502, %cst_229 [1] : vector<1x128xf32> to vector<1xf32>
    %504 = vector.shape_cast %503 : vector<1xf32> to vector<1x1xf32>
    %505 = tpu.reciprocal %504 {approx = true} : vector<1x1xf32> -> vector<1x1xf32>
    %506 = vector.broadcast %505 : vector<1x1xf32> to vector<1x128xf32>
    %507 = arith.mulf %502, %506 : vector<1x128xf32>
    %cst_230 = arith.constant 1.000000e+00 : f32
    %508 = vector.broadcast %cst_230 : f32 to vector<1x1xf32>
    %509 = arith.subf %508, %493 : vector<1x1xf32>
    %510 = vector.broadcast %509 : vector<1x1xf32> to vector<1x8xf32>
    %511 = arith.mulf %510, %473 : vector<1x8xf32>
    %512 = arith.mulf %511, %16 : vector<1x8xf32>
    %513 = vector.broadcast %493 : vector<1x1xf32> to vector<1x128xf32>
    %514 = arith.mulf %513, %507 : vector<1x128xf32>
    %cst_231 = arith.constant dense<0.000000e+00> : vector<1x128xf32>
    %515 = tpu.matmul %512, %25, %cst_231 {dimension_numbers = #tpu.dot_dimension_numbers<[1], [0], [0], [1], [0, 0, 1, 1], [], []>} : vector<1x8xf32>, vector<8x128xf32>, vector<1x128xf32> -> vector<1x128xf32>
    %516 = arith.addf %514, %515 : vector<1x128xf32>
    %c68_i32_232 = arith.constant 68 : i32
    %517 = vector.broadcast %c68_i32_232 : i32 to vector<1x128xi32>
    %518 = arith.cmpi slt, %19, %517 : vector<1x128xi32>
    %cst_233 = arith.constant -1.000000e+00 : f32
    %519 = vector.broadcast %cst_233 : f32 to vector<1x128xf32>
    %520 = arith.select %518, %516, %519 : vector<1x128xi1>, vector<1x128xf32>
    %cst_234 = arith.constant dense<0xFF800000> : vector<1xf32>
    %521 = vector.multi_reduction <maximumf>, %520, %cst_234 [1] : vector<1x128xf32> to vector<1xf32>
    %522 = vector.shape_cast %521 : vector<1xf32> to vector<1x1xf32>
    %523 = vector.broadcast %522 : vector<1x1xf32> to vector<1x128xf32>
    %524 = arith.cmpf oge, %520, %523 : vector<1x128xf32>
    %cst_235 = arith.constant 1.280000e+02 : f32
    %525 = vector.broadcast %cst_235 : f32 to vector<1x128xf32>
    %526 = arith.select %524, %20, %525 : vector<1x128xi1>, vector<1x128xf32>
    %cst_236 = arith.constant dense<0x7F800000> : vector<1xf32>
    %527 = vector.multi_reduction <minimumf>, %526, %cst_236 [1] : vector<1x128xf32> to vector<1xf32>
    %528 = vector.shape_cast %527 : vector<1xf32> to vector<1x1xf32>
    %c1_i32_237 = arith.constant 1 : i32
    %529 = arith.addi %c3_i32, %c1_i32_237 : i32
    %530 = vector.broadcast %529 : i32 to vector<1x5xi32>
    %531 = arith.cmpi eq, %26, %530 : vector<1x5xi32>
    %532 = arith.extui %531 : vector<1x5xi1> to vector<1x5xi32>
    %533 = arith.sitofp %532 : vector<1x5xi32> to vector<1x5xf32>
    %534 = vector.broadcast %528 : vector<1x1xf32> to vector<1x5xf32>
    %535 = arith.mulf %534, %533 : vector<1x5xf32>
    %536 = arith.addf %409, %535 : vector<1x5xf32>
    %cst_238 = arith.constant 6.300000e+01 : f32
    %537 = vector.broadcast %cst_238 : f32 to vector<1x1xf32>
    %538 = arith.minimumf %528, %537 : vector<1x1xf32>
    %539 = vector.broadcast %538 : vector<1x1xf32> to vector<1x128xf32>
    %540 = arith.cmpf oeq, %20, %539 : vector<1x128xf32>
    %541 = arith.extui %540 : vector<1x128xi1> to vector<1x128xi32>
    %542 = arith.sitofp %541 : vector<1x128xi32> to vector<1x128xf32>
    %c0_239 = arith.constant 0 : index
    %c0_240 = arith.constant 0 : index
    %543 = vector.load %arg5[%c0_239, %c0_240] : memref<128x128xf32, #tpu.memory_space<vmem>>, vector<128x128xf32>
    %cst_241 = arith.constant dense<0.000000e+00> : vector<1x128xf32>
    %544 = tpu.matmul %542, %543, %cst_241 {dimension_numbers = #tpu.dot_dimension_numbers<[1], [0], [0], [1], [0, 0, 1, 1], [], []>} : vector<1x128xf32>, vector<128x128xf32>, vector<1x128xf32> -> vector<1x128xf32>
    %c4_i32 = arith.constant 4 : i32
    %545 = arith.fptosi %536 : vector<1x5xf32> to vector<1x5xi32>
    %c0_242 = arith.constant 0 : index
    %c0_243 = arith.constant 0 : index
    %c0_244 = arith.constant 0 : index
    %546 = vector.load %arg17[%c0_242, %c0_243, %c0_244] : memref<1x1x5xi32, #tpu.memory_space<vmem>>, vector<1x1x5xi32>
    %547 = vector.shape_cast %546 : vector<1x1x5xi32> to vector<1x5xi32>
    %548 = vector.shape_cast %545 : vector<1x5xi32> to vector<1x1x5xi32>
    tpu.vector_store %arg17[%c0_242, %c0_243, %c0_244], %548 {strides = array<i32>} : memref<1x1x5xi32, #tpu.memory_space<vmem>>, vector<1x1x5xi32>,
    return
  }
  func.func @transform_0(%arg0: i32) -> (i32, i32, i32) {
    %c0_i32 = arith.constant 0 : i32
    %c0_i32_0 = arith.constant 0 : i32
    %c0_i32_1 = arith.constant 0 : i32
    return %arg0, %c0_i32, %c0_i32_0 : i32, i32, i32
  }
  func.func @transform_1(%arg0: i32) -> (i32, i32, i32) {
    %c0_i32 = arith.constant 0 : i32
    %c0_i32_0 = arith.constant 0 : i32
    %c0_i32_1 = arith.constant 0 : i32
    return %arg0, %c0_i32, %c0_i32_0 : i32, i32, i32
  }
  func.func @transform_2(%arg0: i32) -> (i32, i32, i32) {
    %c0_i32 = arith.constant 0 : i32
    %c0_i32_0 = arith.constant 0 : i32
    %c0_i32_1 = arith.constant 0 : i32
    return %arg0, %c0_i32, %c0_i32_0 : i32, i32, i32
  }
  func.func @transform_3(%arg0: i32) -> (i32, i32, i32) {
    %c0_i32 = arith.constant 0 : i32
    %c0_i32_0 = arith.constant 0 : i32
    %c0_i32_1 = arith.constant 0 : i32
    return %arg0, %c0_i32, %c0_i32_0 : i32, i32, i32
  }
  func.func @transform_4(%arg0: i32) -> (i32, i32) {
    %c0_i32 = arith.constant 0 : i32
    %c0_i32_0 = arith.constant 0 : i32
    %c0_i32_1 = arith.constant 0 : i32
    return %c0_i32, %c0_i32_0 : i32, i32
  }
  func.func @transform_5(%arg0: i32) -> (i32, i32) {
    %c0_i32 = arith.constant 0 : i32
    %c0_i32_0 = arith.constant 0 : i32
    %c0_i32_1 = arith.constant 0 : i32
    return %c0_i32, %c0_i32_0 : i32, i32
  }
  func.func @transform_6(%arg0: i32) -> (i32, i32) {
    %c0_i32 = arith.constant 0 : i32
    %c0_i32_0 = arith.constant 0 : i32
    %c0_i32_1 = arith.constant 0 : i32
    return %c0_i32, %c0_i32_0 : i32, i32
  }
  func.func @transform_7(%arg0: i32) -> (i32, i32) {
    %c0_i32 = arith.constant 0 : i32
    %c0_i32_0 = arith.constant 0 : i32
    %c0_i32_1 = arith.constant 0 : i32
    return %c0_i32, %c0_i32_0 : i32, i32
  }
  func.func @transform_8(%arg0: i32) -> (i32, i32) {
    %c0_i32 = arith.constant 0 : i32
    %c0_i32_0 = arith.constant 0 : i32
    %c0_i32_1 = arith.constant 0 : i32
    return %c0_i32, %c0_i32_0 : i32, i32
  }
  func.func @transform_9(%arg0: i32) -> (i32, i32) {
    %c0_i32 = arith.constant 0 : i32
    %c0_i32_0 = arith.constant 0 : i32
    %c0_i32_1 = arith.constant 0 : i32
    return %c0_i32, %c0_i32_0 : i32, i32
  }
  func.func @transform_10(%arg0: i32) -> (i32, i32) {
    %c0_i32 = arith.constant 0 : i32
    %c0_i32_0 = arith.constant 0 : i32
    %c0_i32_1 = arith.constant 0 : i32
    return %c0_i32, %c0_i32_0 : i32, i32
  }
  func.func @transform_11(%arg0: i32) -> (i32, i32) {
    %c0_i32 = arith.constant 0 : i32
    %c0_i32_0 = arith.constant 0 : i32
    %c0_i32_1 = arith.constant 0 : i32
    return %c0_i32, %c0_i32_0 : i32, i32
  }
  func.func @transform_12(%arg0: i32) -> (i32, i32) {
    %c0_i32 = arith.constant 0 : i32
    %c0_i32_0 = arith.constant 0 : i32
    %c0_i32_1 = arith.constant 0 : i32
    return %c0_i32, %c0_i32_0 : i32, i32
  }
  func.func @transform_13(%arg0: i32) -> (i32, i32) {
    %c0_i32 = arith.constant 0 : i32
    %c0_i32_0 = arith.constant 0 : i32
    %c0_i32_1 = arith.constant 0 : i32
    return %c0_i32, %c0_i32_0 : i32, i32
  }
  func.func @transform_14(%arg0: i32) -> (i32, i32) {
    %c0_i32 = arith.constant 0 : i32
    %c0_i32_0 = arith.constant 0 : i32
    %c0_i32_1 = arith.constant 0 : i32
    return %c0_i32, %c0_i32_0 : i32, i32
  }
  func.func @transform_15(%arg0: i32) -> (i32, i32) {
    %c0_i32 = arith.constant 0 : i32
    %c0_i32_0 = arith.constant 0 : i32
    %c0_i32_1 = arith.constant 0 : i32
    return %c0_i32, %c0_i32_0 : i32, i32
  }
  func.func @transform_16(%arg0: i32) -> (i32, i32, i32) {
    %c0_i32 = arith.constant 0 : i32
    %c0_i32_0 = arith.constant 0 : i32
    %c0_i32_1 = arith.constant 0 : i32
    return %arg0, %c0_i32, %c0_i32_0 : i32, i32, i32
  }
}

</mosaic_0001>

<llo_original>
// kernel: run.1
$region0: #{run.1}
  #allocation0 [shape = 'u32[]', space=smem, size = 0x4, offset = 0x4, fixed_abs, tag = 'smem constant byte address 0x4 - core index']
  #allocation1 [shape = 'u32[144,128]{1,0:T(1,128)}', space=vmem, size = 0x12000, scoped, tag = 'internal scratch']
  %s0 = inlined_call_operand.vmem [shape: f32[2,8,128], index: 0, kind: input, shape index: {}]
  %s1 = inlined_call_operand.vmem [shape: f32[2,1,8], index: 1, kind: input, shape index: {}]
  %s2 = inlined_call_operand.vmem [shape: f32[2,1,8], index: 2, kind: input, shape index: {}]
  %s3 = inlined_call_operand.vmem [shape: s32[2,8,1], index: 3, kind: input, shape index: {}]
  %s4 = inlined_call_operand.vmem [shape: f32[128,128], index: 4, kind: input, shape index: {}]
  %s5 = inlined_call_operand.vmem [shape: f32[128,128], index: 5, kind: input, shape index: {}]
  %s6 = inlined_call_operand.vmem [shape: f32[1,128], index: 6, kind: input, shape index: {}]
  %s7 = inlined_call_operand.vmem [shape: f32[128,128], index: 7, kind: input, shape index: {}]
  %s8 = inlined_call_operand.hbm [shape: f32[128,128], index: 8, kind: input, shape index: {}]
  %s9 = inlined_call_operand.hbm [shape: f32[128,128], index: 9, kind: input, shape index: {}]
  %s10 = inlined_call_operand.hbm [shape: f32[128,128], index: 10, kind: input, shape index: {}]
  %s11 = inlined_call_operand.hbm [shape: f32[128,128], index: 11, kind: input, shape index: {}]
  %s12 = inlined_call_operand.hbm [shape: f32[128,128], index: 12, kind: input, shape index: {}]
  %s13 = inlined_call_operand.hbm [shape: f32[128,128], index: 13, kind: input, shape index: {}]
  %s14 = inlined_call_operand.hbm [shape: f32[128,128], index: 14, kind: input, shape index: {}]
  %s15 = inlined_call_operand.vmem [shape: f32[1,128], index: 15, kind: input, shape index: {}]
  %s16 = inlined_call_operand.hbm [shape: s32[2,1,5], index: 16, kind: output, shape index: {}]
  %s17 = sld [smem:[#allocation0]]
  $region125: #{run.1} parent=0
    _
  %s19 = ssub.s32 1, %s17
  %s20 = scalar_select 0, %s19, %s17
  $region1: #{run.1} parent=0
    #allocation2 [shape = 'u8[65536]{0}', space=vmem, size = 0x10000, scoped, tag = 'input window, operand 8, single buffered']
    #allocation3 [shape = 's32[2]{0}', space=sflag, size = 0x8, scoped, tag = 'scoped memory for run.1']
    #allocation4 [shape = 's32[2]{0}', space=sflag, size = 0x8, scoped, tag = 'scoped memory for run.1']
    #allocation5 [shape = 'u8[65536]{0}', space=vmem, size = 0x10000, scoped, tag = 'input window, operand 9, single buffered']
    #allocation6 [shape = 's32[1]{0}', space=sflag, size = 0x4, scoped, tag = 'scoped memory for run.1']
    #allocation7 [shape = 'u8[65536]{0}', space=vmem, size = 0x10000, scoped, tag = 'input window, operand 10, single buffered']
    #allocation8 [shape = 'u8[65536]{0}', space=vmem, size = 0x10000, scoped, tag = 'input window, operand 11, single buffered']
    #allocation9 [shape = 's32[1]{0}', space=sflag, size = 0x4, scoped, tag = 'scoped memory for run.1']
    #allocation10 [shape = 'u8[65536]{0}', space=vmem, size = 0x10000, scoped, tag = 'input window, operand 12, single buffered']
    #allocation11 [shape = 'u8[65536]{0}', space=vmem, size = 0x10000, scoped, tag = 'input window, operand 13, single buffered']
    #allocation12 [shape = 's32[1]{0}', space=sflag, size = 0x4, scoped, tag = 'scoped memory for run.1']
    #allocation13 [shape = 'u8[65536]{0}', space=vmem, size = 0x10000, scoped, tag = 'input window, operand 14, single buffered']
    #allocation14 [shape = 'u8[1024]{0}', space=vmem, size = 0x400, scoped, tag = 'output window, operand 0']
    %21 = vsyncpa [#allocation3], 0
    %22 = vsyncpa [#allocation6], 0
    %23 = vsyncpa [#allocation9], 0
    %24 = vsyncpa [#allocation12], 0
    %25 = vsyncpa [#allocation4], 0
    %s26 = scalar_lea.sflag [#allocation4], 1
    %27 = vsyncpa %s26, 0
    loop: start=0, step=1, limit=4
    $region2: #{run.1} parent=1 // loop_pre_header
      _
    $region3: #{run.1} parent=1 // loop_header
      %s29 = sphi 0, %s33
      %p30 = scmp.ge.s32.totalorder %s29, 4
      %s39 = sphi 0, %s41
      %s42 = sphi 0, %s39
      %s43 = sphi 0, %s42
      %s59 = sphi 0, %s43
      %s65 = sphi 0, %s67
      %s68 = sphi 0, %s65
      %s69 = sphi 0, %s68
      %s85 = sphi 0, %s69
      %s91 = sphi 0, %s93
      %s94 = sphi 0, %s91
      %s95 = sphi 0, %s94
      %s111 = sphi 0, %s95
      %s117 = sphi 0, %s119
      %s120 = sphi 0, %s117
      %s121 = sphi 0, %s120
      %s137 = sphi 0, %s121
      %s141 = sphi 0, %s141
      %s143 = sphi 0, %s141
      %s144 = sphi 0, %s143
      %s158 = sphi 0, %s144
      %s162 = sphi 0, %s162
      %s164 = sphi 0, %s162
      %s165 = sphi 0, %s164
      %s179 = sphi 0, %s165
      %s183 = sphi 0, %s183
      %s185 = sphi 0, %s183
      %s186 = sphi 0, %s185
      %s200 = sphi 0, %s186
      %s204 = sphi 0, %s204
      %s206 = sphi 0, %s204
      %s207 = sphi 0, %s206
      %s221 = sphi 0, %s207
      %s225 = sphi 0, %s225
      %s227 = sphi 0, %s225
      %s228 = sphi 0, %s227
      %s242 = sphi 0, %s228
      %s246 = sphi 0, %s246
      %s248 = sphi 0, %s246
      %s249 = sphi 0, %s248
      %s263 = sphi 0, %s249
      %s267 = sphi 0, %s267
      %s269 = sphi 0, %s267
      %s270 = sphi 0, %s269
      %s284 = sphi 0, %s270
      %s288 = sphi 0, %s288
      %s290 = sphi 0, %s288
      %s291 = sphi 0, %s290
      %s305 = sphi 0, %s291
      %s309 = sphi 0, %s309
      %s311 = sphi 0, %s309
      %s312 = sphi 0, %s311
      %s326 = sphi 0, %s312
      %s330 = sphi 0, %s330
      %s332 = sphi 0, %s330
      %s333 = sphi 0, %s332
      %s347 = sphi 0, %s333
      %s351 = sphi 0, %s351
      %s353 = sphi 0, %s351
      %s354 = sphi 0, %s353
      %s368 = sphi 0, %s354
      %s372 = sphi 0, %s372
      %s374 = sphi 0, %s372
      %s375 = sphi 0, %s374
      %s389 = sphi 0, %s375
      %s395 = sphi 0, %s397
      %s398 = sphi 0, %s395
      %s399 = sphi 0, %s398
      %s415 = sphi 0, %s399
    $region4: #{run.1} parent=1 // loop_header_branch
      %32 = sbr.rel (%p30) target = $region8
    $region5: #{run.1} parent=1 // loop_body
      %s34 = ssub.s32 %s29, 1
      %s35 = ssub.s32 %s29, 2
      %s36 = sadd.s32 %s29, 1
      %s37 = ssub.s32 %s29, %s36
      %p38 = scmp.eq.s32.totalorder %s37, 0
      %s40 = sadd.s32 %s39, 1
      %s41 = scalar_select %p38, %s39, %s40
      %p44 = pneg %p38
      %p45 = scmp.eq.s32.totalorder %s29, 1
      %p46 = por %p44, %p45
      %p47 = scmp.ne.s32.totalorder %s39, %s42
      %p48 = scmp.eq.s32.totalorder %s29, 0
      %p49 = por %p47, %p48
      %p50 = scmp.ne.s32.totalorder %s39, %s42
      %p51 = scmp.eq.s32.totalorder %s34, 1
      %p52 = por %p50, %p51
      %p53 = scmp.ne.s32.totalorder %s42, %s43
      %p54 = scmp.eq.s32.totalorder %s34, 0
      %p55 = por %p53, %p54
      %p56 = scmp.ne.s32.totalorder %s42, %s43
      %p57 = scmp.eq.s32.totalorder %s35, 1
      %p58 = por %p56, %p57
      %p60 = scmp.ne.s32.totalorder %s43, %s59
      %p61 = scmp.eq.s32.totalorder %s35, 0
      %p62 = por %p60, %p61
      %s63 = ssub.s32 %s29, %s36
      %p64 = scmp.eq.s32.totalorder %s63, 0
      %s66 = sadd.s32 %s65, 1
      %s67 = scalar_select %p64, %s65, %s66
      %p70 = pneg %p64
      %p71 = scmp.eq.s32.totalorder %s29, 1
      %p72 = por %p70, %p71
      %p73 = scmp.ne.s32.totalorder %s65, %s68
      %p74 = scmp.eq.s32.totalorder %s29, 0
      %p75 = por %p73, %p74
      %p76 = scmp.ne.s32.totalorder %s65, %s68
      %p77 = scmp.eq.s32.totalorder %s34, 1
      %p78 = por %p76, %p77
      %p79 = scmp.ne.s32.totalorder %s68, %s69
      %p80 = scmp.eq.s32.totalorder %s34, 0
      %p81 = por %p79, %p80
      %p82 = scmp.ne.s32.totalorder %s68, %s69
      %p83 = scmp.eq.s32.totalorder %s35, 1
      %p84 = por %p82, %p83
      %p86 = scmp.ne.s32.totalorder %s69, %s85
      %p87 = scmp.eq.s32.totalorder %s35, 0
      %p88 = por %p86, %p87
      %s89 = ssub.s32 %s29, %s36
      %p90 = scmp.eq.s32.totalorder %s89, 0
      %s92 = sadd.s32 %s91, 1
      %s93 = scalar_select %p90, %s91, %s92
      %p96 = pneg %p90
      %p97 = scmp.eq.s32.totalorder %s29, 1
      %p98 = por %p96, %p97
      %p99 = scmp.ne.s32.totalorder %s91, %s94
      %p100 = scmp.eq.s32.totalorder %s29, 0
      %p101 = por %p99, %p100
      %p102 = scmp.ne.s32.totalorder %s91, %s94
      %p103 = scmp.eq.s32.totalorder %s34, 1
      %p104 = por %p102, %p103
      %p105 = scmp.ne.s32.totalorder %s94, %s95
      %p106 = scmp.eq.s32.totalorder %s34, 0
      %p107 = por %p105, %p106
      %p108 = scmp.ne.s32.totalorder %s94, %s95
      %p109 = scmp.eq.s32.totalorder %s35, 1
      %p110 = por %p108, %p109
      %p112 = scmp.ne.s32.totalorder %s95, %s111
      %p113 = scmp.eq.s32.totalorder %s35, 0
      %p114 = por %p112, %p113
      %s115 = ssub.s32 %s29, %s36
      %p116 = scmp.eq.s32.totalorder %s115, 0
      %s118 = sadd.s32 %s117, 1
      %s119 = scalar_select %p116, %s117, %s118
      %p122 = pneg %p116
      %p123 = scmp.eq.s32.totalorder %s29, 1
      %p124 = por %p122, %p123
      %p125 = scmp.ne.s32.totalorder %s117, %s120
      %p126 = scmp.eq.s32.totalorder %s29, 0
      %p127 = por %p125, %p126
      %p128 = scmp.ne.s32.totalorder %s117, %s120
      %p129 = scmp.eq.s32.totalorder %s34, 1
      %p130 = por %p128, %p129
      %p131 = scmp.ne.s32.totalorder %s120, %s121
      %p132 = scmp.eq.s32.totalorder %s34, 0
      %p133 = por %p131, %p132
      %p134 = scmp.ne.s32.totalorder %s120, %s121
      %p135 = scmp.eq.s32.totalorder %s35, 1
      %p136 = por %p134, %p135
      %p138 = scmp.ne.s32.totalorder %s121, %s137
      %p139 = scmp.eq.s32.totalorder %s35, 0
      %p140 = por %p138, %p139
      %s142 = sadd.s32 %s141, 1
      %p145 = scmp.eq.s32.totalorder %s29, 1
      %p146 = scmp.ne.s32.totalorder %s141, %s143
      %p147 = scmp.eq.s32.totalorder %s29, 0
      %p148 = por %p146, %p147
      %p149 = scmp.ne.s32.totalorder %s141, %s143
      %p150 = scmp.eq.s32.totalorder %s34, 1
      %p151 = por %p149, %p150
      %p152 = scmp.ne.s32.totalorder %s143, %s144
      %p153 = scmp.eq.s32.totalorder %s34, 0
      %p154 = por %p152, %p153
      %p155 = scmp.ne.s32.totalorder %s143, %s144
      %p156 = scmp.eq.s32.totalorder %s35, 1
      %p157 = por %p155, %p156
      %p159 = scmp.ne.s32.totalorder %s144, %s158
      %p160 = scmp.eq.s32.totalorder %s35, 0
      %p161 = por %p159, %p160
      %s163 = sadd.s32 %s162, 1
      %p166 = scmp.eq.s32.totalorder %s29, 1
      %p167 = scmp.ne.s32.totalorder %s162, %s164
      %p168 = scmp.eq.s32.totalorder %s29, 0
      %p169 = por %p167, %p168
      %p170 = scmp.ne.s32.totalorder %s162, %s164
      %p171 = scmp.eq.s32.totalorder %s34, 1
      %p172 = por %p170, %p171
      %p173 = scmp.ne.s32.totalorder %s164, %s165
      %p174 = scmp.eq.s32.totalorder %s34, 0
      %p175 = por %p173, %p174
      %p176 = scmp.ne.s32.totalorder %s164, %s165
      %p177 = scmp.eq.s32.totalorder %s35, 1
      %p178 = por %p176, %p177
      %p180 = scmp.ne.s32.totalorder %s165, %s179
      %p181 = scmp.eq.s32.totalorder %s35, 0
      %p182 = por %p180, %p181
      %s184 = sadd.s32 %s183, 1
      %p187 = scmp.eq.s32.totalorder %s29, 1
      %p188 = scmp.ne.s32.totalorder %s183, %s185
      %p189 = scmp.eq.s32.totalorder %s29, 0
      %p190 = por %p188, %p189
      %p191 = scmp.ne.s32.totalorder %s183, %s185
      %p192 = scmp.eq.s32.totalorder %s34, 1
      %p193 = por %p191, %p192
      %p194 = scmp.ne.s32.totalorder %s185, %s186
      %p195 = scmp.eq.s32.totalorder %s34, 0
      %p196 = por %p194, %p195
      %p197 = scmp.ne.s32.totalorder %s185, %s186
      %p198 = scmp.eq.s32.totalorder %s35, 1
      %p199 = por %p197, %p198
      %p201 = scmp.ne.s32.totalorder %s186, %s200
      %p202 = scmp.eq.s32.totalorder %s35, 0
      %p203 = por %p201, %p202
      %s205 = sadd.s32 %s204, 1
      %p208 = scmp.eq.s32.totalorder %s29, 1
      %p209 = scmp.ne.s32.totalorder %s204, %s206
      %p210 = scmp.eq.s32.totalorder %s29, 0
      %p211 = por %p209, %p210
      %p212 = scmp.ne.s32.totalorder %s204, %s206
      %p213 = scmp.eq.s32.totalorder %s34, 1
      %p214 = por %p212, %p213
      %p215 = scmp.ne.s32.totalorder %s206, %s207
      %p216 = scmp.eq.s32.totalorder %s34, 0
      %p217 = por %p215, %p216
      %p218 = scmp.ne.s32.totalorder %s206, %s207
      %p219 = scmp.eq.s32.totalorder %s35, 1
      %p220 = por %p218, %p219
      %p222 = scmp.ne.s32.totalorder %s207, %s221
      %p223 = scmp.eq.s32.totalorder %s35, 0
      %p224 = por %p222, %p223
      %s226 = sadd.s32 %s225, 1
      %p229 = scmp.eq.s32.totalorder %s29, 1
      %p230 = scmp.ne.s32.totalorder %s225, %s227
      %p231 = scmp.eq.s32.totalorder %s29, 0
      %p232 = por %p230, %p231
      %p233 = scmp.ne.s32.totalorder %s225, %s227
      %p234 = scmp.eq.s32.totalorder %s34, 1
      %p235 = por %p233, %p234
      %p236 = scmp.ne.s32.totalorder %s227, %s228
      %p237 = scmp.eq.s32.totalorder %s34, 0
      %p238 = por %p236, %p237
      %p239 = scmp.ne.s32.totalorder %s227, %s228
      %p240 = scmp.eq.s32.totalorder %s35, 1
      %p241 = por %p239, %p240
      %p243 = scmp.ne.s32.totalorder %s228, %s242
      %p244 = scmp.eq.s32.totalorder %s35, 0
      %p245 = por %p243, %p244
      %s247 = sadd.s32 %s246, 1
      %p250 = scmp.eq.s32.totalorder %s29, 1
      %p251 = scmp.ne.s32.totalorder %s246, %s248
      %p252 = scmp.eq.s32.totalorder %s29, 0
      %p253 = por %p251, %p252
      %p254 = scmp.ne.s32.totalorder %s246, %s248
      %p255 = scmp.eq.s32.totalorder %s34, 1
      %p256 = por %p254, %p255
      %p257 = scmp.ne.s32.totalorder %s248, %s249
      %p258 = scmp.eq.s32.totalorder %s34, 0
      %p259 = por %p257, %p258
      %p260 = scmp.ne.s32.totalorder %s248, %s249
      %p261 = scmp.eq.s32.totalorder %s35, 1
      %p262 = por %p260, %p261
      %p264 = scmp.ne.s32.totalorder %s249, %s263
      %p265 = scmp.eq.s32.totalorder %s35, 0
      %p266 = por %p264, %p265
      %s268 = sadd.s32 %s267, 1
      %p271 = scmp.eq.s32.totalorder %s29, 1
      %p272 = scmp.ne.s32.totalorder %s267, %s269
      %p273 = scmp.eq.s32.totalorder %s29, 0
      %p274 = por %p272, %p273
      %p275 = scmp.ne.s32.totalorder %s267, %s269
      %p276 = scmp.eq.s32.totalorder %s34, 1
      %p277 = por %p275, %p276
      %p278 = scmp.ne.s32.totalorder %s269, %s270
      %p279 = scmp.eq.s32.totalorder %s34, 0
      %p280 = por %p278, %p279
      %p281 = scmp.ne.s32.totalorder %s269, %s270
      %p282 = scmp.eq.s32.totalorder %s35, 1
      %p283 = por %p281, %p282
      %p285 = scmp.ne.s32.totalorder %s270, %s284
      %p286 = scmp.eq.s32.totalorder %s35, 0
      %p287 = por %p285, %p286
      %s289 = sadd.s32 %s288, 1
      %p292 = scmp.eq.s32.totalorder %s29, 1
      %p293 = scmp.ne.s32.totalorder %s288, %s290
      %p294 = scmp.eq.s32.totalorder %s29, 0
      %p295 = por %p293, %p294
      %p296 = scmp.ne.s32.totalorder %s288, %s290
      %p297 = scmp.eq.s32.totalorder %s34, 1
      %p298 = por %p296, %p297
      %p299 = scmp.ne.s32.totalorder %s290, %s291
      %p300 = scmp.eq.s32.totalorder %s34, 0
      %p301 = por %p299, %p300
      %p302 = scmp.ne.s32.totalorder %s290, %s291
      %p303 = scmp.eq.s32.totalorder %s35, 1
      %p304 = por %p302, %p303
      %p306 = scmp.ne.s32.totalorder %s291, %s305
      %p307 = scmp.eq.s32.totalorder %s35, 0
      %p308 = por %p306, %p307
      %s310 = sadd.s32 %s309, 1
      %p313 = scmp.eq.s32.totalorder %s29, 1
      %p314 = scmp.ne.s32.totalorder %s309, %s311
      %p315 = scmp.eq.s32.totalorder %s29, 0
      %p316 = por %p314, %p315
      %p317 = scmp.ne.s32.totalorder %s309, %s311
      %p318 = scmp.eq.s32.totalorder %s34, 1
      %p319 = por %p317, %p318
      %p320 = scmp.ne.s32.totalorder %s311, %s312
      %p321 = scmp.eq.s32.totalorder %s34, 0
      %p322 = por %p320, %p321
      %p323 = scmp.ne.s32.totalorder %s311, %s312
      %p324 = scmp.eq.s32.totalorder %s35, 1
      %p325 = por %p323, %p324
      %p327 = scmp.ne.s32.totalorder %s312, %s326
      %p328 = scmp.eq.s32.totalorder %s35, 0
      %p329 = por %p327, %p328
      %s331 = sadd.s32 %s330, 1
      %p334 = scmp.eq.s32.totalorder %s29, 1
      %p335 = scmp.ne.s32.totalorder %s330, %s332
      %p336 = scmp.eq.s32.totalorder %s29, 0
      %p337 = por %p335, %p336
      %p338 = scmp.ne.s32.totalorder %s330, %s332
      %p339 = scmp.eq.s32.totalorder %s34, 1
      %p340 = por %p338, %p339
      %p341 = scmp.ne.s32.totalorder %s332, %s333
      %p342 = scmp.eq.s32.totalorder %s34, 0
      %p343 = por %p341, %p342
      %p344 = scmp.ne.s32.totalorder %s332, %s333
      %p345 = scmp.eq.s32.totalorder %s35, 1
      %p346 = por %p344, %p345
      %p348 = scmp.ne.s32.totalorder %s333, %s347
      %p349 = scmp.eq.s32.totalorder %s35, 0
      %p350 = por %p348, %p349
      %s352 = sadd.s32 %s351, 1
      %p355 = scmp.eq.s32.totalorder %s29, 1
      %p356 = scmp.ne.s32.totalorder %s351, %s353
      %p357 = scmp.eq.s32.totalorder %s29, 0
      %p358 = por %p356, %p357
      %p359 = scmp.ne.s32.totalorder %s351, %s353
      %p360 = scmp.eq.s32.totalorder %s34, 1
      %p361 = por %p359, %p360
      %p362 = scmp.ne.s32.totalorder %s353, %s354
      %p363 = scmp.eq.s32.totalorder %s34, 0
      %p364 = por %p362, %p363
      %p365 = scmp.ne.s32.totalorder %s353, %s354
      %p366 = scmp.eq.s32.totalorder %s35, 1
      %p367 = por %p365, %p366
      %p369 = scmp.ne.s32.totalorder %s354, %s368
      %p370 = scmp.eq.s32.totalorder %s35, 0
      %p371 = por %p369, %p370
      %s373 = sadd.s32 %s372, 1
      %p376 = scmp.eq.s32.totalorder %s29, 1
      %p377 = scmp.ne.s32.totalorder %s372, %s374
      %p378 = scmp.eq.s32.totalorder %s29, 0
      %p379 = por %p377, %p378
      %p380 = scmp.ne.s32.totalorder %s372, %s374
      %p381 = scmp.eq.s32.totalorder %s34, 1
      %p382 = por %p380, %p381
      %p383 = scmp.ne.s32.totalorder %s374, %s375
      %p384 = scmp.eq.s32.totalorder %s34, 0
      %p385 = por %p383, %p384
      %p386 = scmp.ne.s32.totalorder %s374, %s375
      %p387 = scmp.eq.s32.totalorder %s35, 1
      %p388 = por %p386, %p387
      %p390 = scmp.ne.s32.totalorder %s375, %s389
      %p391 = scmp.eq.s32.totalorder %s35, 0
      %p392 = por %p390, %p391
      %s393 = ssub.s32 %s29, %s36
      %p394 = scmp.eq.s32.totalorder %s393, 0
      %s396 = sadd.s32 %s395, 1
      %s397 = scalar_select %p394, %s395, %s396
      %p400 = pneg %p394
      %p401 = scmp.eq.s32.totalorder %s29, 1
      %p402 = por %p400, %p401
      %p403 = scmp.ne.s32.totalorder %s395, %s398
      %p404 = scmp.eq.s32.totalorder %s29, 0
      %p405 = por %p403, %p404
      %p406 = scmp.ne.s32.totalorder %s395, %s398
      %p407 = scmp.eq.s32.totalorder %s34, 1
      %p408 = por %p406, %p407
      %p409 = scmp.ne.s32.totalorder %s398, %s399
      %p410 = scmp.eq.s32.totalorder %s34, 0
      %p411 = por %p409, %p410
      %p412 = scmp.ne.s32.totalorder %s398, %s399
      %p413 = scmp.eq.s32.totalorder %s35, 1
      %p414 = por %p412, %p413
      %p416 = scmp.ne.s32.totalorder %s399, %s415
      %p417 = scmp.eq.s32.totalorder %s35, 0
      %p418 = por %p416, %p417
      %p419 = scmp.le.s32.totalorder 1, %s29
      %p420 = scmp.lt.s32.totalorder %s29, 3
      %p421 = pnand %p419, %p420
      %p422 = pneg %p421
      // Predicated region
      $region9: #{run.1} parent=5 // pred_check
        _
      $region10: #{run.1} parent=5 // pred_check_branch
        %424 = sbr.rel (%p421) target = $region12
      $region11: #{run.1} parent=5 // pred_region
        %s425 = ssub.s32 %s29, 1
        // Predicated region
        $region13: #{run.1} parent=11 // pred_check
          %p426 = pneg %p154
        $region14: #{run.1} parent=11 // pred_check_branch
          %428 = sbr.rel (%p426) target = $region16
        $region15: #{run.1} parent=11 // pred_region
          _
        $region16: #{run.1} parent=11 // pred_fallthru
          _
        // Predicated region
        $region17: #{run.1} parent=11 // pred_check
          %p429 = pneg %p175
        $region18: #{run.1} parent=11 // pred_check_branch
          %431 = sbr.rel (%p429) target = $region20
        $region19: #{run.1} parent=11 // pred_region
          _
        $region20: #{run.1} parent=11 // pred_fallthru
          _
        // Predicated region
        $region21: #{run.1} parent=11 // pred_check
          %p432 = pneg %p196
        $region22: #{run.1} parent=11 // pred_check_branch
          %434 = sbr.rel (%p432) target = $region24
        $region23: #{run.1} parent=11 // pred_region
          _
        $region24: #{run.1} parent=11 // pred_fallthru
          _
        // Predicated region
        $region25: #{run.1} parent=11 // pred_check
          %p435 = pneg %p217
        $region26: #{run.1} parent=11 // pred_check_branch
          %437 = sbr.rel (%p435) target = $region28
        $region27: #{run.1} parent=11 // pred_region
          _
        $region28: #{run.1} parent=11 // pred_fallthru
          _
        // Predicated region
        $region29: #{run.1} parent=11 // pred_check
          %p438 = pneg %p238
        $region30: #{run.1} parent=11 // pred_check_branch
          %440 = sbr.rel (%p438) target = $region32
        $region31: #{run.1} parent=11 // pred_region
          %s442 = ssub.s32 2048, 2048
          %443 = vsyncadd [#allocation3], %s442
          %s444 = sshll.u32 [#allocation2], 4
          %s445 = int_to_ptr.vmem [resolvable:$true] %s444
          %450 = dma.hbm_to_vmem [thread:$0]  %s8, 2048, %s445, [#allocation3], 128, 128, 8
        $region32: #{run.1} parent=11 // pred_fallthru
          _
        // Predicated region
        $region33: #{run.1} parent=11 // pred_check
          %p451 = pneg %p259
        $region34: #{run.1} parent=11 // pred_check_branch
          %453 = sbr.rel (%p451) target = $region36
        $region35: #{run.1} parent=11 // pred_region
          %s455 = ssub.s32 2048, 2048
          %456 = vsyncadd [#allocation6], %s455
          %s457 = sshll.u32 [#allocation5], 4
          %s458 = int_to_ptr.vmem [resolvable:$true] %s457
          %463 = dma.hbm_to_vmem [thread:$0]  %s9, 2048, %s458, [#allocation6], 128, 128, 8
        $region36: #{run.1} parent=11 // pred_fallthru
          _
        // Predicated region
        $region37: #{run.1} parent=11 // pred_check
          %p464 = pneg %p280
        $region38: #{run.1} parent=11 // pred_check_branch
          %466 = sbr.rel (%p464) target = $region40
        $region39: #{run.1} parent=11 // pred_region
          %s468 = ssub.s32 2048, 2048
          %469 = vsyncadd [#allocation6], %s468
          %s470 = sshll.u32 [#allocation7], 4
          %s471 = int_to_ptr.vmem [resolvable:$true] %s470
          %476 = dma.hbm_to_vmem [thread:$0]  %s10, 2048, %s471, [#allocation6], 128, 128, 8
        $region40: #{run.1} parent=11 // pred_fallthru
          _
        // Predicated region
        $region41: #{run.1} parent=11 // pred_check
          %p477 = pneg %p301
        $region42: #{run.1} parent=11 // pred_check_branch
          %479 = sbr.rel (%p477) target = $region44
        $region43: #{run.1} parent=11 // pred_region
          %s481 = ssub.s32 2048, 2048
          %482 = vsyncadd [#allocation9], %s481
          %s483 = sshll.u32 [#allocation8], 4
          %s484 = int_to_ptr.vmem [resolvable:$true] %s483
          %489 = dma.hbm_to_vmem [thread:$0]  %s11, 2048, %s484, [#allocation9], 128, 128, 8
        $region44: #{run.1} parent=11 // pred_fallthru
          _
        // Predicated region
        $region45: #{run.1} parent=11 // pred_check
          %p490 = pneg %p322
        $region46: #{run.1} parent=11 // pred_check_branch
          %492 = sbr.rel (%p490) target = $region48
        $region47: #{run.1} parent=11 // pred_region
          %s494 = ssub.s32 2048, 2048
          %495 = vsyncadd [#allocation9], %s494
          %s496 = sshll.u32 [#allocation10], 4
          %s497 = int_to_ptr.vmem [resolvable:$true] %s496
          %502 = dma.hbm_to_vmem [thread:$0]  %s12, 2048, %s497, [#allocation9], 128, 128, 8
        $region48: #{run.1} parent=11 // pred_fallthru
          _
        // Predicated region
        $region49: #{run.1} parent=11 // pred_check
          %p503 = pneg %p343
        $region50: #{run.1} parent=11 // pred_check_branch
          %505 = sbr.rel (%p503) target = $region52
        $region51: #{run.1} parent=11 // pred_region
          %s507 = ssub.s32 2048, 2048
          %508 = vsyncadd [#allocation12], %s507
          %s509 = sshll.u32 [#allocation11], 4
          %s510 = int_to_ptr.vmem [resolvable:$true] %s509
          %515 = dma.hbm_to_vmem [thread:$0]  %s13, 2048, %s510, [#allocation12], 128, 128, 8
        $region52: #{run.1} parent=11 // pred_fallthru
          _
        // Predicated region
        $region53: #{run.1} parent=11 // pred_check
          %p516 = pneg %p364
        $region54: #{run.1} parent=11 // pred_check_branch
          %518 = sbr.rel (%p516) target = $region56
        $region55: #{run.1} parent=11 // pred_region
          %s520 = ssub.s32 2048, 2048
          %521 = vsyncadd [#allocation12], %s520
          %s522 = sshll.u32 [#allocation13], 4
          %s523 = int_to_ptr.vmem [resolvable:$true] %s522
          %528 = dma.hbm_to_vmem [thread:$0]  %s14, 2048, %s523, [#allocation12], 128, 128, 8
        $region56: #{run.1} parent=11 // pred_fallthru
          _
        // Predicated region
        $region57: #{run.1} parent=11 // pred_check
          %p529 = pneg %p385
        $region58: #{run.1} parent=11 // pred_check_branch
          %531 = sbr.rel (%p529) target = $region60
        $region59: #{run.1} parent=11 // pred_region
          _
        $region60: #{run.1} parent=11 // pred_fallthru
          _
      $region12: #{run.1} parent=5 // pred_fallthru
        _
      %p532 = scmp.lt.s32.totalorder %s29, 2
      // Predicated region
      $region61: #{run.1} parent=5 // pred_check
        %p533 = pneg %p532
      $region62: #{run.1} parent=5 // pred_check_branch
        %535 = sbr.rel (%p533) target = $region64
      $region63: #{run.1} parent=5 // pred_region
        // Predicated region
        $region65: #{run.1} parent=63 // pred_check
          %p536 = pneg %p49
        $region66: #{run.1} parent=63 // pred_check_branch
          %538 = sbr.rel (%p536) target = $region68
        $region67: #{run.1} parent=63 // pred_region
          %p539 = scmp.lt.s32.totalorder %s29, 1
          %s540 = scalar_select %p539, %s29, 1
          %s541 = smul.addr %s540, 8
          %s542 = scalar_lea.vmem %s0, %s541
        $region68: #{run.1} parent=63 // pred_fallthru
          _
        // Predicated region
        $region69: #{run.1} parent=63 // pred_check
          %p543 = pneg %p75
        $region70: #{run.1} parent=63 // pred_check_branch
          %545 = sbr.rel (%p543) target = $region72
        $region71: #{run.1} parent=63 // pred_region
          %p546 = scmp.lt.s32.totalorder %s29, 1
          %s547 = scalar_select %p546, %s29, 1
          %s548 = scalar_lea.vmem %s1, %s547
        $region72: #{run.1} parent=63 // pred_fallthru
          _
        // Predicated region
        $region73: #{run.1} parent=63 // pred_check
          %p549 = pneg %p101
        $region74: #{run.1} parent=63 // pred_check_branch
          %551 = sbr.rel (%p549) target = $region76
        $region75: #{run.1} parent=63 // pred_region
          %p552 = scmp.lt.s32.totalorder %s29, 1
          %s553 = scalar_select %p552, %s29, 1
          %s554 = scalar_lea.vmem %s2, %s553
        $region76: #{run.1} parent=63 // pred_fallthru
          _
        // Predicated region
        $region77: #{run.1} parent=63 // pred_check
          %p555 = pneg %p127
        $region78: #{run.1} parent=63 // pred_check_branch
          %557 = sbr.rel (%p555) target = $region80
        $region79: #{run.1} parent=63 // pred_region
          %p558 = scmp.lt.s32.totalorder %s29, 1
          %s559 = scalar_select %p558, %s29, 1
          %s560 = smul.addr %s559, 8
          %s561 = scalar_lea.vmem %s3, %s560
        $region80: #{run.1} parent=63 // pred_fallthru
          _
      $region64: #{run.1} parent=5 // pred_fallthru
        _
      %p562 = scmp.le.s32.totalorder 1, %s29
      %p563 = scmp.lt.s32.totalorder %s29, 3
      %p564 = pnand %p562, %p563
      %p565 = pneg %p564
      // Predicated region
      $region81: #{run.1} parent=5 // pred_check
        _
      $region82: #{run.1} parent=5 // pred_check_branch
        %567 = sbr.rel (%p564) target = $region84
      $region83: #{run.1} parent=5 // pred_region
        %s568 = ssub.s32 %s29, 1
        // Predicated region
        $region85: #{run.1} parent=83 // pred_check
          %p569 = pneg %p238
        $region86: #{run.1} parent=83 // pred_check_branch
          %571 = sbr.rel (%p569) target = $region88
        $region87: #{run.1} parent=83 // pred_region
          %572 = dma.done [#allocation3], 2048
        $region88: #{run.1} parent=83 // pred_fallthru
          _
        // Predicated region
        $region89: #{run.1} parent=83 // pred_check
          %p573 = pneg %p259
        $region90: #{run.1} parent=83 // pred_check_branch
          %575 = sbr.rel (%p573) target = $region92
        $region91: #{run.1} parent=83 // pred_region
          %576 = dma.done [#allocation6], 2048
        $region92: #{run.1} parent=83 // pred_fallthru
          _
        // Predicated region
        $region93: #{run.1} parent=83 // pred_check
          %p577 = pneg %p280
        $region94: #{run.1} parent=83 // pred_check_branch
          %579 = sbr.rel (%p577) target = $region96
        $region95: #{run.1} parent=83 // pred_region
          %580 = dma.done [#allocation6], 2048
        $region96: #{run.1} parent=83 // pred_fallthru
          _
        // Predicated region
        $region97: #{run.1} parent=83 // pred_check
          %p581 = pneg %p301
        $region98: #{run.1} parent=83 // pred_check_branch
          %583 = sbr.rel (%p581) target = $region100
        $region99: #{run.1} parent=83 // pred_region
          %584 = dma.done [#allocation9], 2048
        $region100: #{run.1} parent=83 // pred_fallthru
          _
        // Predicated region
        $region101: #{run.1} parent=83 // pred_check
          %p585 = pneg %p322
        $region102: #{run.1} parent=83 // pred_check_branch
          %587 = sbr.rel (%p585) target = $region104
        $region103: #{run.1} parent=83 // pred_region
          %588 = dma.done [#allocation9], 2048
        $region104: #{run.1} parent=83 // pred_fallthru
          _
        // Predicated region
        $region105: #{run.1} parent=83 // pred_check
          %p589 = pneg %p343
        $region106: #{run.1} parent=83 // pred_check_branch
          %591 = sbr.rel (%p589) target = $region108
        $region107: #{run.1} parent=83 // pred_region
          %592 = dma.done [#allocation12], 2048
        $region108: #{run.1} parent=83 // pred_fallthru
          _
        // Predicated region
        $region109: #{run.1} parent=83 // pred_check
          %p593 = pneg %p364
        $region110: #{run.1} parent=83 // pred_check_branch
          %595 = sbr.rel (%p593) target = $region112
        $region111: #{run.1} parent=83 // pred_region
          %596 = dma.done [#allocation12], 2048
        $region112: #{run.1} parent=83 // pred_fallthru
          _
        %p597 = scmp.lt.s32.totalorder %s34, 1
        %s598 = scalar_select %p597, %s34, 1
        %s599 = smul.addr %s598, 8
        %s600 = scalar_lea.vmem %s0, %s599
        %p601 = pneg %p55
        %p602 = pneg %p52
        %p603 = scmp.lt.s32.totalorder %s34, 1
        %s604 = scalar_select %p603, %s34, 1
        %s605 = scalar_lea.vmem %s1, %s604
        %p606 = pneg %p81
        %p607 = pneg %p78
        %p608 = scmp.lt.s32.totalorder %s34, 1
        %s609 = scalar_select %p608, %s34, 1
        %s610 = scalar_lea.vmem %s2, %s609
        %p611 = pneg %p107
        %p612 = pneg %p104
        %p613 = scmp.lt.s32.totalorder %s34, 1
        %s614 = scalar_select %p613, %s34, 1
        %s615 = smul.addr %s614, 8
        %s616 = scalar_lea.vmem %s3, %s615
        %p617 = pneg %p133
        %p618 = pneg %p130
        %p619 = pneg %p154
        %p620 = pneg %p151
        %p621 = pneg %p175
        %p622 = pneg %p172
        %p623 = pneg %p196
        %p624 = pneg %p193
        %p625 = pneg %p217
        %p626 = pneg %p214
        %p627 = pneg %p238
        %p628 = pneg %p235
        %p629 = pneg %p259
        %p630 = pneg %p256
        %p631 = pneg %p280
        %p632 = pneg %p277
        %p633 = pneg %p301
        %p634 = pneg %p298
        %p635 = pneg %p322
        %p636 = pneg %p319
        %p637 = pneg %p343
        %p638 = pneg %p340
        %p639 = pneg %p364
        %p640 = pneg %p361
        %p641 = pneg %p385
        %p642 = pneg %p382
        %p643 = pneg %p411
        %p644 = pneg %p408
        %s645 = sand.u32 %s398, 1
        %s646 = scalar_lea.sflag [#allocation4], %s645
        %s647 = sand.u32 %s398, 1
        %s648 = scalar_lea.vmem [#allocation14], %s647
        %p649 = scmp.lt.s32.totalorder %s34, 1
        %s650 = scalar_select %p649, %s34, 1
        %s651 = smul.addr %s650, 8
        %s652 = scalar_lea.vmem %s0, %s651
        %p653 = scmp.lt.s32.totalorder %s34, 1
        %s654 = scalar_select %p653, %s34, 1
        %s655 = scalar_lea.vmem %s1, %s654
        %p656 = scmp.lt.s32.totalorder %s34, 1
        %s657 = scalar_select %p656, %s34, 1
        %s658 = scalar_lea.vmem %s2, %s657
        %p659 = scmp.lt.s32.totalorder %s34, 1
        %s660 = scalar_select %p659, %s34, 1
        %s661 = smul.addr %s660, 8
        %s662 = scalar_lea.vmem %s3, %s661
        %v663 = vld [vmem:[%s652] sm:$0xff]
        %v664 = vld [vmem:[%s5] sm:$0xff]
        %v665 = vld [vmem:[%s5 + $0x8] sm:$0xff]
        %v666 = vld [vmem:[%s5 + $0x10] sm:$0xff]
        %v667 = vld [vmem:[%s5 + $0x18] sm:$0xff]
        %v668 = vld [vmem:[%s5 + $0x20] sm:$0xff]
        %v669 = vld [vmem:[%s5 + $0x28] sm:$0xff]
        %v670 = vld [vmem:[%s5 + $0x30] sm:$0xff]
        %v671 = vld [vmem:[%s5 + $0x38] sm:$0xff]
        %v672 = vld [vmem:[%s5 + $0x40] sm:$0xff]
        %v673 = vld [vmem:[%s5 + $0x48] sm:$0xff]
        %v674 = vld [vmem:[%s5 + $0x50] sm:$0xff]
        %v675 = vld [vmem:[%s5 + $0x58] sm:$0xff]
        %v676 = vld [vmem:[%s5 + $0x60] sm:$0xff]
        %v677 = vld [vmem:[%s5 + $0x68] sm:$0xff]
        %v678 = vld [vmem:[%s5 + $0x70] sm:$0xff]
        %v679 = vld [vmem:[%s5 + $0x78] sm:$0xff]
        %v680 = vld [vmem:[%s6] sm:$0x1]
        %v682 = vlaneseq
        %v683 = vshrl.u32 %v682, 7
        %v684 = vsub.s32 0, %v683
        %v685 = vrot.slane %v680, %v684
        %687 = vmatprep.subr.mxu0 0.0
        %688 = vmatpush1.msra.mxu0 %v679
        %689 = vmatprep.subr.mxu0 0.0
        %690 = vmatpush1.msra.mxu0 %v678
        %691 = vmatprep.subr.mxu0 0.0
        %692 = vmatpush1.msra.mxu0 %v677
        %693 = vmatprep.subr.mxu0 0.0
        %694 = vmatpush1.msra.mxu0 %v676
        %695 = vmatprep.subr.mxu0 0.0
        %696 = vmatpush1.msra.mxu0 %v675
        %697 = vmatprep.subr.mxu0 0.0
        %698 = vmatpush1.msra.mxu0 %v674
        %699 = vmatprep.subr.mxu0 0.0
        %700 = vmatpush1.msra.mxu0 %v673
        %701 = vmatprep.subr.mxu0 0.0
        %702 = vmatpush1.msra.mxu0 %v672
        %703 = vmatprep.subr.mxu0 0.0
        %704 = vmatpush1.msra.mxu0 %v671
        %705 = vmatprep.subr.mxu0 0.0
        %706 = vmatpush1.msra.mxu0 %v670
        %707 = vmatprep.subr.mxu0 0.0
        %708 = vmatpush1.msra.mxu0 %v669
        %709 = vmatprep.subr.mxu0 0.0
        %710 = vmatpush1.msra.mxu0 %v668
        %711 = vmatprep.subr.mxu0 0.0
        %712 = vmatpush1.msra.mxu0 %v667
        %713 = vmatprep.subr.mxu0 0.0
        %714 = vmatpush1.msra.mxu0 %v666
        %715 = vmatprep.subr.mxu0 0.0
        %716 = vmatpush1.msra.mxu0 %v665
        %717 = vmatprep.subr.mxu0 0.0
        %718 = vmatpush1.msra.mxu0 %v664
        %719 = vmatprep.subr.mxu0 0.0
        %720 = vmatpush2.msra.mxu0 0.0
        %721 = vmatprep.subr.mxu0 0.0
        %722 = vmatpush2.msra.mxu0 0.0
        %723 = vmatprep.subr.mxu0 0.0
        %724 = vmatpush2.msra.mxu0 0.0
        %725 = vmatprep.subr.mxu0 0.0
        %726 = vmatpush2.msra.mxu0 0.0
        %727 = vmatprep.subr.mxu0 0.0
        %728 = vmatpush2.msra.mxu0 0.0
        %729 = vmatprep.subr.mxu0 0.0
        %730 = vmatpush2.msra.mxu0 0.0
        %731 = vmatprep.subr.mxu0 0.0
        %732 = vmatpush2.msra.mxu0 0.0
        %733 = vmatprep.subr.mxu0 0.0
        %734 = vmatpush2.msra.mxu0 0.0
        %735 = vmatprep.subr.mxu0 0.0
        %736 = vmatpush2.msra.mxu0 0.0
        %737 = vmatprep.subr.mxu0 0.0
        %738 = vmatpush2.msra.mxu0 0.0
        %739 = vmatprep.subr.mxu0 0.0
        %740 = vmatpush2.msra.mxu0 0.0
        %741 = vmatprep.subr.mxu0 0.0
        %742 = vmatpush2.msra.mxu0 0.0
        %743 = vmatprep.subr.mxu0 0.0
        %744 = vmatpush2.msra.mxu0 0.0
        %745 = vmatprep.subr.mxu0 0.0
        %746 = vmatpush2.msra.mxu0 0.0
        %747 = vmatprep.subr.mxu0 0.0
        %748 = vmatpush2.msra.mxu0 0.0
        %749 = vmatprep.subr.mxu0 0.0
        %750 = vmatpush2.msra.mxu0 0.0
        %751 = vmatprep.mubr.f32.mxu0 0.0
        %752 = vmatmul.mubr.f32.gmra.mxu0 %v663
        %v753 = vpop.f32.mrf.mxu0
        %v754 = vadd.f32 %v685, %v753
        %v755 = vpop.f32.mrf.mxu0
        %756 = vdwg.mxu0
        %v757 = vmax.f32 %v754, 0.0
        %v758 = vld [vmem:[#allocation8] sm:$0xff]
        %v759 = vld [vmem:[#allocation8 + $0x8] sm:$0xff]
        %v760 = vld [vmem:[#allocation8 + $0x10] sm:$0xff]
        %v761 = vld [vmem:[#allocation8 + $0x18] sm:$0xff]
        %v762 = vld [vmem:[#allocation8 + $0x20] sm:$0xff]
        %v763 = vld [vmem:[#allocation8 + $0x28] sm:$0xff]
        %v764 = vld [vmem:[#allocation8 + $0x30] sm:$0xff]
        %v765 = vld [vmem:[#allocation8 + $0x38] sm:$0xff]
        %v766 = vld [vmem:[#allocation8 + $0x40] sm:$0xff]
        %v767 = vld [vmem:[#allocation8 + $0x48] sm:$0xff]
        %v768 = vld [vmem:[#allocation8 + $0x50] sm:$0xff]
        %v769 = vld [vmem:[#allocation8 + $0x58] sm:$0xff]
        %v770 = vld [vmem:[#allocation8 + $0x60] sm:$0xff]
        %v771 = vld [vmem:[#allocation8 + $0x68] sm:$0xff]
        %v772 = vld [vmem:[#allocation8 + $0x70] sm:$0xff]
        %v773 = vld [vmem:[#allocation8 + $0x78] sm:$0xff]
        %774 = vmatprep.subr.mxu0 0.0
        %775 = vmatpush1.msra.mxu0 %v773
        %776 = vmatprep.subr.mxu0 0.0
        %777 = vmatpush1.msra.mxu0 %v772
        %778 = vmatprep.subr.mxu0 0.0
        %779 = vmatpush1.msra.mxu0 %v771
        %780 = vmatprep.subr.mxu0 0.0
        %781 = vmatpush1.msra.mxu0 %v770
        %782 = vmatprep.subr.mxu0 0.0
        %783 = vmatpush1.msra.mxu0 %v769
        %784 = vmatprep.subr.mxu0 0.0
        %785 = vmatpush1.msra.mxu0 %v768
        %786 = vmatprep.subr.mxu0 0.0
        %787 = vmatpush1.msra.mxu0 %v767
        %788 = vmatprep.subr.mxu0 0.0
        %789 = vmatpush1.msra.mxu0 %v766
        %790 = vmatprep.subr.mxu0 0.0
        %791 = vmatpush1.msra.mxu0 %v765
        %792 = vmatprep.subr.mxu0 0.0
        %793 = vmatpush1.msra.mxu0 %v764
        %794 = vmatprep.subr.mxu0 0.0
        %795 = vmatpush1.msra.mxu0 %v763
        %796 = vmatprep.subr.mxu0 0.0
        %797 = vmatpush1.msra.mxu0 %v762
        %798 = vmatprep.subr.mxu0 0.0
        %799 = vmatpush1.msra.mxu0 %v761
        %800 = vmatprep.subr.mxu0 0.0
        %801 = vmatpush1.msra.mxu0 %v760
        %802 = vmatprep.subr.mxu0 0.0
        %803 = vmatpush1.msra.mxu0 %v759
        %804 = vmatprep.subr.mxu0 0.0
        %805 = vmatpush1.msra.mxu0 %v758
        %806 = vmatprep.subr.mxu0 0.0
        %807 = vmatpush2.msra.mxu0 0.0
        %808 = vmatprep.subr.mxu0 0.0
        %809 = vmatpush2.msra.mxu0 0.0
        %810 = vmatprep.subr.mxu0 0.0
        %811 = vmatpush2.msra.mxu0 0.0
        %812 = vmatprep.subr.mxu0 0.0
        %813 = vmatpush2.msra.mxu0 0.0
        %814 = vmatprep.subr.mxu0 0.0
        %815 = vmatpush2.msra.mxu0 0.0
        %816 = vmatprep.subr.mxu0 0.0
        %817 = vmatpush2.msra.mxu0 0.0
        %818 = vmatprep.subr.mxu0 0.0
        %819 = vmatpush2.msra.mxu0 0.0
        %820 = vmatprep.subr.mxu0 0.0
        %821 = vmatpush2.msra.mxu0 0.0
        %822 = vmatprep.subr.mxu0 0.0
        %823 = vmatpush2.msra.mxu0 0.0
        %824 = vmatprep.subr.mxu0 0.0
        %825 = vmatpush2.msra.mxu0 0.0
        %826 = vmatprep.subr.mxu0 0.0
        %827 = vmatpush2.msra.mxu0 0.0
        %828 = vmatprep.subr.mxu0 0.0
        %829 = vmatpush2.msra.mxu0 0.0
        %830 = vmatprep.subr.mxu0 0.0
        %831 = vmatpush2.msra.mxu0 0.0
        %832 = vmatprep.subr.mxu0 0.0
        %833 = vmatpush2.msra.mxu0 0.0
        %834 = vmatprep.subr.mxu0 0.0
        %835 = vmatpush2.msra.mxu0 0.0
        %836 = vmatprep.subr.mxu0 0.0
        %837 = vmatpush2.msra.mxu0 0.0
        %838 = vmatprep.mubr.f32.mxu0 0.0
        %839 = vmatmul.mubr.f32.gmra.mxu0 %v757
        %v840 = vpop.f32.mrf.mxu0
        %v841 = vadd.f32 0.0, %v840
        %v842 = vpop.f32.mrf.mxu0
        %843 = vdwg.mxu0
        %v844 = vld [vmem:[#allocation10] sm:$0xff]
        %v845 = vld [vmem:[#allocation10 + $0x8] sm:$0xff]
        %v846 = vld [vmem:[#allocation10 + $0x10] sm:$0xff]
        %v847 = vld [vmem:[#allocation10 + $0x18] sm:$0xff]
        %v848 = vld [vmem:[#allocation10 + $0x20] sm:$0xff]
        %v849 = vld [vmem:[#allocation10 + $0x28] sm:$0xff]
        %v850 = vld [vmem:[#allocation10 + $0x30] sm:$0xff]
        %v851 = vld [vmem:[#allocation10 + $0x38] sm:$0xff]
        %v852 = vld [vmem:[#allocation10 + $0x40] sm:$0xff]
        %v853 = vld [vmem:[#allocation10 + $0x48] sm:$0xff]
        %v854 = vld [vmem:[#allocation10 + $0x50] sm:$0xff]
        %v855 = vld [vmem:[#allocation10 + $0x58] sm:$0xff]
        %v856 = vld [vmem:[#allocation10 + $0x60] sm:$0xff]
        %v857 = vld [vmem:[#allocation10 + $0x68] sm:$0xff]
        %v858 = vld [vmem:[#allocation10 + $0x70] sm:$0xff]
        %v859 = vld [vmem:[#allocation10 + $0x78] sm:$0xff]
        %860 = vmatprep.subr.mxu0 0.0
        %861 = vmatpush1.msra.mxu0 %v859
        %862 = vmatprep.subr.mxu0 0.0
        %863 = vmatpush1.msra.mxu0 %v858
        %864 = vmatprep.subr.mxu0 0.0
        %865 = vmatpush1.msra.mxu0 %v857
        %866 = vmatprep.subr.mxu0 0.0
        %867 = vmatpush1.msra.mxu0 %v856
        %868 = vmatprep.subr.mxu0 0.0
        %869 = vmatpush1.msra.mxu0 %v855
        %870 = vmatprep.subr.mxu0 0.0
        %871 = vmatpush1.msra.mxu0 %v854
        %872 = vmatprep.subr.mxu0 0.0
        %873 = vmatpush1.msra.mxu0 %v853
        %874 = vmatprep.subr.mxu0 0.0
        %875 = vmatpush1.msra.mxu0 %v852
        %876 = vmatprep.subr.mxu0 0.0
        %877 = vmatpush1.msra.mxu0 %v851
        %878 = vmatprep.subr.mxu0 0.0
        %879 = vmatpush1.msra.mxu0 %v850
        %880 = vmatprep.subr.mxu0 0.0
        %881 = vmatpush1.msra.mxu0 %v849
        %882 = vmatprep.subr.mxu0 0.0
        %883 = vmatpush1.msra.mxu0 %v848
        %884 = vmatprep.subr.mxu0 0.0
        %885 = vmatpush1.msra.mxu0 %v847
        %886 = vmatprep.subr.mxu0 0.0
        %887 = vmatpush1.msra.mxu0 %v846
        %888 = vmatprep.subr.mxu0 0.0
        %889 = vmatpush1.msra.mxu0 %v845
        %890 = vmatprep.subr.mxu0 0.0
        %891 = vmatpush1.msra.mxu0 %v844
        %892 = vmatprep.subr.mxu0 0.0
        %893 = vmatpush2.msra.mxu0 0.0
        %894 = vmatprep.subr.mxu0 0.0
        %895 = vmatpush2.msra.mxu0 0.0
        %896 = vmatprep.subr.mxu0 0.0
        %897 = vmatpush2.msra.mxu0 0.0
        %898 = vmatprep.subr.mxu0 0.0
        %899 = vmatpush2.msra.mxu0 0.0
        %900 = vmatprep.subr.mxu0 0.0
        %901 = vmatpush2.msra.mxu0 0.0
        %902 = vmatprep.subr.mxu0 0.0
        %903 = vmatpush2.msra.mxu0 0.0
        %904 = vmatprep.subr.mxu0 0.0
        %905 = vmatpush2.msra.mxu0 0.0
        %906 = vmatprep.subr.mxu0 0.0
        %907 = vmatpush2.msra.mxu0 0.0
        %908 = vmatprep.subr.mxu0 0.0
        %909 = vmatpush2.msra.mxu0 0.0
        %910 = vmatprep.subr.mxu0 0.0
        %911 = vmatpush2.msra.mxu0 0.0
        %912 = vmatprep.subr.mxu0 0.0
        %913 = vmatpush2.msra.mxu0 0.0
        %914 = vmatprep.subr.mxu0 0.0
        %915 = vmatpush2.msra.mxu0 0.0
        %916 = vmatprep.subr.mxu0 0.0
        %917 = vmatpush2.msra.mxu0 0.0
        %918 = vmatprep.subr.mxu0 0.0
        %919 = vmatpush2.msra.mxu0 0.0
        %920 = vmatprep.subr.mxu0 0.0
        %921 = vmatpush2.msra.mxu0 0.0
        %922 = vmatprep.subr.mxu0 0.0
        %923 = vmatpush2.msra.mxu0 0.0
        %924 = vmatprep.mubr.f32.mxu0 0.0
        %925 = vmatmul.mubr.f32.gmra.mxu0 %v757
        %v926 = vpop.f32.mrf.mxu0
        %v927 = vadd.f32 0.0, %v926
        %v928 = vpop.f32.mrf.mxu0
        %929 = vdwg.mxu0
        %v930 = vld [vmem:[%s655] sm:$0x1]
        %v931 = vld [vmem:[%s658] sm:$0x1]
        %v932 = vld [vmem:[%s662] sm:$0xff]
        %v933 = vlaneseq
        %v934 = vand.u32 %v933, 127
        %v935 = vcvt.s32.f32 %v934
        %936 = vset.pattern.permute.xlu0 0
        %937 = vperm.xlu0 %936, %v932
        %v938 = vpop.permute.xlu0 %937
        %vm939 = vcmp.eq.s32.totalorder %v934, %v938
        %v940 = vsel %vm939, 1, 0
        %v941 = vcvt.s32.f32 %v940
        %v942 = vlaneseq
        %v943 = vshrl.u32 %v942, 7
        %v944 = vld [vmem:[%s4 + $0x1] sm:$0x1]
        %vm945 = vcmp.eq.s32.totalorder %v934, 0
        %v946 = vsel %vm945, 1.0, 0.0
        %v947 = vld [vmem:[%s7] sm:$0xff]
        %v948 = vld [vmem:[%s7 + $0x8] sm:$0xff]
        %v949 = vld [vmem:[%s7 + $0x10] sm:$0xff]
        %v950 = vld [vmem:[%s7 + $0x18] sm:$0xff]
        %v951 = vld [vmem:[%s7 + $0x20] sm:$0xff]
        %v952 = vld [vmem:[%s7 + $0x28] sm:$0xff]
        %v953 = vld [vmem:[%s7 + $0x30] sm:$0xff]
        %v954 = vld [vmem:[%s7 + $0x38] sm:$0xff]
        %v955 = vld [vmem:[%s7 + $0x40] sm:$0xff]
        %v956 = vld [vmem:[%s7 + $0x48] sm:$0xff]
        %v957 = vld [vmem:[%s7 + $0x50] sm:$0xff]
        %v958 = vld [vmem:[%s7 + $0x58] sm:$0xff]
        %v959 = vld [vmem:[%s7 + $0x60] sm:$0xff]
        %v960 = vld [vmem:[%s7 + $0x68] sm:$0xff]
        %v961 = vld [vmem:[%s7 + $0x70] sm:$0xff]
        %v962 = vld [vmem:[%s7 + $0x78] sm:$0xff]
        %963 = vmatprep.subr.mxu0 0.0
        %964 = vmatpush1.msra.mxu0 %v962
        %965 = vmatprep.subr.mxu0 0.0
        %966 = vmatpush1.msra.mxu0 %v961
        %967 = vmatprep.subr.mxu0 0.0
        %968 = vmatpush1.msra.mxu0 %v960
        %969 = vmatprep.subr.mxu0 0.0
        %970 = vmatpush1.msra.mxu0 %v959
        %971 = vmatprep.subr.mxu0 0.0
        %972 = vmatpush1.msra.mxu0 %v958
        %973 = vmatprep.subr.mxu0 0.0
        %974 = vmatpush1.msra.mxu0 %v957
        %975 = vmatprep.subr.mxu0 0.0
        %976 = vmatpush1.msra.mxu0 %v956
        %977 = vmatprep.subr.mxu0 0.0
        %978 = vmatpush1.msra.mxu0 %v955
        %979 = vmatprep.subr.mxu0 0.0
        %980 = vmatpush1.msra.mxu0 %v954
        %981 = vmatprep.subr.mxu0 0.0
        %982 = vmatpush1.msra.mxu0 %v953
        %983 = vmatprep.subr.mxu0 0.0
        %984 = vmatpush1.msra.mxu0 %v952
        %985 = vmatprep.subr.mxu0 0.0
        %986 = vmatpush1.msra.mxu0 %v951
        %987 = vmatprep.subr.mxu0 0.0
        %988 = vmatpush1.msra.mxu0 %v950
        %989 = vmatprep.subr.mxu0 0.0
        %990 = vmatpush1.msra.mxu0 %v949
        %991 = vmatprep.subr.mxu0 0.0
        %992 = vmatpush1.msra.mxu0 %v948
        %993 = vmatprep.subr.mxu0 0.0
        %994 = vmatpush1.msra.mxu0 %v947
        %995 = vmatprep.subr.mxu0 0.0
        %996 = vmatpush2.msra.mxu0 0.0
        %997 = vmatprep.subr.mxu0 0.0
        %998 = vmatpush2.msra.mxu0 0.0
        %999 = vmatprep.subr.mxu0 0.0
        %1000 = vmatpush2.msra.mxu0 0.0
        %1001 = vmatprep.subr.mxu0 0.0
        %1002 = vmatpush2.msra.mxu0 0.0
        %1003 = vmatprep.subr.mxu0 0.0
        %1004 = vmatpush2.msra.mxu0 0.0
        %1005 = vmatprep.subr.mxu0 0.0
        %1006 = vmatpush2.msra.mxu0 0.0
        %1007 = vmatprep.subr.mxu0 0.0
        %1008 = vmatpush2.msra.mxu0 0.0
        %1009 = vmatprep.subr.mxu0 0.0
        %1010 = vmatpush2.msra.mxu0 0.0
        %1011 = vmatprep.subr.mxu0 0.0
        %1012 = vmatpush2.msra.mxu0 0.0
        %1013 = vmatprep.subr.mxu0 0.0
        %1014 = vmatpush2.msra.mxu0 0.0
        %1015 = vmatprep.subr.mxu0 0.0
        %1016 = vmatpush2.msra.mxu0 0.0
        %1017 = vmatprep.subr.mxu0 0.0
        %1018 = vmatpush2.msra.mxu0 0.0
        %1019 = vmatprep.subr.mxu0 0.0
        %1020 = vmatpush2.msra.mxu0 0.0
        %1021 = vmatprep.subr.mxu0 0.0
        %1022 = vmatpush2.msra.mxu0 0.0
        %1023 = vmatprep.subr.mxu0 0.0
        %1024 = vmatpush2.msra.mxu0 0.0
        %1025 = vmatprep.subr.mxu0 0.0
        %1026 = vmatpush2.msra.mxu0 0.0
        %1027 = vmatprep.mubr.f32.mxu0 0.0
        %1028 = vmatmul.mubr.f32.gmra.mxu0 %v944
        %v1029 = vpop.f32.mrf.mxu0
        %v1030 = vadd.f32 0.0, %v1029
        %v1031 = vpop.f32.mrf.mxu0
        %1032 = vdwg.mxu0
        %vm1033 = vcmp.eq.s32.totalorder %v943, 0
        %v1034 = vsel %vm1033, 1, 0
        %v1035 = vcvt.s32.f32 %v1034
        %v1036 = vld [vmem:[#allocation2] sm:$0xff]
        %v1037 = vld [vmem:[#allocation2 + $0x8] sm:$0xff]
        %v1038 = vld [vmem:[#allocation2 + $0x10] sm:$0xff]
        %v1039 = vld [vmem:[#allocation2 + $0x18] sm:$0xff]
        %v1040 = vld [vmem:[#allocation2 + $0x20] sm:$0xff]
        %v1041 = vld [vmem:[#allocation2 + $0x28] sm:$0xff]
        %v1042 = vld [vmem:[#allocation2 + $0x30] sm:$0xff]
        %v1043 = vld [vmem:[#allocation2 + $0x38] sm:$0xff]
        %v1044 = vld [vmem:[#allocation2 + $0x40] sm:$0xff]
        %v1045 = vld [vmem:[#allocation2 + $0x48] sm:$0xff]
        %v1046 = vld [vmem:[#allocation2 + $0x50] sm:$0xff]
        %v1047 = vld [vmem:[#allocation2 + $0x58] sm:$0xff]
        %v1048 = vld [vmem:[#allocation2 + $0x60] sm:$0xff]
        %v1049 = vld [vmem:[#allocation2 + $0x68] sm:$0xff]
        %v1050 = vld [vmem:[#allocation2 + $0x70] sm:$0xff]
        %v1051 = vld [vmem:[#allocation2 + $0x78] sm:$0xff]
        %1052 = vmatprep.subr.mxu0 0.0
        %1053 = vmatpush1.msra.mxu0 %v1051
        %1054 = vmatprep.subr.mxu0 0.0
        %1055 = vmatpush1.msra.mxu0 %v1050
        %1056 = vmatprep.subr.mxu0 0.0
        %1057 = vmatpush1.msra.mxu0 %v1049
        %1058 = vmatprep.subr.mxu0 0.0
        %1059 = vmatpush1.msra.mxu0 %v1048
        %1060 = vmatprep.subr.mxu0 0.0
        %1061 = vmatpush1.msra.mxu0 %v1047
        %1062 = vmatprep.subr.mxu0 0.0
        %1063 = vmatpush1.msra.mxu0 %v1046
        %1064 = vmatprep.subr.mxu0 0.0
        %1065 = vmatpush1.msra.mxu0 %v1045
        %1066 = vmatprep.subr.mxu0 0.0
        %1067 = vmatpush1.msra.mxu0 %v1044
        %1068 = vmatprep.subr.mxu0 0.0
        %1069 = vmatpush1.msra.mxu0 %v1043
        %1070 = vmatprep.subr.mxu0 0.0
        %1071 = vmatpush1.msra.mxu0 %v1042
        %1072 = vmatprep.subr.mxu0 0.0
        %1073 = vmatpush1.msra.mxu0 %v1041
        %1074 = vmatprep.subr.mxu0 0.0
        %1075 = vmatpush1.msra.mxu0 %v1040
        %1076 = vmatprep.subr.mxu0 0.0
        %1077 = vmatpush1.msra.mxu0 %v1039
        %1078 = vmatprep.subr.mxu0 0.0
        %1079 = vmatpush1.msra.mxu0 %v1038
        %1080 = vmatprep.subr.mxu0 0.0
        %1081 = vmatpush1.msra.mxu0 %v1037
        %1082 = vmatprep.subr.mxu0 0.0
        %1083 = vmatpush1.msra.mxu0 %v1036
        %1084 = vmatprep.subr.mxu0 0.0
        %1085 = vmatpush2.msra.mxu0 0.0
        %1086 = vmatprep.subr.mxu0 0.0
        %1087 = vmatpush2.msra.mxu0 0.0
        %1088 = vmatprep.subr.mxu0 0.0
        %1089 = vmatpush2.msra.mxu0 0.0
        %1090 = vmatprep.subr.mxu0 0.0
        %1091 = vmatpush2.msra.mxu0 0.0
        %1092 = vmatprep.subr.mxu0 0.0
        %1093 = vmatpush2.msra.mxu0 0.0
        %1094 = vmatprep.subr.mxu0 0.0
        %1095 = vmatpush2.msra.mxu0 0.0
        %1096 = vmatprep.subr.mxu0 0.0
        %1097 = vmatpush2.msra.mxu0 0.0
        %1098 = vmatprep.subr.mxu0 0.0
        %1099 = vmatpush2.msra.mxu0 0.0
        %1100 = vmatprep.subr.mxu0 0.0
        %1101 = vmatpush2.msra.mxu0 0.0
        %1102 = vmatprep.subr.mxu0 0.0
        %1103 = vmatpush2.msra.mxu0 0.0
        %1104 = vmatprep.subr.mxu0 0.0
        %1105 = vmatpush2.msra.mxu0 0.0
        %1106 = vmatprep.subr.mxu0 0.0
        %1107 = vmatpush2.msra.mxu0 0.0
        %1108 = vmatprep.subr.mxu0 0.0
        %1109 = vmatpush2.msra.mxu0 0.0
        %1110 = vmatprep.subr.mxu0 0.0
        %1111 = vmatpush2.msra.mxu0 0.0
        %1112 = vmatprep.subr.mxu0 0.0
        %1113 = vmatpush2.msra.mxu0 0.0
        %1114 = vmatprep.subr.mxu0 0.0
        %1115 = vmatpush2.msra.mxu0 0.0
        %1116 = vmatprep.mubr.f32.mxu0 0.0
        %1117 = vmatmul.mubr.f32.gmra.mxu0 %v944
        %v1118 = vpop.f32.mrf.mxu0
        %v1119 = vadd.f32 0.0, %v1118
        %v1120 = vpop.f32.mrf.mxu0
        %1121 = vdwg.mxu0
        %v1122 = vlaneseq
        %v1123 = vshrl.u32 %v1122, 7
        %v1124 = vsub.s32 0, %v1123
        %v1125 = vrot.slane %v1119, %v1124
        %v1126 = vmul.f32 %v1035, %v1125
        %v1127 = vadd.f32 %v1126, 0.0
        %v1128 = vld [vmem:[#allocation5] sm:$0xff]
        %v1129 = vld [vmem:[#allocation5 + $0x8] sm:$0xff]
        %v1130 = vld [vmem:[#allocation5 + $0x10] sm:$0xff]
        %v1131 = vld [vmem:[#allocation5 + $0x18] sm:$0xff]
        %v1132 = vld [vmem:[#allocation5 + $0x20] sm:$0xff]
        %v1133 = vld [vmem:[#allocation5 + $0x28] sm:$0xff]
        %v1134 = vld [vmem:[#allocation5 + $0x30] sm:$0xff]
        %v1135 = vld [vmem:[#allocation5 + $0x38] sm:$0xff]
        %v1136 = vld [vmem:[#allocation5 + $0x40] sm:$0xff]
        %v1137 = vld [vmem:[#allocation5 + $0x48] sm:$0xff]
        %v1138 = vld [vmem:[#allocation5 + $0x50] sm:$0xff]
        %v1139 = vld [vmem:[#allocation5 + $0x58] sm:$0xff]
        %v1140 = vld [vmem:[#allocation5 + $0x60] sm:$0xff]
        %v1141 = vld [vmem:[#allocation5 + $0x68] sm:$0xff]
        %v1142 = vld [vmem:[#allocation5 + $0x70] sm:$0xff]
        %v1143 = vld [vmem:[#allocation5 + $0x78] sm:$0xff]
        %1144 = vmatprep.subr.mxu0 0.0
        %1145 = vmatpush1.msra.mxu0 %v1143
        %1146 = vmatprep.subr.mxu0 0.0
        %1147 = vmatpush1.msra.mxu0 %v1142
        %1148 = vmatprep.subr.mxu0 0.0
        %1149 = vmatpush1.msra.mxu0 %v1141
        %1150 = vmatprep.subr.mxu0 0.0
        %1151 = vmatpush1.msra.mxu0 %v1140
        %1152 = vmatprep.subr.mxu0 0.0
        %1153 = vmatpush1.msra.mxu0 %v1139
        %1154 = vmatprep.subr.mxu0 0.0
        %1155 = vmatpush1.msra.mxu0 %v1138
        %1156 = vmatprep.subr.mxu0 0.0
        %1157 = vmatpush1.msra.mxu0 %v1137
        %1158 = vmatprep.subr.mxu0 0.0
        %1159 = vmatpush1.msra.mxu0 %v1136
        %1160 = vmatprep.subr.mxu0 0.0
        %1161 = vmatpush1.msra.mxu0 %v1135
        %1162 = vmatprep.subr.mxu0 0.0
        %1163 = vmatpush1.msra.mxu0 %v1134
        %1164 = vmatprep.subr.mxu0 0.0
        %1165 = vmatpush1.msra.mxu0 %v1133
        %1166 = vmatprep.subr.mxu0 0.0
        %1167 = vmatpush1.msra.mxu0 %v1132
        %1168 = vmatprep.subr.mxu0 0.0
        %1169 = vmatpush1.msra.mxu0 %v1131
        %1170 = vmatprep.subr.mxu0 0.0
        %1171 = vmatpush1.msra.mxu0 %v1130
        %1172 = vmatprep.subr.mxu0 0.0
        %1173 = vmatpush1.msra.mxu0 %v1129
        %1174 = vmatprep.subr.mxu0 0.0
        %1175 = vmatpush1.msra.mxu0 %v1128
        %1176 = vmatprep.subr.mxu0 0.0
        %1177 = vmatpush2.msra.mxu0 0.0
        %1178 = vmatprep.subr.mxu0 0.0
        %1179 = vmatpush2.msra.mxu0 0.0
        %1180 = vmatprep.subr.mxu0 0.0
        %1181 = vmatpush2.msra.mxu0 0.0
        %1182 = vmatprep.subr.mxu0 0.0
        %1183 = vmatpush2.msra.mxu0 0.0
        %1184 = vmatprep.subr.mxu0 0.0
        %1185 = vmatpush2.msra.mxu0 0.0
        %1186 = vmatprep.subr.mxu0 0.0
        %1187 = vmatpush2.msra.mxu0 0.0
        %1188 = vmatprep.subr.mxu0 0.0
        %1189 = vmatpush2.msra.mxu0 0.0
        %1190 = vmatprep.subr.mxu0 0.0
        %1191 = vmatpush2.msra.mxu0 0.0
        %1192 = vmatprep.subr.mxu0 0.0
        %1193 = vmatpush2.msra.mxu0 0.0
        %1194 = vmatprep.subr.mxu0 0.0
        %1195 = vmatpush2.msra.mxu0 0.0
        %1196 = vmatprep.subr.mxu0 0.0
        %1197 = vmatpush2.msra.mxu0 0.0
        %1198 = vmatprep.subr.mxu0 0.0
        %1199 = vmatpush2.msra.mxu0 0.0
        %1200 = vmatprep.subr.mxu0 0.0
        %1201 = vmatpush2.msra.mxu0 0.0
        %1202 = vmatprep.subr.mxu0 0.0
        %1203 = vmatpush2.msra.mxu0 0.0
        %1204 = vmatprep.subr.mxu0 0.0
        %1205 = vmatpush2.msra.mxu0 0.0
        %1206 = vmatprep.subr.mxu0 0.0
        %1207 = vmatpush2.msra.mxu0 0.0
        %1208 = vmatprep.mubr.f32.mxu0 0.0
        %1209 = vmatmul.mubr.f32.gmra.mxu0 %v944
        %v1210 = vpop.f32.mrf.mxu0
        %v1211 = vadd.f32 0.0, %v1210
        %v1212 = vpop.f32.mrf.mxu0
        %1213 = vdwg.mxu0
        %v1214 = vlaneseq
        %v1215 = vshrl.u32 %v1214, 7
        %v1216 = vsub.s32 0, %v1215
        %v1217 = vrot.slane %v1211, %v1216
        %v1218 = vmul.f32 %v1035, %v1217
        %v1219 = vadd.f32 %v1218, 0.0
        %1220 = vmatprep.subr.mxu0 0.0
        %1221 = vmatpush1.xpose.msra.mxu0 0.0
        %1222 = vmatprep.subr.mxu0 0.0
        %1223 = vmatpush1.xpose.msra.mxu0 0.0
        %1224 = vmatprep.subr.mxu0 0.0
        %1225 = vmatpush1.xpose.msra.mxu0 0.0
        %1226 = vmatprep.subr.mxu0 0.0
        %1227 = vmatpush1.xpose.msra.mxu0 0.0
        %1228 = vmatprep.subr.mxu0 0.0
        %1229 = vmatpush1.xpose.msra.mxu0 0.0
        %1230 = vmatprep.subr.mxu0 0.0
        %1231 = vmatpush1.xpose.msra.mxu0 0.0
        %1232 = vmatprep.subr.mxu0 0.0
        %1233 = vmatpush1.xpose.msra.mxu0 0.0
        %1234 = vmatprep.subr.mxu0 0.0
        %1235 = vmatpush1.xpose.msra.mxu0 0.0
        %1236 = vmatprep.subr.mxu0 0.0
        %1237 = vmatpush1.xpose.msra.mxu0 0.0
        %1238 = vmatprep.subr.mxu0 0.0
        %1239 = vmatpush1.xpose.msra.mxu0 0.0
        %1240 = vmatprep.subr.mxu0 0.0
        %1241 = vmatpush1.xpose.msra.mxu0 0.0
        %1242 = vmatprep.subr.mxu0 0.0
        %1243 = vmatpush1.xpose.msra.mxu0 0.0
        %1244 = vmatprep.subr.mxu0 0.0
        %1245 = vmatpush1.xpose.msra.mxu0 0.0
        %1246 = vmatprep.subr.mxu0 0.0
        %1247 = vmatpush1.xpose.msra.mxu0 0.0
        %1248 = vmatprep.subr.mxu0 0.0
        %1249 = vmatpush1.xpose.msra.mxu0 0.0
        %1250 = vmatprep.subr.mxu0 0.0
        %1251 = vmatpush1.xpose.msra.mxu0 %v1127
        %1252 = vmatprep.subr.mxu0 0.0
        %1253 = vmatpush2.xpose.msra.mxu0 0.0
        %1254 = vmatprep.subr.mxu0 0.0
        %1255 = vmatpush2.xpose.msra.mxu0 0.0
        %1256 = vmatprep.subr.mxu0 0.0
        %1257 = vmatpush2.xpose.msra.mxu0 0.0
        %1258 = vmatprep.subr.mxu0 0.0
        %1259 = vmatpush2.xpose.msra.mxu0 0.0
        %1260 = vmatprep.subr.mxu0 0.0
        %1261 = vmatpush2.xpose.msra.mxu0 0.0
        %1262 = vmatprep.subr.mxu0 0.0
        %1263 = vmatpush2.xpose.msra.mxu0 0.0
        %1264 = vmatprep.subr.mxu0 0.0
        %1265 = vmatpush2.xpose.msra.mxu0 0.0
        %1266 = vmatprep.subr.mxu0 0.0
        %1267 = vmatpush2.xpose.msra.mxu0 0.0
        %1268 = vmatprep.subr.mxu0 0.0
        %1269 = vmatpush2.xpose.msra.mxu0 0.0
        %1270 = vmatprep.subr.mxu0 0.0
        %1271 = vmatpush2.xpose.msra.mxu0 0.0
        %1272 = vmatprep.subr.mxu0 0.0
        %1273 = vmatpush2.xpose.msra.mxu0 0.0
        %1274 = vmatprep.subr.mxu0 0.0
        %1275 = vmatpush2.xpose.msra.mxu0 0.0
        %1276 = vmatprep.subr.mxu0 0.0
        %1277 = vmatpush2.xpose.msra.mxu0 0.0
        %1278 = vmatprep.subr.mxu0 0.0
        %1279 = vmatpush2.xpose.msra.mxu0 0.0
        %1280 = vmatprep.subr.mxu0 0.0
        %1281 = vmatpush2.xpose.msra.mxu0 0.0
        %1282 = vmatprep.subr.mxu0 0.0
        %1283 = vmatpush2.xpose.msra.mxu0 0.0
        %1284 = vmatprep.mubr.f32.mxu0 0.0
        %1285 = vmatmul.mubr.f32.gmra.mxu0 %v1030
        %v1286 = vpop.f32.mrf.mxu0
        %v1287 = vadd.f32 0.0, %v1286
        %v1288 = vpop.f32.mrf.mxu0
        %1289 = vdwg.mxu0
        %v1290 = vmul.f32 %v1287, 0.17677669
        %vm1291 = vcmp.le.s32.totalorder %v934, 0
        %v1292 = vsel %vm1291, %v1290, -3.4028235e+38
        %vm1293 = vcmask 57344
        %v1294 = vsel %vm1293, %v1292, -inf
        %1295 = vmax.xlane.f32.xlu0 %v1294
        %v1296 = vpop.xlane.xlu0 %1295
        %v1297 = vsub.f32 %v1292, %v1296
        %v1298 = vmul.f32 %v1297, 1.442695
        %v1299 = vpow.pop %v1298
        %v1300 = vsel %vm1293, %v1299, 0.0
        %1301 = vadd.xlane.f32.xlu0 %v1300
        %v1302 = vpop.xlane.xlu0 %1301
        %v1303 = vrcp.pop %v1302
        %v1304 = vmul.f32 %v1299, %v1303
        %vm1305 = vcmask 64512
        %v1307 = vsel %vm1305, %v1304, 0
        %1309 = vmatprep.subr.mxu0 0.0
        %1310 = vmatpush1.msra.mxu0 0.0
        %1311 = vmatprep.subr.mxu0 0.0
        %1312 = vmatpush1.msra.mxu0 0.0
        %1313 = vmatprep.subr.mxu0 0.0
        %1314 = vmatpush1.msra.mxu0 0.0
        %1315 = vmatprep.subr.mxu0 0.0
        %1316 = vmatpush1.msra.mxu0 0.0
        %1317 = vmatprep.subr.mxu0 0.0
        %1318 = vmatpush1.msra.mxu0 0.0
        %1319 = vmatprep.subr.mxu0 0.0
        %1320 = vmatpush1.msra.mxu0 0.0
        %1321 = vmatprep.subr.mxu0 0.0
        %1322 = vmatpush1.msra.mxu0 0.0
        %1323 = vmatprep.subr.mxu0 0.0
        %1324 = vmatpush1.msra.mxu0 0.0
        %1325 = vmatprep.subr.mxu0 0.0
        %1326 = vmatpush1.msra.mxu0 0.0
        %1327 = vmatprep.subr.mxu0 0.0
        %1328 = vmatpush1.msra.mxu0 0.0
        %1329 = vmatprep.subr.mxu0 0.0
        %1330 = vmatpush1.msra.mxu0 0.0
        %1331 = vmatprep.subr.mxu0 0.0
        %1332 = vmatpush1.msra.mxu0 0.0
        %1333 = vmatprep.subr.mxu0 0.0
        %1334 = vmatpush1.msra.mxu0 0.0
        %1335 = vmatprep.subr.mxu0 0.0
        %1336 = vmatpush1.msra.mxu0 0.0
        %1337 = vmatprep.subr.mxu0 0.0
        %1338 = vmatpush1.msra.mxu0 0.0
        %1339 = vmatprep.subr.mxu0 0.0
        %1340 = vmatpush1.msra.mxu0 %v1219
        %1341 = vmatprep.subr.mxu0 0.0
        %1342 = vmatpush2.msra.mxu0 0.0
        %1343 = vmatprep.subr.mxu0 0.0
        %1344 = vmatpush2.msra.mxu0 0.0
        %1345 = vmatprep.subr.mxu0 0.0
        %1346 = vmatpush2.msra.mxu0 0.0
        %1347 = vmatprep.subr.mxu0 0.0
        %1348 = vmatpush2.msra.mxu0 0.0
        %1349 = vmatprep.subr.mxu0 0.0
        %1350 = vmatpush2.msra.mxu0 0.0
        %1351 = vmatprep.subr.mxu0 0.0
        %1352 = vmatpush2.msra.mxu0 0.0
        %1353 = vmatprep.subr.mxu0 0.0
        %1354 = vmatpush2.msra.mxu0 0.0
        %1355 = vmatprep.subr.mxu0 0.0
        %1356 = vmatpush2.msra.mxu0 0.0
        %1357 = vmatprep.subr.mxu0 0.0
        %1358 = vmatpush2.msra.mxu0 0.0
        %1359 = vmatprep.subr.mxu0 0.0
        %1360 = vmatpush2.msra.mxu0 0.0
        %1361 = vmatprep.subr.mxu0 0.0
        %1362 = vmatpush2.msra.mxu0 0.0
        %1363 = vmatprep.subr.mxu0 0.0
        %1364 = vmatpush2.msra.mxu0 0.0
        %1365 = vmatprep.subr.mxu0 0.0
        %1366 = vmatpush2.msra.mxu0 0.0
        %1367 = vmatprep.subr.mxu0 0.0
        %1368 = vmatpush2.msra.mxu0 0.0
        %1369 = vmatprep.subr.mxu0 0.0
        %1370 = vmatpush2.msra.mxu0 0.0
        %1371 = vmatprep.subr.mxu0 0.0
        %1372 = vmatpush2.msra.mxu0 0.0
        %1373 = vmatprep.mubr.f32.mxu0 0.0
        %1374 = vmatmul.mubr.f32.gmra.mxu0 %v1307
        %v1375 = vpop.f32.mrf.mxu0
        %v1376 = vadd.f32 %v944, %v1375
        %v1377 = vpop.f32.mrf.mxu0
        %1378 = vdwg.mxu0
        %v1379 = vld [vmem:[#allocation7] sm:$0xff]
        %v1380 = vld [vmem:[#allocation7 + $0x8] sm:$0xff]
        %v1381 = vld [vmem:[#allocation7 + $0x10] sm:$0xff]
        %v1382 = vld [vmem:[#allocation7 + $0x18] sm:$0xff]
        %v1383 = vld [vmem:[#allocation7 + $0x20] sm:$0xff]
        %v1384 = vld [vmem:[#allocation7 + $0x28] sm:$0xff]
        %v1385 = vld [vmem:[#allocation7 + $0x30] sm:$0xff]
        %v1386 = vld [vmem:[#allocation7 + $0x38] sm:$0xff]
        %v1387 = vld [vmem:[#allocation7 + $0x40] sm:$0xff]
        %v1388 = vld [vmem:[#allocation7 + $0x48] sm:$0xff]
        %v1389 = vld [vmem:[#allocation7 + $0x50] sm:$0xff]
        %v1390 = vld [vmem:[#allocation7 + $0x58] sm:$0xff]
        %v1391 = vld [vmem:[#allocation7 + $0x60] sm:$0xff]
        %v1392 = vld [vmem:[#allocation7 + $0x68] sm:$0xff]
        %v1393 = vld [vmem:[#allocation7 + $0x70] sm:$0xff]
        %v1394 = vld [vmem:[#allocation7 + $0x78] sm:$0xff]
        %1395 = vmatprep.subr.mxu0 0.0
        %1396 = vmatpush1.msra.mxu0 %v1394
        %1397 = vmatprep.subr.mxu0 0.0
        %1398 = vmatpush1.msra.mxu0 %v1393
        %1399 = vmatprep.subr.mxu0 0.0
        %1400 = vmatpush1.msra.mxu0 %v1392
        %1401 = vmatprep.subr.mxu0 0.0
        %1402 = vmatpush1.msra.mxu0 %v1391
        %1403 = vmatprep.subr.mxu0 0.0
        %1404 = vmatpush1.msra.mxu0 %v1390
        %1405 = vmatprep.subr.mxu0 0.0
        %1406 = vmatpush1.msra.mxu0 %v1389
        %1407 = vmatprep.subr.mxu0 0.0
        %1408 = vmatpush1.msra.mxu0 %v1388
        %1409 = vmatprep.subr.mxu0 0.0
        %1410 = vmatpush1.msra.mxu0 %v1387
        %1411 = vmatprep.subr.mxu0 0.0
        %1412 = vmatpush1.msra.mxu0 %v1386
        %1413 = vmatprep.subr.mxu0 0.0
        %1414 = vmatpush1.msra.mxu0 %v1385
        %1415 = vmatprep.subr.mxu0 0.0
        %1416 = vmatpush1.msra.mxu0 %v1384
        %1417 = vmatprep.subr.mxu0 0.0
        %1418 = vmatpush1.msra.mxu0 %v1383
        %1419 = vmatprep.subr.mxu0 0.0
        %1420 = vmatpush1.msra.mxu0 %v1382
        %1421 = vmatprep.subr.mxu0 0.0
        %1422 = vmatpush1.msra.mxu0 %v1381
        %1423 = vmatprep.subr.mxu0 0.0
        %1424 = vmatpush1.msra.mxu0 %v1380
        %1425 = vmatprep.subr.mxu0 0.0
        %1426 = vmatpush1.msra.mxu0 %v1379
        %1427 = vmatprep.subr.mxu0 0.0
        %1428 = vmatpush2.msra.mxu0 0.0
        %1429 = vmatprep.subr.mxu0 0.0
        %1430 = vmatpush2.msra.mxu0 0.0
        %1431 = vmatprep.subr.mxu0 0.0
        %1432 = vmatpush2.msra.mxu0 0.0
        %1433 = vmatprep.subr.mxu0 0.0
        %1434 = vmatpush2.msra.mxu0 0.0
        %1435 = vmatprep.subr.mxu0 0.0
        %1436 = vmatpush2.msra.mxu0 0.0
        %1437 = vmatprep.subr.mxu0 0.0
        %1438 = vmatpush2.msra.mxu0 0.0
        %1439 = vmatprep.subr.mxu0 0.0
        %1440 = vmatpush2.msra.mxu0 0.0
        %1441 = vmatprep.subr.mxu0 0.0
        %1442 = vmatpush2.msra.mxu0 0.0
        %1443 = vmatprep.subr.mxu0 0.0
        %1444 = vmatpush2.msra.mxu0 0.0
        %1445 = vmatprep.subr.mxu0 0.0
        %1446 = vmatpush2.msra.mxu0 0.0
        %1447 = vmatprep.subr.mxu0 0.0
        %1448 = vmatpush2.msra.mxu0 0.0
        %1449 = vmatprep.subr.mxu0 0.0
        %1450 = vmatpush2.msra.mxu0 0.0
        %1451 = vmatprep.subr.mxu0 0.0
        %1452 = vmatpush2.msra.mxu0 0.0
        %1453 = vmatprep.subr.mxu0 0.0
        %1454 = vmatpush2.msra.mxu0 0.0
        %1455 = vmatprep.subr.mxu0 0.0
        %1456 = vmatpush2.msra.mxu0 0.0
        %1457 = vmatprep.subr.mxu0 0.0
        %1458 = vmatpush2.msra.mxu0 0.0
        %1459 = vmatprep.mubr.f32.mxu0 0.0
        %1460 = vmatmul.mubr.f32.gmra.mxu0 %v1376
        %v1461 = vpop.f32.mrf.mxu0
        %v1462 = vadd.f32 0.0, %v1461
        %v1463 = vpop.f32.mrf.mxu0
        %1464 = vdwg.mxu0
        %1465 = vmatprep.subr.mxu0 0.0
        %1466 = vmatpush1.xpose.msra.mxu0 0.0
        %1467 = vmatprep.subr.mxu0 0.0
        %1468 = vmatpush1.xpose.msra.mxu0 0.0
        %1469 = vmatprep.subr.mxu0 0.0
        %1470 = vmatpush1.xpose.msra.mxu0 0.0
        %1471 = vmatprep.subr.mxu0 0.0
        %1472 = vmatpush1.xpose.msra.mxu0 0.0
        %1473 = vmatprep.subr.mxu0 0.0
        %1474 = vmatpush1.xpose.msra.mxu0 0.0
        %1475 = vmatprep.subr.mxu0 0.0
        %1476 = vmatpush1.xpose.msra.mxu0 0.0
        %1477 = vmatprep.subr.mxu0 0.0
        %1478 = vmatpush1.xpose.msra.mxu0 0.0
        %1479 = vmatprep.subr.mxu0 0.0
        %1480 = vmatpush1.xpose.msra.mxu0 0.0
        %1481 = vmatprep.subr.mxu0 0.0
        %1482 = vmatpush1.xpose.msra.mxu0 0.0
        %1483 = vmatprep.subr.mxu0 0.0
        %1484 = vmatpush1.xpose.msra.mxu0 0.0
        %1485 = vmatprep.subr.mxu0 0.0
        %1486 = vmatpush1.xpose.msra.mxu0 0.0
        %1487 = vmatprep.subr.mxu0 0.0
        %1488 = vmatpush1.xpose.msra.mxu0 0.0
        %1489 = vmatprep.subr.mxu0 0.0
        %1490 = vmatpush1.xpose.msra.mxu0 0.0
        %1491 = vmatprep.subr.mxu0 0.0
        %1492 = vmatpush1.xpose.msra.mxu0 0.0
        %1493 = vmatprep.subr.mxu0 0.0
        %1494 = vmatpush1.xpose.msra.mxu0 0.0
        %1495 = vmatprep.subr.mxu0 0.0
        %1496 = vmatpush1.xpose.msra.mxu0 %v841
        %1497 = vmatprep.subr.mxu0 0.0
        %1498 = vmatpush2.xpose.msra.mxu0 0.0
        %1499 = vmatprep.subr.mxu0 0.0
        %1500 = vmatpush2.xpose.msra.mxu0 0.0
        %1501 = vmatprep.subr.mxu0 0.0
        %1502 = vmatpush2.xpose.msra.mxu0 0.0
        %1503 = vmatprep.subr.mxu0 0.0
        %1504 = vmatpush2.xpose.msra.mxu0 0.0
        %1505 = vmatprep.subr.mxu0 0.0
        %1506 = vmatpush2.xpose.msra.mxu0 0.0
        %1507 = vmatprep.subr.mxu0 0.0
        %1508 = vmatpush2.xpose.msra.mxu0 0.0
        %1509 = vmatprep.subr.mxu0 0.0
        %1510 = vmatpush2.xpose.msra.mxu0 0.0
        %1511 = vmatprep.subr.mxu0 0.0
        %1512 = vmatpush2.xpose.msra.mxu0 0.0
        %1513 = vmatprep.subr.mxu0 0.0
        %1514 = vmatpush2.xpose.msra.mxu0 0.0
        %1515 = vmatprep.subr.mxu0 0.0
        %1516 = vmatpush2.xpose.msra.mxu0 0.0
        %1517 = vmatprep.subr.mxu0 0.0
        %1518 = vmatpush2.xpose.msra.mxu0 0.0
        %1519 = vmatprep.subr.mxu0 0.0
        %1520 = vmatpush2.xpose.msra.mxu0 0.0
        %1521 = vmatprep.subr.mxu0 0.0
        %1522 = vmatpush2.xpose.msra.mxu0 0.0
        %1523 = vmatprep.subr.mxu0 0.0
        %1524 = vmatpush2.xpose.msra.mxu0 0.0
        %1525 = vmatprep.subr.mxu0 0.0
        %1526 = vmatpush2.xpose.msra.mxu0 0.0
        %1527 = vmatprep.subr.mxu0 0.0
        %1528 = vmatpush2.xpose.msra.mxu0 0.0
        %1529 = vmatprep.mubr.f32.mxu0 0.0
        %1530 = vmatmul.mubr.f32.gmra.mxu0 %v1462
        %v1531 = vpop.f32.mrf.mxu0
        %v1532 = vadd.f32 0.0, %v1531
        %v1533 = vpop.f32.mrf.mxu0
        %1534 = vdwg.mxu0
        %v1535 = vmul.f32 %v1532, 0.17677669
        %vm1536 = vcmp.gt.f32.partialorder %v930, 0.0
        %v1537 = vsel %vm1536, %v1535, -3.4028235e+38
        %v1538 = vsel %vm1293, %v1537, -inf
        %1539 = vmax.xlane.f32.xlu0 %v1538
        %v1540 = vpop.xlane.xlu0 %1539
        %v1541 = vsub.f32 %v1537, %v1540
        %v1542 = vmul.f32 %v1541, 1.442695
        %v1543 = vpow.pop %v1542
        %v1544 = vsel %vm1293, %v1543, 0.0
        %1545 = vadd.xlane.f32.xlu0 %v1544
        %v1546 = vpop.xlane.xlu0 %1545
        %v1547 = vrcp.pop %v1546
        %v1548 = vmul.f32 %v1543, %v1547
        %v1550 = vsel %vm1305, %v1548, 0
        %1552 = vmatprep.subr.mxu0 0.0
        %1553 = vmatpush1.msra.mxu0 0.0
        %1554 = vmatprep.subr.mxu0 0.0
        %1555 = vmatpush1.msra.mxu0 0.0
        %1556 = vmatprep.subr.mxu0 0.0
        %1557 = vmatpush1.msra.mxu0 0.0
        %1558 = vmatprep.subr.mxu0 0.0
        %1559 = vmatpush1.msra.mxu0 0.0
        %1560 = vmatprep.subr.mxu0 0.0
        %1561 = vmatpush1.msra.mxu0 0.0
        %1562 = vmatprep.subr.mxu0 0.0
        %1563 = vmatpush1.msra.mxu0 0.0
        %1564 = vmatprep.subr.mxu0 0.0
        %1565 = vmatpush1.msra.mxu0 0.0
        %1566 = vmatprep.subr.mxu0 0.0
        %1567 = vmatpush1.msra.mxu0 0.0
        %1568 = vmatprep.subr.mxu0 0.0
        %1569 = vmatpush1.msra.mxu0 0.0
        %1570 = vmatprep.subr.mxu0 0.0
        %1571 = vmatpush1.msra.mxu0 0.0
        %1572 = vmatprep.subr.mxu0 0.0
        %1573 = vmatpush1.msra.mxu0 0.0
        %1574 = vmatprep.subr.mxu0 0.0
        %1575 = vmatpush1.msra.mxu0 0.0
        %1576 = vmatprep.subr.mxu0 0.0
        %1577 = vmatpush1.msra.mxu0 0.0
        %1578 = vmatprep.subr.mxu0 0.0
        %1579 = vmatpush1.msra.mxu0 0.0
        %1580 = vmatprep.subr.mxu0 0.0
        %1581 = vmatpush1.msra.mxu0 0.0
        %1582 = vmatprep.subr.mxu0 0.0
        %1583 = vmatpush1.msra.mxu0 %v927
        %1584 = vmatprep.subr.mxu0 0.0
        %1585 = vmatpush2.msra.mxu0 0.0
        %1586 = vmatprep.subr.mxu0 0.0
        %1587 = vmatpush2.msra.mxu0 0.0
        %1588 = vmatprep.subr.mxu0 0.0
        %1589 = vmatpush2.msra.mxu0 0.0
        %1590 = vmatprep.subr.mxu0 0.0
        %1591 = vmatpush2.msra.mxu0 0.0
        %1592 = vmatprep.subr.mxu0 0.0
        %1593 = vmatpush2.msra.mxu0 0.0
        %1594 = vmatprep.subr.mxu0 0.0
        %1595 = vmatpush2.msra.mxu0 0.0
        %1596 = vmatprep.subr.mxu0 0.0
        %1597 = vmatpush2.msra.mxu0 0.0
        %1598 = vmatprep.subr.mxu0 0.0
        %1599 = vmatpush2.msra.mxu0 0.0
        %1600 = vmatprep.subr.mxu0 0.0
        %1601 = vmatpush2.msra.mxu0 0.0
        %1602 = vmatprep.subr.mxu0 0.0
        %1603 = vmatpush2.msra.mxu0 0.0
        %1604 = vmatprep.subr.mxu0 0.0
        %1605 = vmatpush2.msra.mxu0 0.0
        %1606 = vmatprep.subr.mxu0 0.0
        %1607 = vmatpush2.msra.mxu0 0.0
        %1608 = vmatprep.subr.mxu0 0.0
        %1609 = vmatpush2.msra.mxu0 0.0
        %1610 = vmatprep.subr.mxu0 0.0
        %1611 = vmatpush2.msra.mxu0 0.0
        %1612 = vmatprep.subr.mxu0 0.0
        %1613 = vmatpush2.msra.mxu0 0.0
        %1614 = vmatprep.subr.mxu0 0.0
        %1615 = vmatpush2.msra.mxu0 0.0
        %1616 = vmatprep.mubr.f32.mxu0 0.0
        %1617 = vmatmul.mubr.f32.gmra.mxu0 %v1550
        %v1618 = vpop.f32.mrf.mxu0
        %v1619 = vadd.f32 0.0, %v1618
        %v1620 = vpop.f32.mrf.mxu0
        %1621 = vdwg.mxu0
        %v1622 = vld [vmem:[#allocation11] sm:$0xff]
        %v1623 = vld [vmem:[#allocation11 + $0x8] sm:$0xff]
        %v1624 = vld [vmem:[#allocation11 + $0x10] sm:$0xff]
        %v1625 = vld [vmem:[#allocation11 + $0x18] sm:$0xff]
        %v1626 = vld [vmem:[#allocation11 + $0x20] sm:$0xff]
        %v1627 = vld [vmem:[#allocation11 + $0x28] sm:$0xff]
        %v1628 = vld [vmem:[#allocation11 + $0x30] sm:$0xff]
        %v1629 = vld [vmem:[#allocation11 + $0x38] sm:$0xff]
        %v1630 = vld [vmem:[#allocation11 + $0x40] sm:$0xff]
        %v1631 = vld [vmem:[#allocation11 + $0x48] sm:$0xff]
        %v1632 = vld [vmem:[#allocation11 + $0x50] sm:$0xff]
        %v1633 = vld [vmem:[#allocation11 + $0x58] sm:$0xff]
        %v1634 = vld [vmem:[#allocation11 + $0x60] sm:$0xff]
        %v1635 = vld [vmem:[#allocation11 + $0x68] sm:$0xff]
        %v1636 = vld [vmem:[#allocation11 + $0x70] sm:$0xff]
        %v1637 = vld [vmem:[#allocation11 + $0x78] sm:$0xff]
        %1638 = vmatprep.subr.mxu0 0.0
        %1639 = vmatpush1.msra.mxu0 %v1637
        %1640 = vmatprep.subr.mxu0 0.0
        %1641 = vmatpush1.msra.mxu0 %v1636
        %1642 = vmatprep.subr.mxu0 0.0
        %1643 = vmatpush1.msra.mxu0 %v1635
        %1644 = vmatprep.subr.mxu0 0.0
        %1645 = vmatpush1.msra.mxu0 %v1634
        %1646 = vmatprep.subr.mxu0 0.0
        %1647 = vmatpush1.msra.mxu0 %v1633
        %1648 = vmatprep.subr.mxu0 0.0
        %1649 = vmatpush1.msra.mxu0 %v1632
        %1650 = vmatprep.subr.mxu0 0.0
        %1651 = vmatpush1.msra.mxu0 %v1631
        %1652 = vmatprep.subr.mxu0 0.0
        %1653 = vmatpush1.msra.mxu0 %v1630
        %1654 = vmatprep.subr.mxu0 0.0
        %1655 = vmatpush1.msra.mxu0 %v1629
        %1656 = vmatprep.subr.mxu0 0.0
        %1657 = vmatpush1.msra.mxu0 %v1628
        %1658 = vmatprep.subr.mxu0 0.0
        %1659 = vmatpush1.msra.mxu0 %v1627
        %1660 = vmatprep.subr.mxu0 0.0
        %1661 = vmatpush1.msra.mxu0 %v1626
        %1662 = vmatprep.subr.mxu0 0.0
        %1663 = vmatpush1.msra.mxu0 %v1625
        %1664 = vmatprep.subr.mxu0 0.0
        %1665 = vmatpush1.msra.mxu0 %v1624
        %1666 = vmatprep.subr.mxu0 0.0
        %1667 = vmatpush1.msra.mxu0 %v1623
        %1668 = vmatprep.subr.mxu0 0.0
        %1669 = vmatpush1.msra.mxu0 %v1622
        %1670 = vmatprep.subr.mxu0 0.0
        %1671 = vmatpush2.msra.mxu0 0.0
        %1672 = vmatprep.subr.mxu0 0.0
        %1673 = vmatpush2.msra.mxu0 0.0
        %1674 = vmatprep.subr.mxu0 0.0
        %1675 = vmatpush2.msra.mxu0 0.0
        %1676 = vmatprep.subr.mxu0 0.0
        %1677 = vmatpush2.msra.mxu0 0.0
        %1678 = vmatprep.subr.mxu0 0.0
        %1679 = vmatpush2.msra.mxu0 0.0
        %1680 = vmatprep.subr.mxu0 0.0
        %1681 = vmatpush2.msra.mxu0 0.0
        %1682 = vmatprep.subr.mxu0 0.0
        %1683 = vmatpush2.msra.mxu0 0.0
        %1684 = vmatprep.subr.mxu0 0.0
        %1685 = vmatpush2.msra.mxu0 0.0
        %1686 = vmatprep.subr.mxu0 0.0
        %1687 = vmatpush2.msra.mxu0 0.0
        %1688 = vmatprep.subr.mxu0 0.0
        %1689 = vmatpush2.msra.mxu0 0.0
        %1690 = vmatprep.subr.mxu0 0.0
        %1691 = vmatpush2.msra.mxu0 0.0
        %1692 = vmatprep.subr.mxu0 0.0
        %1693 = vmatpush2.msra.mxu0 0.0
        %1694 = vmatprep.subr.mxu0 0.0
        %1695 = vmatpush2.msra.mxu0 0.0
        %1696 = vmatprep.subr.mxu0 0.0
        %1697 = vmatpush2.msra.mxu0 0.0
        %1698 = vmatprep.subr.mxu0 0.0
        %1699 = vmatpush2.msra.mxu0 0.0
        %1700 = vmatprep.subr.mxu0 0.0
        %1701 = vmatpush2.msra.mxu0 0.0
        %1702 = vmatprep.mubr.f32.mxu0 0.0
        %1703 = vmatmul.mubr.f32.gmra.mxu0 %v1619
        %v1704 = vpop.f32.mrf.mxu0
        %v1705 = vadd.f32 %v1376, %v1704
        %v1706 = vpop.f32.mrf.mxu0
        %1707 = vdwg.mxu0
        %v1708 = vld [vmem:[#allocation13] sm:$0xff]
        %v1709 = vld [vmem:[#allocation13 + $0x8] sm:$0xff]
        %v1710 = vld [vmem:[#allocation13 + $0x10] sm:$0xff]
        %v1711 = vld [vmem:[#allocation13 + $0x18] sm:$0xff]
        %v1712 = vld [vmem:[#allocation13 + $0x20] sm:$0xff]
        %v1713 = vld [vmem:[#allocation13 + $0x28] sm:$0xff]
        %v1714 = vld [vmem:[#allocation13 + $0x30] sm:$0xff]
        %v1715 = vld [vmem:[#allocation13 + $0x38] sm:$0xff]
        %v1716 = vld [vmem:[#allocation13 + $0x40] sm:$0xff]
        %v1717 = vld [vmem:[#allocation13 + $0x48] sm:$0xff]
        %v1718 = vld [vmem:[#allocation13 + $0x50] sm:$0xff]
        %v1719 = vld [vmem:[#allocation13 + $0x58] sm:$0xff]
        %v1720 = vld [vmem:[#allocation13 + $0x60] sm:$0xff]
        %v1721 = vld [vmem:[#allocation13 + $0x68] sm:$0xff]
        %v1722 = vld [vmem:[#allocation13 + $0x70] sm:$0xff]
        %v1723 = vld [vmem:[#allocation13 + $0x78] sm:$0xff]
        %v1724 = vld [vmem:[%s15] sm:$0x1]
        %1725 = vmatprep.subr.mxu0 0.0
        %1726 = vmatpush1.msra.mxu0 %v1723
        %1727 = vmatprep.subr.mxu0 0.0
        %1728 = vmatpush1.msra.mxu0 %v1722
        %1729 = vmatprep.subr.mxu0 0.0
        %1730 = vmatpush1.msra.mxu0 %v1721
        %1731 = vmatprep.subr.mxu0 0.0
        %1732 = vmatpush1.msra.mxu0 %v1720
        %1733 = vmatprep.subr.mxu0 0.0
        %1734 = vmatpush1.msra.mxu0 %v1719
        %1735 = vmatprep.subr.mxu0 0.0
        %1736 = vmatpush1.msra.mxu0 %v1718
        %1737 = vmatprep.subr.mxu0 0.0
        %1738 = vmatpush1.msra.mxu0 %v1717
        %1739 = vmatprep.subr.mxu0 0.0
        %1740 = vmatpush1.msra.mxu0 %v1716
        %1741 = vmatprep.subr.mxu0 0.0
        %1742 = vmatpush1.msra.mxu0 %v1715
        %1743 = vmatprep.subr.mxu0 0.0
        %1744 = vmatpush1.msra.mxu0 %v1714
        %1745 = vmatprep.subr.mxu0 0.0
        %1746 = vmatpush1.msra.mxu0 %v1713
        %1747 = vmatprep.subr.mxu0 0.0
        %1748 = vmatpush1.msra.mxu0 %v1712
        %1749 = vmatprep.subr.mxu0 0.0
        %1750 = vmatpush1.msra.mxu0 %v1711
        %1751 = vmatprep.subr.mxu0 0.0
        %1752 = vmatpush1.msra.mxu0 %v1710
        %1753 = vmatprep.subr.mxu0 0.0
        %1754 = vmatpush1.msra.mxu0 %v1709
        %1755 = vmatprep.subr.mxu0 0.0
        %1756 = vmatpush1.msra.mxu0 %v1708
        %1757 = vmatprep.subr.mxu0 0.0
        %1758 = vmatpush2.msra.mxu0 0.0
        %1759 = vmatprep.subr.mxu0 0.0
        %1760 = vmatpush2.msra.mxu0 0.0
        %1761 = vmatprep.subr.mxu0 0.0
        %1762 = vmatpush2.msra.mxu0 0.0
        %1763 = vmatprep.subr.mxu0 0.0
        %1764 = vmatpush2.msra.mxu0 0.0
        %1765 = vmatprep.subr.mxu0 0.0
        %1766 = vmatpush2.msra.mxu0 0.0
        %1767 = vmatprep.subr.mxu0 0.0
        %1768 = vmatpush2.msra.mxu0 0.0
        %1769 = vmatprep.subr.mxu0 0.0
        %1770 = vmatpush2.msra.mxu0 0.0
        %1771 = vmatprep.subr.mxu0 0.0
        %1772 = vmatpush2.msra.mxu0 0.0
        %1773 = vmatprep.subr.mxu0 0.0
        %1774 = vmatpush2.msra.mxu0 0.0
        %1775 = vmatprep.subr.mxu0 0.0
        %1776 = vmatpush2.msra.mxu0 0.0
        %1777 = vmatprep.subr.mxu0 0.0
        %1778 = vmatpush2.msra.mxu0 0.0
        %1779 = vmatprep.subr.mxu0 0.0
        %1780 = vmatpush2.msra.mxu0 0.0
        %1781 = vmatprep.subr.mxu0 0.0
        %1782 = vmatpush2.msra.mxu0 0.0
        %1783 = vmatprep.subr.mxu0 0.0
        %1784 = vmatpush2.msra.mxu0 0.0
        %1785 = vmatprep.subr.mxu0 0.0
        %1786 = vmatpush2.msra.mxu0 0.0
        %1787 = vmatprep.subr.mxu0 0.0
        %1788 = vmatpush2.msra.mxu0 0.0
        %1789 = vmatprep.mubr.f32.mxu0 0.0
        %1790 = vmatmul.mubr.f32.gmra.mxu0 %v1705
        %v1791 = vpop.f32.mrf.mxu0
        %v1792 = vadd.f32 %v1724, %v1791
        %v1793 = vpop.f32.mrf.mxu0
        %1794 = vdwg.mxu0
        %vm1795 = vcmp.eq.s32.totalorder %v934, 64
        %v1796 = vsel %vm1795, %v1792, 0.0
        %vm1797 = vcmask 1040384
        %v1798 = vsel %vm1797, %v1796, 0.0
        %1799 = vadd.xlane.f32.xlu0 %v1798
        %v1800 = vpop.xlane.xlu0 %1799
        %v1801 = vsub.f32 0.0, %v1800
        %v1802 = vmul.f32 %v1801, 1.442695
        %v1803 = vpow.pop %v1802
        %v1804 = vadd.f32 %v1803, 1.0
        %v1805 = vrcp.pop %v1804
        %vm1806 = vcmp.lt.s32.totalorder %v934, 64
        %v1807 = vsel %vm1806, %v1792, -3.4028235e+38
        %v1808 = vsel %vm1797, %v1807, -inf
        %1809 = vmax.xlane.f32.xlu0 %v1808
        %v1810 = vpop.xlane.xlu0 %1809
        %v1811 = vsub.f32 %v1807, %v1810
        %v1812 = vmul.f32 %v1811, 1.442695
        %v1813 = vpow.pop %v1812
        %v1814 = vsel %vm1797, %v1813, 0.0
        %1815 = vadd.xlane.f32.xlu0 %v1814
        %v1816 = vpop.xlane.xlu0 %1815
        %v1817 = vrcp.pop %v1816
        %v1818 = vmul.f32 %v1813, %v1817
        %v1819 = vsub.f32 1.0, %v1805
        %v1820 = vmul.f32 %v1819, %v1548
        %v1821 = vmul.f32 %v1820, %v931
        %v1822 = vmul.f32 %v1805, %v1818
        %v1824 = vsel %vm1305, %v1821, 0
        %1826 = vmatprep.subr.mxu0 0.0
        %1827 = vmatpush1.msra.mxu0 0.0
        %1828 = vmatprep.subr.mxu0 0.0
        %1829 = vmatpush1.msra.mxu0 0.0
        %1830 = vmatprep.subr.mxu0 0.0
        %1831 = vmatpush1.msra.mxu0 0.0
        %1832 = vmatprep.subr.mxu0 0.0
        %1833 = vmatpush1.msra.mxu0 0.0
        %1834 = vmatprep.subr.mxu0 0.0
        %1835 = vmatpush1.msra.mxu0 0.0
        %1836 = vmatprep.subr.mxu0 0.0
        %1837 = vmatpush1.msra.mxu0 0.0
        %1838 = vmatprep.subr.mxu0 0.0
        %1839 = vmatpush1.msra.mxu0 0.0
        %1840 = vmatprep.subr.mxu0 0.0
        %1841 = vmatpush1.msra.mxu0 0.0
        %1842 = vmatprep.subr.mxu0 0.0
        %1843 = vmatpush1.msra.mxu0 0.0
        %1844 = vmatprep.subr.mxu0 0.0
        %1845 = vmatpush1.msra.mxu0 0.0
        %1846 = vmatprep.subr.mxu0 0.0
        %1847 = vmatpush1.msra.mxu0 0.0
        %1848 = vmatprep.subr.mxu0 0.0
        %1849 = vmatpush1.msra.mxu0 0.0
        %1850 = vmatprep.subr.mxu0 0.0
        %1851 = vmatpush1.msra.mxu0 0.0
        %1852 = vmatprep.subr.mxu0 0.0
        %1853 = vmatpush1.msra.mxu0 0.0
        %1854 = vmatprep.subr.mxu0 0.0
        %1855 = vmatpush1.msra.mxu0 0.0
        %1856 = vmatprep.subr.mxu0 0.0
        %1857 = vmatpush1.msra.mxu0 %v941
        %1858 = vmatprep.subr.mxu0 0.0
        %1859 = vmatpush2.msra.mxu0 0.0
        %1860 = vmatprep.subr.mxu0 0.0
        %1861 = vmatpush2.msra.mxu0 0.0
        %1862 = vmatprep.subr.mxu0 0.0
        %1863 = vmatpush2.msra.mxu0 0.0
        %1864 = vmatprep.subr.mxu0 0.0
        %1865 = vmatpush2.msra.mxu0 0.0
        %1866 = vmatprep.subr.mxu0 0.0
        %1867 = vmatpush2.msra.mxu0 0.0
        %1868 = vmatprep.subr.mxu0 0.0
        %1869 = vmatpush2.msra.mxu0 0.0
        %1870 = vmatprep.subr.mxu0 0.0
        %1871 = vmatpush2.msra.mxu0 0.0
        %1872 = vmatprep.subr.mxu0 0.0
        %1873 = vmatpush2.msra.mxu0 0.0
        %1874 = vmatprep.subr.mxu0 0.0
        %1875 = vmatpush2.msra.mxu0 0.0
        %1876 = vmatprep.subr.mxu0 0.0
        %1877 = vmatpush2.msra.mxu0 0.0
        %1878 = vmatprep.subr.mxu0 0.0
        %1879 = vmatpush2.msra.mxu0 0.0
        %1880 = vmatprep.subr.mxu0 0.0
        %1881 = vmatpush2.msra.mxu0 0.0
        %1882 = vmatprep.subr.mxu0 0.0
        %1883 = vmatpush2.msra.mxu0 0.0
        %1884 = vmatprep.subr.mxu0 0.0
        %1885 = vmatpush2.msra.mxu0 0.0
        %1886 = vmatprep.subr.mxu0 0.0
        %1887 = vmatpush2.msra.mxu0 0.0
        %1888 = vmatprep.subr.mxu0 0.0
        %1889 = vmatpush2.msra.mxu0 0.0
        %1890 = vmatprep.mubr.f32.mxu0 0.0
        %1891 = vmatmul.mubr.f32.gmra.mxu0 %v1824
        %v1892 = vpop.f32.mrf.mxu0
        %v1893 = vadd.f32 0.0, %v1892
        %v1894 = vpop.f32.mrf.mxu0
        %1895 = vdwg.mxu0
        %v1896 = vadd.f32 %v1822, %v1893
        %vm1897 = vcmp.lt.s32.totalorder %v934, 68
        %v1898 = vsel %vm1897, %v1896, -1.0
        %v1899 = vsel %vm1797, %v1898, -inf
        %1900 = vmax.xlane.f32.xlu0 %v1899
        %v1901 = vpop.xlane.xlu0 %1900
        %vm1902 = vcmp.ge.f32.partialorder %v1898, %v1901
        %v1903 = vsel %vm1902, %v935, 128.0
        %v1904 = vsel %vm1797, %v1903, inf
        %1905 = vmin.xlane.f32.xlu0 %v1904
        %v1906 = vpop.xlane.xlu0 %1905
        %vm1907 = vcmp.eq.s32.totalorder %v934, 1
        %v1908 = vsel %vm1907, 1, 0
        %v1909 = vcvt.s32.f32 %v1908
        %v1910 = vmul.f32 %v1906, %v1909
        %v1911 = vadd.f32 %v946, %v1910
        %v1912 = vmin.f32 %v1906, 63.0
        %vm1913 = vcmp.eq.f32.partialorder %v935, %v1912
        %v1914 = vsel %vm1913, 1, 0
        %v1915 = vcvt.s32.f32 %v1914
        %v1916 = vld [vmem:[%s4] sm:$0xff]
        %v1917 = vld [vmem:[%s4 + $0x8] sm:$0xff]
        %v1918 = vld [vmem:[%s4 + $0x10] sm:$0xff]
        %v1919 = vld [vmem:[%s4 + $0x18] sm:$0xff]
        %v1920 = vld [vmem:[%s4 + $0x20] sm:$0xff]
        %v1921 = vld [vmem:[%s4 + $0x28] sm:$0xff]
        %v1922 = vld [vmem:[%s4 + $0x30] sm:$0xff]
        %v1923 = vld [vmem:[%s4 + $0x38] sm:$0xff]
        %v1924 = vld [vmem:[%s4 + $0x40] sm:$0xff]
        %v1925 = vld [vmem:[%s4 + $0x48] sm:$0xff]
        %v1926 = vld [vmem:[%s4 + $0x50] sm:$0xff]
        %v1927 = vld [vmem:[%s4 + $0x58] sm:$0xff]
        %v1928 = vld [vmem:[%s4 + $0x60] sm:$0xff]
        %v1929 = vld [vmem:[%s4 + $0x68] sm:$0xff]
        %v1930 = vld [vmem:[%s4 + $0x70] sm:$0xff]
        %v1931 = vld [vmem:[%s4 + $0x78] sm:$0xff]
        %1932 = vmatprep.subr.mxu0 0.0
        %1933 = vmatpush1.msra.mxu0 %v1931
        %1934 = vmatprep.subr.mxu0 0.0
        %1935 = vmatpush1.msra.mxu0 %v1930
        %1936 = vmatprep.subr.mxu0 0.0
        %1937 = vmatpush1.msra.mxu0 %v1929
        %1938 = vmatprep.subr.mxu0 0.0
        %1939 = vmatpush1.msra.mxu0 %v1928
        %1940 = vmatprep.subr.mxu0 0.0
        %1941 = vmatpush1.msra.mxu0 %v1927
        %1942 = vmatprep.subr.mxu0 0.0
        %1943 = vmatpush1.msra.mxu0 %v1926
        %1944 = vmatprep.subr.mxu0 0.0
        %1945 = vmatpush1.msra.mxu0 %v1925
        %1946 = vmatprep.subr.mxu0 0.0
        %1947 = vmatpush1.msra.mxu0 %v1924
        %1948 = vmatprep.subr.mxu0 0.0
        %1949 = vmatpush1.msra.mxu0 %v1923
        %1950 = vmatprep.subr.mxu0 0.0
        %1951 = vmatpush1.msra.mxu0 %v1922
        %1952 = vmatprep.subr.mxu0 0.0
        %1953 = vmatpush1.msra.mxu0 %v1921
        %1954 = vmatprep.subr.mxu0 0.0
        %1955 = vmatpush1.msra.mxu0 %v1920
        %1956 = vmatprep.subr.mxu0 0.0
        %1957 = vmatpush1.msra.mxu0 %v1919
        %1958 = vmatprep.subr.mxu0 0.0
        %1959 = vmatpush1.msra.mxu0 %v1918
        %1960 = vmatprep.subr.mxu0 0.0
        %1961 = vmatpush1.msra.mxu0 %v1917
        %1962 = vmatprep.subr.mxu0 0.0
        %1963 = vmatpush1.msra.mxu0 %v1916
        %1964 = vmatprep.subr.mxu0 0.0
        %1965 = vmatpush2.msra.mxu0 0.0
        %1966 = vmatprep.subr.mxu0 0.0
        %1967 = vmatpush2.msra.mxu0 0.0
        %1968 = vmatprep.subr.mxu0 0.0
        %1969 = vmatpush2.msra.mxu0 0.0
        %1970 = vmatprep.subr.mxu0 0.0
        %1971 = vmatpush2.msra.mxu0 0.0
        %1972 = vmatprep.subr.mxu0 0.0
        %1973 = vmatpush2.msra.mxu0 0.0
        %1974 = vmatprep.subr.mxu0 0.0
        %1975 = vmatpush2.msra.mxu0 0.0
        %1976 = vmatprep.subr.mxu0 0.0
        %1977 = vmatpush2.msra.mxu0 0.0
        %1978 = vmatprep.subr.mxu0 0.0
        %1979 = vmatpush2.msra.mxu0 0.0
        %1980 = vmatprep.subr.mxu0 0.0
        %1981 = vmatpush2.msra.mxu0 0.0
        %1982 = vmatprep.subr.mxu0 0.0
        %1983 = vmatpush2.msra.mxu0 0.0
        %1984 = vmatprep.subr.mxu0 0.0
        %1985 = vmatpush2.msra.mxu0 0.0
        %1986 = vmatprep.subr.mxu0 0.0
        %1987 = vmatpush2.msra.mxu0 0.0
        %1988 = vmatprep.subr.mxu0 0.0
        %1989 = vmatpush2.msra.mxu0 0.0
        %1990 = vmatprep.subr.mxu0 0.0
        %1991 = vmatpush2.msra.mxu0 0.0
        %1992 = vmatprep.subr.mxu0 0.0
        %1993 = vmatpush2.msra.mxu0 0.0
        %1994 = vmatprep.subr.mxu0 0.0
        %1995 = vmatpush2.msra.mxu0 0.0
        %1996 = vmatprep.mubr.f32.mxu0 0.0
        %1997 = vmatmul.mubr.f32.gmra.mxu0 %v1915
        %v1998 = vpop.f32.mrf.mxu0
        %v1999 = vadd.f32 0.0, %v1998
        %v2000 = vpop.f32.mrf.mxu0
        %2001 = vdwg.mxu0
        %2002 = vmatprep.subr.mxu0 0.0
        %2003 = vmatpush1.msra.mxu0 %v962
        %2004 = vmatprep.subr.mxu0 0.0
        %2005 = vmatpush1.msra.mxu0 %v961
        %2006 = vmatprep.subr.mxu0 0.0
        %2007 = vmatpush1.msra.mxu0 %v960
        %2008 = vmatprep.subr.mxu0 0.0
        %2009 = vmatpush1.msra.mxu0 %v959
        %2010 = vmatprep.subr.mxu0 0.0
        %2011 = vmatpush1.msra.mxu0 %v958
        %2012 = vmatprep.subr.mxu0 0.0
        %2013 = vmatpush1.msra.mxu0 %v957
        %2014 = vmatprep.subr.mxu0 0.0
        %2015 = vmatpush1.msra.mxu0 %v956
        %2016 = vmatprep.subr.mxu0 0.0
        %2017 = vmatpush1.msra.mxu0 %v955
        %2018 = vmatprep.subr.mxu0 0.0
        %2019 = vmatpush1.msra.mxu0 %v954
        %2020 = vmatprep.subr.mxu0 0.0
        %2021 = vmatpush1.msra.mxu0 %v953
        %2022 = vmatprep.subr.mxu0 0.0
        %2023 = vmatpush1.msra.mxu0 %v952
        %2024 = vmatprep.subr.mxu0 0.0
        %2025 = vmatpush1.msra.mxu0 %v951
        %2026 = vmatprep.subr.mxu0 0.0
        %2027 = vmatpush1.msra.mxu0 %v950
        %2028 = vmatprep.subr.mxu0 0.0
        %2029 = vmatpush1.msra.mxu0 %v949
        %2030 = vmatprep.subr.mxu0 0.0
        %2031 = vmatpush1.msra.mxu0 %v948
        %2032 = vmatprep.subr.mxu0 0.0
        %2033 = vmatpush1.msra.mxu0 %v947
        %2034 = vmatprep.subr.mxu0 0.0
        %2035 = vmatpush2.msra.mxu0 0.0
        %2036 = vmatprep.subr.mxu0 0.0
        %2037 = vmatpush2.msra.mxu0 0.0
        %2038 = vmatprep.subr.mxu0 0.0
        %2039 = vmatpush2.msra.mxu0 0.0
        %2040 = vmatprep.subr.mxu0 0.0
        %2041 = vmatpush2.msra.mxu0 0.0
        %2042 = vmatprep.subr.mxu0 0.0
        %2043 = vmatpush2.msra.mxu0 0.0
        %2044 = vmatprep.subr.mxu0 0.0
        %2045 = vmatpush2.msra.mxu0 0.0
        %2046 = vmatprep.subr.mxu0 0.0
        %2047 = vmatpush2.msra.mxu0 0.0
        %2048 = vmatprep.subr.mxu0 0.0
        %2049 = vmatpush2.msra.mxu0 0.0
        %2050 = vmatprep.subr.mxu0 0.0
        %2051 = vmatpush2.msra.mxu0 0.0
        %2052 = vmatprep.subr.mxu0 0.0
        %2053 = vmatpush2.msra.mxu0 0.0
        %2054 = vmatprep.subr.mxu0 0.0
        %2055 = vmatpush2.msra.mxu0 0.0
        %2056 = vmatprep.subr.mxu0 0.0
        %2057 = vmatpush2.msra.mxu0 0.0
        %2058 = vmatprep.subr.mxu0 0.0
        %2059 = vmatpush2.msra.mxu0 0.0
        %2060 = vmatprep.subr.mxu0 0.0
        %2061 = vmatpush2.msra.mxu0 0.0
        %2062 = vmatprep.subr.mxu0 0.0
        %2063 = vmatpush2.msra.mxu0 0.0
        %2064 = vmatprep.subr.mxu0 0.0
        %2065 = vmatpush2.msra.mxu0 0.0
        %2066 = vmatprep.mubr.f32.mxu0 0.0
        %2067 = vmatmul.mubr.f32.gmra.mxu0 %v1999
        %v2068 = vpop.f32.mrf.mxu0
        %v2069 = vadd.f32 0.0, %v2068
        %v2070 = vpop.f32.mrf.mxu0
        %2071 = vdwg.mxu0
        %vm2072 = vcmp.eq.s32.totalorder %v943, 1
        %v2073 = vsel %vm2072, 1, 0
        %v2074 = vcvt.s32.f32 %v2073
        %2075 = vmatprep.subr.mxu0 0.0
        %2076 = vmatpush1.msra.mxu0 %v1051
        %2077 = vmatprep.subr.mxu0 0.0
        %2078 = vmatpush1.msra.mxu0 %v1050
        %2079 = vmatprep.subr.mxu0 0.0
        %2080 = vmatpush1.msra.mxu0 %v1049
        %2081 = vmatprep.subr.mxu0 0.0
        %2082 = vmatpush1.msra.mxu0 %v1048
        %2083 = vmatprep.subr.mxu0 0.0
        %2084 = vmatpush1.msra.mxu0 %v1047
        %2085 = vmatprep.subr.mxu0 0.0
        %2086 = vmatpush1.msra.mxu0 %v1046
        %2087 = vmatprep.subr.mxu0 0.0
        %2088 = vmatpush1.msra.mxu0 %v1045
        %2089 = vmatprep.subr.mxu0 0.0
        %2090 = vmatpush1.msra.mxu0 %v1044
        %2091 = vmatprep.subr.mxu0 0.0
        %2092 = vmatpush1.msra.mxu0 %v1043
        %2093 = vmatprep.subr.mxu0 0.0
        %2094 = vmatpush1.msra.mxu0 %v1042
        %2095 = vmatprep.subr.mxu0 0.0
        %2096 = vmatpush1.msra.mxu0 %v1041
        %2097 = vmatprep.subr.mxu0 0.0
        %2098 = vmatpush1.msra.mxu0 %v1040
        %2099 = vmatprep.subr.mxu0 0.0
        %2100 = vmatpush1.msra.mxu0 %v1039
        %2101 = vmatprep.subr.mxu0 0.0
        %2102 = vmatpush1.msra.mxu0 %v1038
        %2103 = vmatprep.subr.mxu0 0.0
        %2104 = vmatpush1.msra.mxu0 %v1037
        %2105 = vmatprep.subr.mxu0 0.0
        %2106 = vmatpush1.msra.mxu0 %v1036
        %2107 = vmatprep.subr.mxu0 0.0
        %2108 = vmatpush2.msra.mxu0 0.0
        %2109 = vmatprep.subr.mxu0 0.0
        %2110 = vmatpush2.msra.mxu0 0.0
        %2111 = vmatprep.subr.mxu0 0.0
        %2112 = vmatpush2.msra.mxu0 0.0
        %2113 = vmatprep.subr.mxu0 0.0
        %2114 = vmatpush2.msra.mxu0 0.0
        %2115 = vmatprep.subr.mxu0 0.0
        %2116 = vmatpush2.msra.mxu0 0.0
        %2117 = vmatprep.subr.mxu0 0.0
        %2118 = vmatpush2.msra.mxu0 0.0
        %2119 = vmatprep.subr.mxu0 0.0
        %2120 = vmatpush2.msra.mxu0 0.0
        %2121 = vmatprep.subr.mxu0 0.0
        %2122 = vmatpush2.msra.mxu0 0.0
        %2123 = vmatprep.subr.mxu0 0.0
        %2124 = vmatpush2.msra.mxu0 0.0
        %2125 = vmatprep.subr.mxu0 0.0
        %2126 = vmatpush2.msra.mxu0 0.0
        %2127 = vmatprep.subr.mxu0 0.0
        %2128 = vmatpush2.msra.mxu0 0.0
        %2129 = vmatprep.subr.mxu0 0.0
        %2130 = vmatpush2.msra.mxu0 0.0
        %2131 = vmatprep.subr.mxu0 0.0
        %2132 = vmatpush2.msra.mxu0 0.0
        %2133 = vmatprep.subr.mxu0 0.0
        %2134 = vmatpush2.msra.mxu0 0.0
        %2135 = vmatprep.subr.mxu0 0.0
        %2136 = vmatpush2.msra.mxu0 0.0
        %2137 = vmatprep.subr.mxu0 0.0
        %2138 = vmatpush2.msra.mxu0 0.0
        %2139 = vmatprep.mubr.f32.mxu0 0.0
        %2140 = vmatmul.mubr.f32.gmra.mxu0 %v1999
        %v2141 = vpop.f32.mrf.mxu0
        %v2142 = vadd.f32 0.0, %v2141
        %v2143 = vpop.f32.mrf.mxu0
        %2144 = vdwg.mxu0
        %v2145 = vlaneseq
        %v2146 = vshrl.u32 %v2145, 7
        %v2147 = vsub.s32 0, %v2146
        %v2148 = vrot.slane %v2142, %v2147
        %v2149 = vmul.f32 %v2074, %v2148
        %v2150 = vadd.f32 %v1127, %v2149
        %2151 = vmatprep.subr.mxu0 0.0
        %2152 = vmatpush1.msra.mxu0 %v1143
        %2153 = vmatprep.subr.mxu0 0.0
        %2154 = vmatpush1.msra.mxu0 %v1142
        %2155 = vmatprep.subr.mxu0 0.0
        %2156 = vmatpush1.msra.mxu0 %v1141
        %2157 = vmatprep.subr.mxu0 0.0
        %2158 = vmatpush1.msra.mxu0 %v1140
        %2159 = vmatprep.subr.mxu0 0.0
        %2160 = vmatpush1.msra.mxu0 %v1139
        %2161 = vmatprep.subr.mxu0 0.0
        %2162 = vmatpush1.msra.mxu0 %v1138
        %2163 = vmatprep.subr.mxu0 0.0
        %2164 = vmatpush1.msra.mxu0 %v1137
        %2165 = vmatprep.subr.mxu0 0.0
        %2166 = vmatpush1.msra.mxu0 %v1136
        %2167 = vmatprep.subr.mxu0 0.0
        %2168 = vmatpush1.msra.mxu0 %v1135
        %2169 = vmatprep.subr.mxu0 0.0
        %2170 = vmatpush1.msra.mxu0 %v1134
        %2171 = vmatprep.subr.mxu0 0.0
        %2172 = vmatpush1.msra.mxu0 %v1133
        %2173 = vmatprep.subr.mxu0 0.0
        %2174 = vmatpush1.msra.mxu0 %v1132
        %2175 = vmatprep.subr.mxu0 0.0
        %2176 = vmatpush1.msra.mxu0 %v1131
        %2177 = vmatprep.subr.mxu0 0.0
        %2178 = vmatpush1.msra.mxu0 %v1130
        %2179 = vmatprep.subr.mxu0 0.0
        %2180 = vmatpush1.msra.mxu0 %v1129
        %2181 = vmatprep.subr.mxu0 0.0
        %2182 = vmatpush1.msra.mxu0 %v1128
        %2183 = vmatprep.subr.mxu0 0.0
        %2184 = vmatpush2.msra.mxu0 0.0
        %2185 = vmatprep.subr.mxu0 0.0
        %2186 = vmatpush2.msra.mxu0 0.0
        %2187 = vmatprep.subr.mxu0 0.0
        %2188 = vmatpush2.msra.mxu0 0.0
        %2189 = vmatprep.subr.mxu0 0.0
        %2190 = vmatpush2.msra.mxu0 0.0
        %2191 = vmatprep.subr.mxu0 0.0
        %2192 = vmatpush2.msra.mxu0 0.0
        %2193 = vmatprep.subr.mxu0 0.0
        %2194 = vmatpush2.msra.mxu0 0.0
        %2195 = vmatprep.subr.mxu0 0.0
        %2196 = vmatpush2.msra.mxu0 0.0
        %2197 = vmatprep.subr.mxu0 0.0
        %2198 = vmatpush2.msra.mxu0 0.0
        %2199 = vmatprep.subr.mxu0 0.0
        %2200 = vmatpush2.msra.mxu0 0.0
        %2201 = vmatprep.subr.mxu0 0.0
        %2202 = vmatpush2.msra.mxu0 0.0
        %2203 = vmatprep.subr.mxu0 0.0
        %2204 = vmatpush2.msra.mxu0 0.0
        %2205 = vmatprep.subr.mxu0 0.0
        %2206 = vmatpush2.msra.mxu0 0.0
        %2207 = vmatprep.subr.mxu0 0.0
        %2208 = vmatpush2.msra.mxu0 0.0
        %2209 = vmatprep.subr.mxu0 0.0
        %2210 = vmatpush2.msra.mxu0 0.0
        %2211 = vmatprep.subr.mxu0 0.0
        %2212 = vmatpush2.msra.mxu0 0.0
        %2213 = vmatprep.subr.mxu0 0.0
        %2214 = vmatpush2.msra.mxu0 0.0
        %2215 = vmatprep.mubr.f32.mxu0 0.0
        %2216 = vmatmul.mubr.f32.gmra.mxu0 %v1999
        %v2217 = vpop.f32.mrf.mxu0
        %v2218 = vadd.f32 0.0, %v2217
        %v2219 = vpop.f32.mrf.mxu0
        %2220 = vdwg.mxu0
        %v2221 = vlaneseq
        %v2222 = vshrl.u32 %v2221, 7
        %v2223 = vsub.s32 0, %v2222
        %v2224 = vrot.slane %v2218, %v2223
        %v2225 = vmul.f32 %v2074, %v2224
        %v2226 = vadd.f32 %v1219, %v2225
        %2227 = vmatprep.subr.mxu0 0.0
        %2228 = vmatpush1.xpose.msra.mxu0 0.0
        %2229 = vmatprep.subr.mxu0 0.0
        %2230 = vmatpush1.xpose.msra.mxu0 0.0
        %2231 = vmatprep.subr.mxu0 0.0
        %2232 = vmatpush1.xpose.msra.mxu0 0.0
        %2233 = vmatprep.subr.mxu0 0.0
        %2234 = vmatpush1.xpose.msra.mxu0 0.0
        %2235 = vmatprep.subr.mxu0 0.0
        %2236 = vmatpush1.xpose.msra.mxu0 0.0
        %2237 = vmatprep.subr.mxu0 0.0
        %2238 = vmatpush1.xpose.msra.mxu0 0.0
        %2239 = vmatprep.subr.mxu0 0.0
        %2240 = vmatpush1.xpose.msra.mxu0 0.0
        %2241 = vmatprep.subr.mxu0 0.0
        %2242 = vmatpush1.xpose.msra.mxu0 0.0
        %2243 = vmatprep.subr.mxu0 0.0
        %2244 = vmatpush1.xpose.msra.mxu0 0.0
        %2245 = vmatprep.subr.mxu0 0.0
        %2246 = vmatpush1.xpose.msra.mxu0 0.0
        %2247 = vmatprep.subr.mxu0 0.0
        %2248 = vmatpush1.xpose.msra.mxu0 0.0
        %2249 = vmatprep.subr.mxu0 0.0
        %2250 = vmatpush1.xpose.msra.mxu0 0.0
        %2251 = vmatprep.subr.mxu0 0.0
        %2252 = vmatpush1.xpose.msra.mxu0 0.0
        %2253 = vmatprep.subr.mxu0 0.0
        %2254 = vmatpush1.xpose.msra.mxu0 0.0
        %2255 = vmatprep.subr.mxu0 0.0
        %2256 = vmatpush1.xpose.msra.mxu0 0.0
        %2257 = vmatprep.subr.mxu0 0.0
        %2258 = vmatpush1.xpose.msra.mxu0 %v2150
        %2259 = vmatprep.subr.mxu0 0.0
        %2260 = vmatpush2.xpose.msra.mxu0 0.0
        %2261 = vmatprep.subr.mxu0 0.0
        %2262 = vmatpush2.xpose.msra.mxu0 0.0
        %2263 = vmatprep.subr.mxu0 0.0
        %2264 = vmatpush2.xpose.msra.mxu0 0.0
        %2265 = vmatprep.subr.mxu0 0.0
        %2266 = vmatpush2.xpose.msra.mxu0 0.0
        %2267 = vmatprep.subr.mxu0 0.0
        %2268 = vmatpush2.xpose.msra.mxu0 0.0
        %2269 = vmatprep.subr.mxu0 0.0
        %2270 = vmatpush2.xpose.msra.mxu0 0.0
        %2271 = vmatprep.subr.mxu0 0.0
        %2272 = vmatpush2.xpose.msra.mxu0 0.0
        %2273 = vmatprep.subr.mxu0 0.0
        %2274 = vmatpush2.xpose.msra.mxu0 0.0
        %2275 = vmatprep.subr.mxu0 0.0
        %2276 = vmatpush2.xpose.msra.mxu0 0.0
        %2277 = vmatprep.subr.mxu0 0.0
        %2278 = vmatpush2.xpose.msra.mxu0 0.0
        %2279 = vmatprep.subr.mxu0 0.0
        %2280 = vmatpush2.xpose.msra.mxu0 0.0
        %2281 = vmatprep.subr.mxu0 0.0
        %2282 = vmatpush2.xpose.msra.mxu0 0.0
        %2283 = vmatprep.subr.mxu0 0.0
        %2284 = vmatpush2.xpose.msra.mxu0 0.0
        %2285 = vmatprep.subr.mxu0 0.0
        %2286 = vmatpush2.xpose.msra.mxu0 0.0
        %2287 = vmatprep.subr.mxu0 0.0
        %2288 = vmatpush2.xpose.msra.mxu0 0.0
        %2289 = vmatprep.subr.mxu0 0.0
        %2290 = vmatpush2.xpose.msra.mxu0 0.0
        %2291 = vmatprep.mubr.f32.mxu0 0.0
        %2292 = vmatmul.mubr.f32.gmra.mxu0 %v2069
        %v2293 = vpop.f32.mrf.mxu0
        %v2294 = vadd.f32 0.0, %v2293
        %v2295 = vpop.f32.mrf.mxu0
        %2296 = vdwg.mxu0
        %v2297 = vmul.f32 %v2294, 0.17677669
        %vm2298 = vcmp.le.s32.totalorder %v934, 1
        %v2299 = vsel %vm2298, %v2297, -3.4028235e+38
        %v2300 = vsel %vm1293, %v2299, -inf
        %2301 = vmax.xlane.f32.xlu0 %v2300
        %v2302 = vpop.xlane.xlu0 %2301
        %v2303 = vsub.f32 %v2299, %v2302
        %v2304 = vmul.f32 %v2303, 1.442695
        %v2305 = vpow.pop %v2304
        %v2306 = vsel %vm1293, %v2305, 0.0
        %2307 = vadd.xlane.f32.xlu0 %v2306
        %v2308 = vpop.xlane.xlu0 %2307
        %v2309 = vrcp.pop %v2308
        %v2310 = vmul.f32 %v2305, %v2309
        %v2312 = vsel %vm1305, %v2310, 0
        %2314 = vmatprep.subr.mxu0 0.0
        %2315 = vmatpush1.msra.mxu0 0.0
        %2316 = vmatprep.subr.mxu0 0.0
        %2317 = vmatpush1.msra.mxu0 0.0
        %2318 = vmatprep.subr.mxu0 0.0
        %2319 = vmatpush1.msra.mxu0 0.0
        %2320 = vmatprep.subr.mxu0 0.0
        %2321 = vmatpush1.msra.mxu0 0.0
        %2322 = vmatprep.subr.mxu0 0.0
        %2323 = vmatpush1.msra.mxu0 0.0
        %2324 = vmatprep.subr.mxu0 0.0
        %2325 = vmatpush1.msra.mxu0 0.0
        %2326 = vmatprep.subr.mxu0 0.0
        %2327 = vmatpush1.msra.mxu0 0.0
        %2328 = vmatprep.subr.mxu0 0.0
        %2329 = vmatpush1.msra.mxu0 0.0
        %2330 = vmatprep.subr.mxu0 0.0
        %2331 = vmatpush1.msra.mxu0 0.0
        %2332 = vmatprep.subr.mxu0 0.0
        %2333 = vmatpush1.msra.mxu0 0.0
        %2334 = vmatprep.subr.mxu0 0.0
        %2335 = vmatpush1.msra.mxu0 0.0
        %2336 = vmatprep.subr.mxu0 0.0
        %2337 = vmatpush1.msra.mxu0 0.0
        %2338 = vmatprep.subr.mxu0 0.0
        %2339 = vmatpush1.msra.mxu0 0.0
        %2340 = vmatprep.subr.mxu0 0.0
        %2341 = vmatpush1.msra.mxu0 0.0
        %2342 = vmatprep.subr.mxu0 0.0
        %2343 = vmatpush1.msra.mxu0 0.0
        %2344 = vmatprep.subr.mxu0 0.0
        %2345 = vmatpush1.msra.mxu0 %v2226
        %2346 = vmatprep.subr.mxu0 0.0
        %2347 = vmatpush2.msra.mxu0 0.0
        %2348 = vmatprep.subr.mxu0 0.0
        %2349 = vmatpush2.msra.mxu0 0.0
        %2350 = vmatprep.subr.mxu0 0.0
        %2351 = vmatpush2.msra.mxu0 0.0
        %2352 = vmatprep.subr.mxu0 0.0
        %2353 = vmatpush2.msra.mxu0 0.0
        %2354 = vmatprep.subr.mxu0 0.0
        %2355 = vmatpush2.msra.mxu0 0.0
        %2356 = vmatprep.subr.mxu0 0.0
        %2357 = vmatpush2.msra.mxu0 0.0
        %2358 = vmatprep.subr.mxu0 0.0
        %2359 = vmatpush2.msra.mxu0 0.0
        %2360 = vmatprep.subr.mxu0 0.0
        %2361 = vmatpush2.msra.mxu0 0.0
        %2362 = vmatprep.subr.mxu0 0.0
        %2363 = vmatpush2.msra.mxu0 0.0
        %2364 = vmatprep.subr.mxu0 0.0
        %2365 = vmatpush2.msra.mxu0 0.0
        %2366 = vmatprep.subr.mxu0 0.0
        %2367 = vmatpush2.msra.mxu0 0.0
        %2368 = vmatprep.subr.mxu0 0.0
        %2369 = vmatpush2.msra.mxu0 0.0
        %2370 = vmatprep.subr.mxu0 0.0
        %2371 = vmatpush2.msra.mxu0 0.0
        %2372 = vmatprep.subr.mxu0 0.0
        %2373 = vmatpush2.msra.mxu0 0.0
        %2374 = vmatprep.subr.mxu0 0.0
        %2375 = vmatpush2.msra.mxu0 0.0
        %2376 = vmatprep.subr.mxu0 0.0
        %2377 = vmatpush2.msra.mxu0 0.0
        %2378 = vmatprep.mubr.f32.mxu0 0.0
        %2379 = vmatmul.mubr.f32.gmra.mxu0 %v2312
        %v2380 = vpop.f32.mrf.mxu0
        %v2381 = vadd.f32 %v1999, %v2380
        %v2382 = vpop.f32.mrf.mxu0
        %2383 = vdwg.mxu0
        %2384 = vmatprep.subr.mxu0 0.0
        %2385 = vmatpush1.msra.mxu0 %v1394
        %2386 = vmatprep.subr.mxu0 0.0
        %2387 = vmatpush1.msra.mxu0 %v1393
        %2388 = vmatprep.subr.mxu0 0.0
        %2389 = vmatpush1.msra.mxu0 %v1392
        %2390 = vmatprep.subr.mxu0 0.0
        %2391 = vmatpush1.msra.mxu0 %v1391
        %2392 = vmatprep.subr.mxu0 0.0
        %2393 = vmatpush1.msra.mxu0 %v1390
        %2394 = vmatprep.subr.mxu0 0.0
        %2395 = vmatpush1.msra.mxu0 %v1389
        %2396 = vmatprep.subr.mxu0 0.0
        %2397 = vmatpush1.msra.mxu0 %v1388
        %2398 = vmatprep.subr.mxu0 0.0
        %2399 = vmatpush1.msra.mxu0 %v1387
        %2400 = vmatprep.subr.mxu0 0.0
        %2401 = vmatpush1.msra.mxu0 %v1386
        %2402 = vmatprep.subr.mxu0 0.0
        %2403 = vmatpush1.msra.mxu0 %v1385
        %2404 = vmatprep.subr.mxu0 0.0
        %2405 = vmatpush1.msra.mxu0 %v1384
        %2406 = vmatprep.subr.mxu0 0.0
        %2407 = vmatpush1.msra.mxu0 %v1383
        %2408 = vmatprep.subr.mxu0 0.0
        %2409 = vmatpush1.msra.mxu0 %v1382
        %2410 = vmatprep.subr.mxu0 0.0
        %2411 = vmatpush1.msra.mxu0 %v1381
        %2412 = vmatprep.subr.mxu0 0.0
        %2413 = vmatpush1.msra.mxu0 %v1380
        %2414 = vmatprep.subr.mxu0 0.0
        %2415 = vmatpush1.msra.mxu0 %v1379
        %2416 = vmatprep.subr.mxu0 0.0
        %2417 = vmatpush2.msra.mxu0 0.0
        %2418 = vmatprep.subr.mxu0 0.0
        %2419 = vmatpush2.msra.mxu0 0.0
        %2420 = vmatprep.subr.mxu0 0.0
        %2421 = vmatpush2.msra.mxu0 0.0
        %2422 = vmatprep.subr.mxu0 0.0
        %2423 = vmatpush2.msra.mxu0 0.0
        %2424 = vmatprep.subr.mxu0 0.0
        %2425 = vmatpush2.msra.mxu0 0.0
        %2426 = vmatprep.subr.mxu0 0.0
        %2427 = vmatpush2.msra.mxu0 0.0
        %2428 = vmatprep.subr.mxu0 0.0
        %2429 = vmatpush2.msra.mxu0 0.0
        %2430 = vmatprep.subr.mxu0 0.0
        %2431 = vmatpush2.msra.mxu0 0.0
        %2432 = vmatprep.subr.mxu0 0.0
        %2433 = vmatpush2.msra.mxu0 0.0
        %2434 = vmatprep.subr.mxu0 0.0
        %2435 = vmatpush2.msra.mxu0 0.0
        %2436 = vmatprep.subr.mxu0 0.0
        %2437 = vmatpush2.msra.mxu0 0.0
        %2438 = vmatprep.subr.mxu0 0.0
        %2439 = vmatpush2.msra.mxu0 0.0
        %2440 = vmatprep.subr.mxu0 0.0
        %2441 = vmatpush2.msra.mxu0 0.0
        %2442 = vmatprep.subr.mxu0 0.0
        %2443 = vmatpush2.msra.mxu0 0.0
        %2444 = vmatprep.subr.mxu0 0.0
        %2445 = vmatpush2.msra.mxu0 0.0
        %2446 = vmatprep.subr.mxu0 0.0
        %2447 = vmatpush2.msra.mxu0 0.0
        %2448 = vmatprep.mubr.f32.mxu0 0.0
        %2449 = vmatmul.mubr.f32.gmra.mxu0 %v2381
        %v2450 = vpop.f32.mrf.mxu0
        %v2451 = vadd.f32 0.0, %v2450
        %v2452 = vpop.f32.mrf.mxu0
        %2453 = vdwg.mxu0
        %2454 = vmatprep.subr.mxu0 0.0
        %2455 = vmatpush1.xpose.msra.mxu0 0.0
        %2456 = vmatprep.subr.mxu0 0.0
        %2457 = vmatpush1.xpose.msra.mxu0 0.0
        %2458 = vmatprep.subr.mxu0 0.0
        %2459 = vmatpush1.xpose.msra.mxu0 0.0
        %2460 = vmatprep.subr.mxu0 0.0
        %2461 = vmatpush1.xpose.msra.mxu0 0.0
        %2462 = vmatprep.subr.mxu0 0.0
        %2463 = vmatpush1.xpose.msra.mxu0 0.0
        %2464 = vmatprep.subr.mxu0 0.0
        %2465 = vmatpush1.xpose.msra.mxu0 0.0
        %2466 = vmatprep.subr.mxu0 0.0
        %2467 = vmatpush1.xpose.msra.mxu0 0.0
        %2468 = vmatprep.subr.mxu0 0.0
        %2469 = vmatpush1.xpose.msra.mxu0 0.0
        %2470 = vmatprep.subr.mxu0 0.0
        %2471 = vmatpush1.xpose.msra.mxu0 0.0
        %2472 = vmatprep.subr.mxu0 0.0
        %2473 = vmatpush1.xpose.msra.mxu0 0.0
        %2474 = vmatprep.subr.mxu0 0.0
        %2475 = vmatpush1.xpose.msra.mxu0 0.0
        %2476 = vmatprep.subr.mxu0 0.0
        %2477 = vmatpush1.xpose.msra.mxu0 0.0
        %2478 = vmatprep.subr.mxu0 0.0
        %2479 = vmatpush1.xpose.msra.mxu0 0.0
        %2480 = vmatprep.subr.mxu0 0.0
        %2481 = vmatpush1.xpose.msra.mxu0 0.0
        %2482 = vmatprep.subr.mxu0 0.0
        %2483 = vmatpush1.xpose.msra.mxu0 0.0
        %2484 = vmatprep.subr.mxu0 0.0
        %2485 = vmatpush1.xpose.msra.mxu0 %v841
        %2486 = vmatprep.subr.mxu0 0.0
        %2487 = vmatpush2.xpose.msra.mxu0 0.0
        %2488 = vmatprep.subr.mxu0 0.0
        %2489 = vmatpush2.xpose.msra.mxu0 0.0
        %2490 = vmatprep.subr.mxu0 0.0
        %2491 = vmatpush2.xpose.msra.mxu0 0.0
        %2492 = vmatprep.subr.mxu0 0.0
        %2493 = vmatpush2.xpose.msra.mxu0 0.0
        %2494 = vmatprep.subr.mxu0 0.0
        %2495 = vmatpush2.xpose.msra.mxu0 0.0
        %2496 = vmatprep.subr.mxu0 0.0
        %2497 = vmatpush2.xpose.msra.mxu0 0.0
        %2498 = vmatprep.subr.mxu0 0.0
        %2499 = vmatpush2.xpose.msra.mxu0 0.0
        %2500 = vmatprep.subr.mxu0 0.0
        %2501 = vmatpush2.xpose.msra.mxu0 0.0
        %2502 = vmatprep.subr.mxu0 0.0
        %2503 = vmatpush2.xpose.msra.mxu0 0.0
        %2504 = vmatprep.subr.mxu0 0.0
        %2505 = vmatpush2.xpose.msra.mxu0 0.0
        %2506 = vmatprep.subr.mxu0 0.0
        %2507 = vmatpush2.xpose.msra.mxu0 0.0
        %2508 = vmatprep.subr.mxu0 0.0
        %2509 = vmatpush2.xpose.msra.mxu0 0.0
        %2510 = vmatprep.subr.mxu0 0.0
        %2511 = vmatpush2.xpose.msra.mxu0 0.0
        %2512 = vmatprep.subr.mxu0 0.0
        %2513 = vmatpush2.xpose.msra.mxu0 0.0
        %2514 = vmatprep.subr.mxu0 0.0
        %2515 = vmatpush2.xpose.msra.mxu0 0.0
        %2516 = vmatprep.subr.mxu0 0.0
        %2517 = vmatpush2.xpose.msra.mxu0 0.0
        %2518 = vmatprep.mubr.f32.mxu0 0.0
        %2519 = vmatmul.mubr.f32.gmra.mxu0 %v2451
        %v2520 = vpop.f32.mrf.mxu0
        %v2521 = vadd.f32 0.0, %v2520
        %v2522 = vpop.f32.mrf.mxu0
        %2523 = vdwg.mxu0
        %v2524 = vmul.f32 %v2521, 0.17677669
        %v2525 = vsel %vm1536, %v2524, -3.4028235e+38
        %v2526 = vsel %vm1293, %v2525, -inf
        %2527 = vmax.xlane.f32.xlu0 %v2526
        %v2528 = vpop.xlane.xlu0 %2527
        %v2529 = vsub.f32 %v2525, %v2528
        %v2530 = vmul.f32 %v2529, 1.442695
        %v2531 = vpow.pop %v2530
        %v2532 = vsel %vm1293, %v2531, 0.0
        %2533 = vadd.xlane.f32.xlu0 %v2532
        %v2534 = vpop.xlane.xlu0 %2533
        %v2535 = vrcp.pop %v2534
        %v2536 = vmul.f32 %v2531, %v2535
        %v2538 = vsel %vm1305, %v2536, 0
        %2540 = vmatprep.subr.mxu0 0.0
        %2541 = vmatpush1.msra.mxu0 0.0
        %2542 = vmatprep.subr.mxu0 0.0
        %2543 = vmatpush1.msra.mxu0 0.0
        %2544 = vmatprep.subr.mxu0 0.0
        %2545 = vmatpush1.msra.mxu0 0.0
        %2546 = vmatprep.subr.mxu0 0.0
        %2547 = vmatpush1.msra.mxu0 0.0
        %2548 = vmatprep.subr.mxu0 0.0
        %2549 = vmatpush1.msra.mxu0 0.0
        %2550 = vmatprep.subr.mxu0 0.0
        %2551 = vmatpush1.msra.mxu0 0.0
        %2552 = vmatprep.subr.mxu0 0.0
        %2553 = vmatpush1.msra.mxu0 0.0
        %2554 = vmatprep.subr.mxu0 0.0
        %2555 = vmatpush1.msra.mxu0 0.0
        %2556 = vmatprep.subr.mxu0 0.0
        %2557 = vmatpush1.msra.mxu0 0.0
        %2558 = vmatprep.subr.mxu0 0.0
        %2559 = vmatpush1.msra.mxu0 0.0
        %2560 = vmatprep.subr.mxu0 0.0
        %2561 = vmatpush1.msra.mxu0 0.0
        %2562 = vmatprep.subr.mxu0 0.0
        %2563 = vmatpush1.msra.mxu0 0.0
        %2564 = vmatprep.subr.mxu0 0.0
        %2565 = vmatpush1.msra.mxu0 0.0
        %2566 = vmatprep.subr.mxu0 0.0
        %2567 = vmatpush1.msra.mxu0 0.0
        %2568 = vmatprep.subr.mxu0 0.0
        %2569 = vmatpush1.msra.mxu0 0.0
        %2570 = vmatprep.subr.mxu0 0.0
        %2571 = vmatpush1.msra.mxu0 %v927
        %2572 = vmatprep.subr.mxu0 0.0
        %2573 = vmatpush2.msra.mxu0 0.0
        %2574 = vmatprep.subr.mxu0 0.0
        %2575 = vmatpush2.msra.mxu0 0.0
        %2576 = vmatprep.subr.mxu0 0.0
        %2577 = vmatpush2.msra.mxu0 0.0
        %2578 = vmatprep.subr.mxu0 0.0
        %2579 = vmatpush2.msra.mxu0 0.0
        %2580 = vmatprep.subr.mxu0 0.0
        %2581 = vmatpush2.msra.mxu0 0.0
        %2582 = vmatprep.subr.mxu0 0.0
        %2583 = vmatpush2.msra.mxu0 0.0
        %2584 = vmatprep.subr.mxu0 0.0
        %2585 = vmatpush2.msra.mxu0 0.0
        %2586 = vmatprep.subr.mxu0 0.0
        %2587 = vmatpush2.msra.mxu0 0.0
        %2588 = vmatprep.subr.mxu0 0.0
        %2589 = vmatpush2.msra.mxu0 0.0
        %2590 = vmatprep.subr.mxu0 0.0
        %2591 = vmatpush2.msra.mxu0 0.0
        %2592 = vmatprep.subr.mxu0 0.0
        %2593 = vmatpush2.msra.mxu0 0.0
        %2594 = vmatprep.subr.mxu0 0.0
        %2595 = vmatpush2.msra.mxu0 0.0
        %2596 = vmatprep.subr.mxu0 0.0
        %2597 = vmatpush2.msra.mxu0 0.0
        %2598 = vmatprep.subr.mxu0 0.0
        %2599 = vmatpush2.msra.mxu0 0.0
        %2600 = vmatprep.subr.mxu0 0.0
        %2601 = vmatpush2.msra.mxu0 0.0
        %2602 = vmatprep.subr.mxu0 0.0
        %2603 = vmatpush2.msra.mxu0 0.0
        %2604 = vmatprep.mubr.f32.mxu0 0.0
        %2605 = vmatmul.mubr.f32.gmra.mxu0 %v2538
        %v2606 = vpop.f32.mrf.mxu0
        %v2607 = vadd.f32 0.0, %v2606
        %v2608 = vpop.f32.mrf.mxu0
        %2609 = vdwg.mxu0
        %2610 = vmatprep.subr.mxu0 0.0
        %2611 = vmatpush1.msra.mxu0 %v1637
        %2612 = vmatprep.subr.mxu0 0.0
        %2613 = vmatpush1.msra.mxu0 %v1636
        %2614 = vmatprep.subr.mxu0 0.0
        %2615 = vmatpush1.msra.mxu0 %v1635
        %2616 = vmatprep.subr.mxu0 0.0
        %2617 = vmatpush1.msra.mxu0 %v1634
        %2618 = vmatprep.subr.mxu0 0.0
        %2619 = vmatpush1.msra.mxu0 %v1633
        %2620 = vmatprep.subr.mxu0 0.0
        %2621 = vmatpush1.msra.mxu0 %v1632
        %2622 = vmatprep.subr.mxu0 0.0
        %2623 = vmatpush1.msra.mxu0 %v1631
        %2624 = vmatprep.subr.mxu0 0.0
        %2625 = vmatpush1.msra.mxu0 %v1630
        %2626 = vmatprep.subr.mxu0 0.0
        %2627 = vmatpush1.msra.mxu0 %v1629
        %2628 = vmatprep.subr.mxu0 0.0
        %2629 = vmatpush1.msra.mxu0 %v1628
        %2630 = vmatprep.subr.mxu0 0.0
        %2631 = vmatpush1.msra.mxu0 %v1627
        %2632 = vmatprep.subr.mxu0 0.0
        %2633 = vmatpush1.msra.mxu0 %v1626
        %2634 = vmatprep.subr.mxu0 0.0
        %2635 = vmatpush1.msra.mxu0 %v1625
        %2636 = vmatprep.subr.mxu0 0.0
        %2637 = vmatpush1.msra.mxu0 %v1624
        %2638 = vmatprep.subr.mxu0 0.0
        %2639 = vmatpush1.msra.mxu0 %v1623
        %2640 = vmatprep.subr.mxu0 0.0
        %2641 = vmatpush1.msra.mxu0 %v1622
        %2642 = vmatprep.subr.mxu0 0.0
        %2643 = vmatpush2.msra.mxu0 0.0
        %2644 = vmatprep.subr.mxu0 0.0
        %2645 = vmatpush2.msra.mxu0 0.0
        %2646 = vmatprep.subr.mxu0 0.0
        %2647 = vmatpush2.msra.mxu0 0.0
        %2648 = vmatprep.subr.mxu0 0.0
        %2649 = vmatpush2.msra.mxu0 0.0
        %2650 = vmatprep.subr.mxu0 0.0
        %2651 = vmatpush2.msra.mxu0 0.0
        %2652 = vmatprep.subr.mxu0 0.0
        %2653 = vmatpush2.msra.mxu0 0.0
        %2654 = vmatprep.subr.mxu0 0.0
        %2655 = vmatpush2.msra.mxu0 0.0
        %2656 = vmatprep.subr.mxu0 0.0
        %2657 = vmatpush2.msra.mxu0 0.0
        %2658 = vmatprep.subr.mxu0 0.0
        %2659 = vmatpush2.msra.mxu0 0.0
        %2660 = vmatprep.subr.mxu0 0.0
        %2661 = vmatpush2.msra.mxu0 0.0
        %2662 = vmatprep.subr.mxu0 0.0
        %2663 = vmatpush2.msra.mxu0 0.0
        %2664 = vmatprep.subr.mxu0 0.0
        %2665 = vmatpush2.msra.mxu0 0.0
        %2666 = vmatprep.subr.mxu0 0.0
        %2667 = vmatpush2.msra.mxu0 0.0
        %2668 = vmatprep.subr.mxu0 0.0
        %2669 = vmatpush2.msra.mxu0 0.0
        %2670 = vmatprep.subr.mxu0 0.0
        %2671 = vmatpush2.msra.mxu0 0.0
        %2672 = vmatprep.subr.mxu0 0.0
        %2673 = vmatpush2.msra.mxu0 0.0
        %2674 = vmatprep.mubr.f32.mxu0 0.0
        %2675 = vmatmul.mubr.f32.gmra.mxu0 %v2607
        %v2676 = vpop.f32.mrf.mxu0
        %v2677 = vadd.f32 %v2381, %v2676
        %v2678 = vpop.f32.mrf.mxu0
        %2679 = vdwg.mxu0
        %2680 = vmatprep.subr.mxu0 0.0
        %2681 = vmatpush1.msra.mxu0 %v1723
        %2682 = vmatprep.subr.mxu0 0.0
        %2683 = vmatpush1.msra.mxu0 %v1722
        %2684 = vmatprep.subr.mxu0 0.0
        %2685 = vmatpush1.msra.mxu0 %v1721
        %2686 = vmatprep.subr.mxu0 0.0
        %2687 = vmatpush1.msra.mxu0 %v1720
        %2688 = vmatprep.subr.mxu0 0.0
        %2689 = vmatpush1.msra.mxu0 %v1719
        %2690 = vmatprep.subr.mxu0 0.0
        %2691 = vmatpush1.msra.mxu0 %v1718
        %2692 = vmatprep.subr.mxu0 0.0
        %2693 = vmatpush1.msra.mxu0 %v1717
        %2694 = vmatprep.subr.mxu0 0.0
        %2695 = vmatpush1.msra.mxu0 %v1716
        %2696 = vmatprep.subr.mxu0 0.0
        %2697 = vmatpush1.msra.mxu0 %v1715
        %2698 = vmatprep.subr.mxu0 0.0
        %2699 = vmatpush1.msra.mxu0 %v1714
        %2700 = vmatprep.subr.mxu0 0.0
        %2701 = vmatpush1.msra.mxu0 %v1713
        %2702 = vmatprep.subr.mxu0 0.0
        %2703 = vmatpush1.msra.mxu0 %v1712
        %2704 = vmatprep.subr.mxu0 0.0
        %2705 = vmatpush1.msra.mxu0 %v1711
        %2706 = vmatprep.subr.mxu0 0.0
        %2707 = vmatpush1.msra.mxu0 %v1710
        %2708 = vmatprep.subr.mxu0 0.0
        %2709 = vmatpush1.msra.mxu0 %v1709
        %2710 = vmatprep.subr.mxu0 0.0
        %2711 = vmatpush1.msra.mxu0 %v1708
        %2712 = vmatprep.subr.mxu0 0.0
        %2713 = vmatpush2.msra.mxu0 0.0
        %2714 = vmatprep.subr.mxu0 0.0
        %2715 = vmatpush2.msra.mxu0 0.0
        %2716 = vmatprep.subr.mxu0 0.0
        %2717 = vmatpush2.msra.mxu0 0.0
        %2718 = vmatprep.subr.mxu0 0.0
        %2719 = vmatpush2.msra.mxu0 0.0
        %2720 = vmatprep.subr.mxu0 0.0
        %2721 = vmatpush2.msra.mxu0 0.0
        %2722 = vmatprep.subr.mxu0 0.0
        %2723 = vmatpush2.msra.mxu0 0.0
        %2724 = vmatprep.subr.mxu0 0.0
        %2725 = vmatpush2.msra.mxu0 0.0
        %2726 = vmatprep.subr.mxu0 0.0
        %2727 = vmatpush2.msra.mxu0 0.0
        %2728 = vmatprep.subr.mxu0 0.0
        %2729 = vmatpush2.msra.mxu0 0.0
        %2730 = vmatprep.subr.mxu0 0.0
        %2731 = vmatpush2.msra.mxu0 0.0
        %2732 = vmatprep.subr.mxu0 0.0
        %2733 = vmatpush2.msra.mxu0 0.0
        %2734 = vmatprep.subr.mxu0 0.0
        %2735 = vmatpush2.msra.mxu0 0.0
        %2736 = vmatprep.subr.mxu0 0.0
        %2737 = vmatpush2.msra.mxu0 0.0
        %2738 = vmatprep.subr.mxu0 0.0
        %2739 = vmatpush2.msra.mxu0 0.0
        %2740 = vmatprep.subr.mxu0 0.0
        %2741 = vmatpush2.msra.mxu0 0.0
        %2742 = vmatprep.subr.mxu0 0.0
        %2743 = vmatpush2.msra.mxu0 0.0
        %2744 = vmatprep.mubr.f32.mxu0 0.0
        %2745 = vmatmul.mubr.f32.gmra.mxu0 %v2677
        %v2746 = vpop.f32.mrf.mxu0
        %v2747 = vadd.f32 %v1724, %v2746
        %v2748 = vpop.f32.mrf.mxu0
        %2749 = vdwg.mxu0
        %v2750 = vsel %vm1795, %v2747, 0.0
        %v2751 = vsel %vm1797, %v2750, 0.0
        %2752 = vadd.xlane.f32.xlu0 %v2751
        %v2753 = vpop.xlane.xlu0 %2752
        %v2754 = vsub.f32 0.0, %v2753
        %v2755 = vmul.f32 %v2754, 1.442695
        %v2756 = vpow.pop %v2755
        %v2757 = vadd.f32 %v2756, 1.0
        %v2758 = vrcp.pop %v2757
        %v2759 = vsel %vm1806, %v2747, -3.4028235e+38
        %v2760 = vsel %vm1797, %v2759, -inf
        %2761 = vmax.xlane.f32.xlu0 %v2760
        %v2762 = vpop.xlane.xlu0 %2761
        %v2763 = vsub.f32 %v2759, %v2762
        %v2764 = vmul.f32 %v2763, 1.442695
        %v2765 = vpow.pop %v2764
        %v2766 = vsel %vm1797, %v2765, 0.0
        %2767 = vadd.xlane.f32.xlu0 %v2766
        %v2768 = vpop.xlane.xlu0 %2767
        %v2769 = vrcp.pop %v2768
        %v2770 = vmul.f32 %v2765, %v2769
        %v2771 = vsub.f32 1.0, %v2758
        %v2772 = vmul.f32 %v2771, %v2536
        %v2773 = vmul.f32 %v2772, %v931
        %v2774 = vmul.f32 %v2758, %v2770
        %v2776 = vsel %vm1305, %v2773, 0
        %2778 = vmatprep.subr.mxu0 0.0
        %2779 = vmatpush1.msra.mxu0 0.0
        %2780 = vmatprep.subr.mxu0 0.0
        %2781 = vmatpush1.msra.mxu0 0.0
        %2782 = vmatprep.subr.mxu0 0.0
        %2783 = vmatpush1.msra.mxu0 0.0
        %2784 = vmatprep.subr.mxu0 0.0
        %2785 = vmatpush1.msra.mxu0 0.0
        %2786 = vmatprep.subr.mxu0 0.0
        %2787 = vmatpush1.msra.mxu0 0.0
        %2788 = vmatprep.subr.mxu0 0.0
        %2789 = vmatpush1.msra.mxu0 0.0
        %2790 = vmatprep.subr.mxu0 0.0
        %2791 = vmatpush1.msra.mxu0 0.0
        %2792 = vmatprep.subr.mxu0 0.0
        %2793 = vmatpush1.msra.mxu0 0.0
        %2794 = vmatprep.subr.mxu0 0.0
        %2795 = vmatpush1.msra.mxu0 0.0
        %2796 = vmatprep.subr.mxu0 0.0
        %2797 = vmatpush1.msra.mxu0 0.0
        %2798 = vmatprep.subr.mxu0 0.0
        %2799 = vmatpush1.msra.mxu0 0.0
        %2800 = vmatprep.subr.mxu0 0.0
        %2801 = vmatpush1.msra.mxu0 0.0
        %2802 = vmatprep.subr.mxu0 0.0
        %2803 = vmatpush1.msra.mxu0 0.0
        %2804 = vmatprep.subr.mxu0 0.0
        %2805 = vmatpush1.msra.mxu0 0.0
        %2806 = vmatprep.subr.mxu0 0.0
        %2807 = vmatpush1.msra.mxu0 0.0
        %2808 = vmatprep.subr.mxu0 0.0
        %2809 = vmatpush1.msra.mxu0 %v941
        %2810 = vmatprep.subr.mxu0 0.0
        %2811 = vmatpush2.msra.mxu0 0.0
        %2812 = vmatprep.subr.mxu0 0.0
        %2813 = vmatpush2.msra.mxu0 0.0
        %2814 = vmatprep.subr.mxu0 0.0
        %2815 = vmatpush2.msra.mxu0 0.0
        %2816 = vmatprep.subr.mxu0 0.0
        %2817 = vmatpush2.msra.mxu0 0.0
        %2818 = vmatprep.subr.mxu0 0.0
        %2819 = vmatpush2.msra.mxu0 0.0
        %2820 = vmatprep.subr.mxu0 0.0
        %2821 = vmatpush2.msra.mxu0 0.0
        %2822 = vmatprep.subr.mxu0 0.0
        %2823 = vmatpush2.msra.mxu0 0.0
        %2824 = vmatprep.subr.mxu0 0.0
        %2825 = vmatpush2.msra.mxu0 0.0
        %2826 = vmatprep.subr.mxu0 0.0
        %2827 = vmatpush2.msra.mxu0 0.0
        %2828 = vmatprep.subr.mxu0 0.0
        %2829 = vmatpush2.msra.mxu0 0.0
        %2830 = vmatprep.subr.mxu0 0.0
        %2831 = vmatpush2.msra.mxu0 0.0
        %2832 = vmatprep.subr.mxu0 0.0
        %2833 = vmatpush2.msra.mxu0 0.0
        %2834 = vmatprep.subr.mxu0 0.0
        %2835 = vmatpush2.msra.mxu0 0.0
        %2836 = vmatprep.subr.mxu0 0.0
        %2837 = vmatpush2.msra.mxu0 0.0
        %2838 = vmatprep.subr.mxu0 0.0
        %2839 = vmatpush2.msra.mxu0 0.0
        %2840 = vmatprep.subr.mxu0 0.0
        %2841 = vmatpush2.msra.mxu0 0.0
        %2842 = vmatprep.mubr.f32.mxu0 0.0
        %2843 = vmatmul.mubr.f32.gmra.mxu0 %v2776
        %v2844 = vpop.f32.mrf.mxu0
        %v2845 = vadd.f32 0.0, %v2844
        %v2846 = vpop.f32.mrf.mxu0
        %2847 = vdwg.mxu0
        %v2848 = vadd.f32 %v2774, %v2845
        %v2849 = vsel %vm1897, %v2848, -1.0
        %v2850 = vsel %vm1797, %v2849, -inf
        %2851 = vmax.xlane.f32.xlu0 %v2850
        %v2852 = vpop.xlane.xlu0 %2851
        %vm2853 = vcmp.ge.f32.partialorder %v2849, %v2852
        %v2854 = vsel %vm2853, %v935, 128.0
        %v2855 = vsel %vm1797, %v2854, inf
        %2856 = vmin.xlane.f32.xlu0 %v2855
        %v2857 = vpop.xlane.xlu0 %2856
        %vm2858 = vcmp.eq.s32.totalorder %v934, 2
        %v2859 = vsel %vm2858, 1, 0
        %v2860 = vcvt.s32.f32 %v2859
        %v2861 = vmul.f32 %v2857, %v2860
        %v2862 = vadd.f32 %v1911, %v2861
        %v2863 = vmin.f32 %v2857, 63.0
        %vm2864 = vcmp.eq.f32.partialorder %v935, %v2863
        %v2865 = vsel %vm2864, 1, 0
        %v2866 = vcvt.s32.f32 %v2865
        %2867 = vmatprep.subr.mxu0 0.0
        %2868 = vmatpush1.msra.mxu0 %v1931
        %2869 = vmatprep.subr.mxu0 0.0
        %2870 = vmatpush1.msra.mxu0 %v1930
        %2871 = vmatprep.subr.mxu0 0.0
        %2872 = vmatpush1.msra.mxu0 %v1929
        %2873 = vmatprep.subr.mxu0 0.0
        %2874 = vmatpush1.msra.mxu0 %v1928
        %2875 = vmatprep.subr.mxu0 0.0
        %2876 = vmatpush1.msra.mxu0 %v1927
        %2877 = vmatprep.subr.mxu0 0.0
        %2878 = vmatpush1.msra.mxu0 %v1926
        %2879 = vmatprep.subr.mxu0 0.0
        %2880 = vmatpush1.msra.mxu0 %v1925
        %2881 = vmatprep.subr.mxu0 0.0
        %2882 = vmatpush1.msra.mxu0 %v1924
        %2883 = vmatprep.subr.mxu0 0.0
        %2884 = vmatpush1.msra.mxu0 %v1923
        %2885 = vmatprep.subr.mxu0 0.0
        %2886 = vmatpush1.msra.mxu0 %v1922
        %2887 = vmatprep.subr.mxu0 0.0
        %2888 = vmatpush1.msra.mxu0 %v1921
        %2889 = vmatprep.subr.mxu0 0.0
        %2890 = vmatpush1.msra.mxu0 %v1920
        %2891 = vmatprep.subr.mxu0 0.0
        %2892 = vmatpush1.msra.mxu0 %v1919
        %2893 = vmatprep.subr.mxu0 0.0
        %2894 = vmatpush1.msra.mxu0 %v1918
        %2895 = vmatprep.subr.mxu0 0.0
        %2896 = vmatpush1.msra.mxu0 %v1917
        %2897 = vmatprep.subr.mxu0 0.0
        %2898 = vmatpush1.msra.mxu0 %v1916
        %2899 = vmatprep.subr.mxu0 0.0
        %2900 = vmatpush2.msra.mxu0 0.0
        %2901 = vmatprep.subr.mxu0 0.0
        %2902 = vmatpush2.msra.mxu0 0.0
        %2903 = vmatprep.subr.mxu0 0.0
        %2904 = vmatpush2.msra.mxu0 0.0
        %2905 = vmatprep.subr.mxu0 0.0
        %2906 = vmatpush2.msra.mxu0 0.0
        %2907 = vmatprep.subr.mxu0 0.0
        %2908 = vmatpush2.msra.mxu0 0.0
        %2909 = vmatprep.subr.mxu0 0.0
        %2910 = vmatpush2.msra.mxu0 0.0
        %2911 = vmatprep.subr.mxu0 0.0
        %2912 = vmatpush2.msra.mxu0 0.0
        %2913 = vmatprep.subr.mxu0 0.0
        %2914 = vmatpush2.msra.mxu0 0.0
        %2915 = vmatprep.subr.mxu0 0.0
        %2916 = vmatpush2.msra.mxu0 0.0
        %2917 = vmatprep.subr.mxu0 0.0
        %2918 = vmatpush2.msra.mxu0 0.0
        %2919 = vmatprep.subr.mxu0 0.0
        %2920 = vmatpush2.msra.mxu0 0.0
        %2921 = vmatprep.subr.mxu0 0.0
        %2922 = vmatpush2.msra.mxu0 0.0
        %2923 = vmatprep.subr.mxu0 0.0
        %2924 = vmatpush2.msra.mxu0 0.0
        %2925 = vmatprep.subr.mxu0 0.0
        %2926 = vmatpush2.msra.mxu0 0.0
        %2927 = vmatprep.subr.mxu0 0.0
        %2928 = vmatpush2.msra.mxu0 0.0
        %2929 = vmatprep.subr.mxu0 0.0
        %2930 = vmatpush2.msra.mxu0 0.0
        %2931 = vmatprep.mubr.f32.mxu0 0.0
        %2932 = vmatmul.mubr.f32.gmra.mxu0 %v2866
        %v2933 = vpop.f32.mrf.mxu0
        %v2934 = vadd.f32 0.0, %v2933
        %v2935 = vpop.f32.mrf.mxu0
        %2936 = vdwg.mxu0
        %2937 = vmatprep.subr.mxu0 0.0
        %2938 = vmatpush1.msra.mxu0 %v962
        %2939 = vmatprep.subr.mxu0 0.0
        %2940 = vmatpush1.msra.mxu0 %v961
        %2941 = vmatprep.subr.mxu0 0.0
        %2942 = vmatpush1.msra.mxu0 %v960
        %2943 = vmatprep.subr.mxu0 0.0
        %2944 = vmatpush1.msra.mxu0 %v959
        %2945 = vmatprep.subr.mxu0 0.0
        %2946 = vmatpush1.msra.mxu0 %v958
        %2947 = vmatprep.subr.mxu0 0.0
        %2948 = vmatpush1.msra.mxu0 %v957
        %2949 = vmatprep.subr.mxu0 0.0
        %2950 = vmatpush1.msra.mxu0 %v956
        %2951 = vmatprep.subr.mxu0 0.0
        %2952 = vmatpush1.msra.mxu0 %v955
        %2953 = vmatprep.subr.mxu0 0.0
        %2954 = vmatpush1.msra.mxu0 %v954
        %2955 = vmatprep.subr.mxu0 0.0
        %2956 = vmatpush1.msra.mxu0 %v953
        %2957 = vmatprep.subr.mxu0 0.0
        %2958 = vmatpush1.msra.mxu0 %v952
        %2959 = vmatprep.subr.mxu0 0.0
        %2960 = vmatpush1.msra.mxu0 %v951
        %2961 = vmatprep.subr.mxu0 0.0
        %2962 = vmatpush1.msra.mxu0 %v950
        %2963 = vmatprep.subr.mxu0 0.0
        %2964 = vmatpush1.msra.mxu0 %v949
        %2965 = vmatprep.subr.mxu0 0.0
        %2966 = vmatpush1.msra.mxu0 %v948
        %2967 = vmatprep.subr.mxu0 0.0
        %2968 = vmatpush1.msra.mxu0 %v947
        %2969 = vmatprep.subr.mxu0 0.0
        %2970 = vmatpush2.msra.mxu0 0.0
        %2971 = vmatprep.subr.mxu0 0.0
        %2972 = vmatpush2.msra.mxu0 0.0
        %2973 = vmatprep.subr.mxu0 0.0
        %2974 = vmatpush2.msra.mxu0 0.0
        %2975 = vmatprep.subr.mxu0 0.0
        %2976 = vmatpush2.msra.mxu0 0.0
        %2977 = vmatprep.subr.mxu0 0.0
        %2978 = vmatpush2.msra.mxu0 0.0
        %2979 = vmatprep.subr.mxu0 0.0
        %2980 = vmatpush2.msra.mxu0 0.0
        %2981 = vmatprep.subr.mxu0 0.0
        %2982 = vmatpush2.msra.mxu0 0.0
        %2983 = vmatprep.subr.mxu0 0.0
        %2984 = vmatpush2.msra.mxu0 0.0
        %2985 = vmatprep.subr.mxu0 0.0
        %2986 = vmatpush2.msra.mxu0 0.0
        %2987 = vmatprep.subr.mxu0 0.0
        %2988 = vmatpush2.msra.mxu0 0.0
        %2989 = vmatprep.subr.mxu0 0.0
        %2990 = vmatpush2.msra.mxu0 0.0
        %2991 = vmatprep.subr.mxu0 0.0
        %2992 = vmatpush2.msra.mxu0 0.0
        %2993 = vmatprep.subr.mxu0 0.0
        %2994 = vmatpush2.msra.mxu0 0.0
        %2995 = vmatprep.subr.mxu0 0.0
        %2996 = vmatpush2.msra.mxu0 0.0
        %2997 = vmatprep.subr.mxu0 0.0
        %2998 = vmatpush2.msra.mxu0 0.0
        %2999 = vmatprep.subr.mxu0 0.0
        %3000 = vmatpush2.msra.mxu0 0.0
        %3001 = vmatprep.mubr.f32.mxu0 0.0
        %3002 = vmatmul.mubr.f32.gmra.mxu0 %v2934
        %v3003 = vpop.f32.mrf.mxu0
        %v3004 = vadd.f32 0.0, %v3003
        %v3005 = vpop.f32.mrf.mxu0
        %3006 = vdwg.mxu0
        %vm3007 = vcmp.eq.s32.totalorder %v943, 2
        %v3008 = vsel %vm3007, 1, 0
        %v3009 = vcvt.s32.f32 %v3008
        %3010 = vmatprep.subr.mxu0 0.0
        %3011 = vmatpush1.msra.mxu0 %v1051
        %3012 = vmatprep.subr.mxu0 0.0
        %3013 = vmatpush1.msra.mxu0 %v1050
        %3014 = vmatprep.subr.mxu0 0.0
        %3015 = vmatpush1.msra.mxu0 %v1049
        %3016 = vmatprep.subr.mxu0 0.0
        %3017 = vmatpush1.msra.mxu0 %v1048
        %3018 = vmatprep.subr.mxu0 0.0
        %3019 = vmatpush1.msra.mxu0 %v1047
        %3020 = vmatprep.subr.mxu0 0.0
        %3021 = vmatpush1.msra.mxu0 %v1046
        %3022 = vmatprep.subr.mxu0 0.0
        %3023 = vmatpush1.msra.mxu0 %v1045
        %3024 = vmatprep.subr.mxu0 0.0
        %3025 = vmatpush1.msra.mxu0 %v1044
        %3026 = vmatprep.subr.mxu0 0.0
        %3027 = vmatpush1.msra.mxu0 %v1043
        %3028 = vmatprep.subr.mxu0 0.0
        %3029 = vmatpush1.msra.mxu0 %v1042
        %3030 = vmatprep.subr.mxu0 0.0
        %3031 = vmatpush1.msra.mxu0 %v1041
        %3032 = vmatprep.subr.mxu0 0.0
        %3033 = vmatpush1.msra.mxu0 %v1040
        %3034 = vmatprep.subr.mxu0 0.0
        %3035 = vmatpush1.msra.mxu0 %v1039
        %3036 = vmatprep.subr.mxu0 0.0
        %3037 = vmatpush1.msra.mxu0 %v1038
        %3038 = vmatprep.subr.mxu0 0.0
        %3039 = vmatpush1.msra.mxu0 %v1037
        %3040 = vmatprep.subr.mxu0 0.0
        %3041 = vmatpush1.msra.mxu0 %v1036
        %3042 = vmatprep.subr.mxu0 0.0
        %3043 = vmatpush2.msra.mxu0 0.0
        %3044 = vmatprep.subr.mxu0 0.0
        %3045 = vmatpush2.msra.mxu0 0.0
        %3046 = vmatprep.subr.mxu0 0.0
        %3047 = vmatpush2.msra.mxu0 0.0
        %3048 = vmatprep.subr.mxu0 0.0
        %3049 = vmatpush2.msra.mxu0 0.0
        %3050 = vmatprep.subr.mxu0 0.0
        %3051 = vmatpush2.msra.mxu0 0.0
        %3052 = vmatprep.subr.mxu0 0.0
        %3053 = vmatpush2.msra.mxu0 0.0
        %3054 = vmatprep.subr.mxu0 0.0
        %3055 = vmatpush2.msra.mxu0 0.0
        %3056 = vmatprep.subr.mxu0 0.0
        %3057 = vmatpush2.msra.mxu0 0.0
        %3058 = vmatprep.subr.mxu0 0.0
        %3059 = vmatpush2.msra.mxu0 0.0
        %3060 = vmatprep.subr.mxu0 0.0
        %3061 = vmatpush2.msra.mxu0 0.0
        %3062 = vmatprep.subr.mxu0 0.0
        %3063 = vmatpush2.msra.mxu0 0.0
        %3064 = vmatprep.subr.mxu0 0.0
        %3065 = vmatpush2.msra.mxu0 0.0
        %3066 = vmatprep.subr.mxu0 0.0
        %3067 = vmatpush2.msra.mxu0 0.0
        %3068 = vmatprep.subr.mxu0 0.0
        %3069 = vmatpush2.msra.mxu0 0.0
        %3070 = vmatprep.subr.mxu0 0.0
        %3071 = vmatpush2.msra.mxu0 0.0
        %3072 = vmatprep.subr.mxu0 0.0
        %3073 = vmatpush2.msra.mxu0 0.0
        %3074 = vmatprep.mubr.f32.mxu0 0.0
        %3075 = vmatmul.mubr.f32.gmra.mxu0 %v2934
        %v3076 = vpop.f32.mrf.mxu0
        %v3077 = vadd.f32 0.0, %v3076
        %v3078 = vpop.f32.mrf.mxu0
        %3079 = vdwg.mxu0
        %v3080 = vlaneseq
        %v3081 = vshrl.u32 %v3080, 7
        %v3082 = vsub.s32 0, %v3081
        %v3083 = vrot.slane %v3077, %v3082
        %v3084 = vmul.f32 %v3009, %v3083
        %v3085 = vadd.f32 %v2150, %v3084
        %3086 = vmatprep.subr.mxu0 0.0
        %3087 = vmatpush1.msra.mxu0 %v1143
        %3088 = vmatprep.subr.mxu0 0.0
        %3089 = vmatpush1.msra.mxu0 %v1142
        %3090 = vmatprep.subr.mxu0 0.0
        %3091 = vmatpush1.msra.mxu0 %v1141
        %3092 = vmatprep.subr.mxu0 0.0
        %3093 = vmatpush1.msra.mxu0 %v1140
        %3094 = vmatprep.subr.mxu0 0.0
        %3095 = vmatpush1.msra.mxu0 %v1139
        %3096 = vmatprep.subr.mxu0 0.0
        %3097 = vmatpush1.msra.mxu0 %v1138
        %3098 = vmatprep.subr.mxu0 0.0
        %3099 = vmatpush1.msra.mxu0 %v1137
        %3100 = vmatprep.subr.mxu0 0.0
        %3101 = vmatpush1.msra.mxu0 %v1136
        %3102 = vmatprep.subr.mxu0 0.0
        %3103 = vmatpush1.msra.mxu0 %v1135
        %3104 = vmatprep.subr.mxu0 0.0
        %3105 = vmatpush1.msra.mxu0 %v1134
        %3106 = vmatprep.subr.mxu0 0.0
        %3107 = vmatpush1.msra.mxu0 %v1133
        %3108 = vmatprep.subr.mxu0 0.0
        %3109 = vmatpush1.msra.mxu0 %v1132
        %3110 = vmatprep.subr.mxu0 0.0
        %3111 = vmatpush1.msra.mxu0 %v1131
        %3112 = vmatprep.subr.mxu0 0.0
        %3113 = vmatpush1.msra.mxu0 %v1130
        %3114 = vmatprep.subr.mxu0 0.0
        %3115 = vmatpush1.msra.mxu0 %v1129
        %3116 = vmatprep.subr.mxu0 0.0
        %3117 = vmatpush1.msra.mxu0 %v1128
        %3118 = vmatprep.subr.mxu0 0.0
        %3119 = vmatpush2.msra.mxu0 0.0
        %3120 = vmatprep.subr.mxu0 0.0
        %3121 = vmatpush2.msra.mxu0 0.0
        %3122 = vmatprep.subr.mxu0 0.0
        %3123 = vmatpush2.msra.mxu0 0.0
        %3124 = vmatprep.subr.mxu0 0.0
        %3125 = vmatpush2.msra.mxu0 0.0
        %3126 = vmatprep.subr.mxu0 0.0
        %3127 = vmatpush2.msra.mxu0 0.0
        %3128 = vmatprep.subr.mxu0 0.0
        %3129 = vmatpush2.msra.mxu0 0.0
        %3130 = vmatprep.subr.mxu0 0.0
        %3131 = vmatpush2.msra.mxu0 0.0
        %3132 = vmatprep.subr.mxu0 0.0
        %3133 = vmatpush2.msra.mxu0 0.0
        %3134 = vmatprep.subr.mxu0 0.0
        %3135 = vmatpush2.msra.mxu0 0.0
        %3136 = vmatprep.subr.mxu0 0.0
        %3137 = vmatpush2.msra.mxu0 0.0
        %3138 = vmatprep.subr.mxu0 0.0
        %3139 = vmatpush2.msra.mxu0 0.0
        %3140 = vmatprep.subr.mxu0 0.0
        %3141 = vmatpush2.msra.mxu0 0.0
        %3142 = vmatprep.subr.mxu0 0.0
        %3143 = vmatpush2.msra.mxu0 0.0
        %3144 = vmatprep.subr.mxu0 0.0
        %3145 = vmatpush2.msra.mxu0 0.0
        %3146 = vmatprep.subr.mxu0 0.0
        %3147 = vmatpush2.msra.mxu0 0.0
        %3148 = vmatprep.subr.mxu0 0.0
        %3149 = vmatpush2.msra.mxu0 0.0
        %3150 = vmatprep.mubr.f32.mxu0 0.0
        %3151 = vmatmul.mubr.f32.gmra.mxu0 %v2934
        %v3152 = vpop.f32.mrf.mxu0
        %v3153 = vadd.f32 0.0, %v3152
        %v3154 = vpop.f32.mrf.mxu0
        %3155 = vdwg.mxu0
        %v3156 = vlaneseq
        %v3157 = vshrl.u32 %v3156, 7
        %v3158 = vsub.s32 0, %v3157
        %v3159 = vrot.slane %v3153, %v3158
        %v3160 = vmul.f32 %v3009, %v3159
        %v3161 = vadd.f32 %v2226, %v3160
        %3162 = vmatprep.subr.mxu0 0.0
        %3163 = vmatpush1.xpose.msra.mxu0 0.0
        %3164 = vmatprep.subr.mxu0 0.0
        %3165 = vmatpush1.xpose.msra.mxu0 0.0
        %3166 = vmatprep.subr.mxu0 0.0
        %3167 = vmatpush1.xpose.msra.mxu0 0.0
        %3168 = vmatprep.subr.mxu0 0.0
        %3169 = vmatpush1.xpose.msra.mxu0 0.0
        %3170 = vmatprep.subr.mxu0 0.0
        %3171 = vmatpush1.xpose.msra.mxu0 0.0
        %3172 = vmatprep.subr.mxu0 0.0
        %3173 = vmatpush1.xpose.msra.mxu0 0.0
        %3174 = vmatprep.subr.mxu0 0.0
        %3175 = vmatpush1.xpose.msra.mxu0 0.0
        %3176 = vmatprep.subr.mxu0 0.0
        %3177 = vmatpush1.xpose.msra.mxu0 0.0
        %3178 = vmatprep.subr.mxu0 0.0
        %3179 = vmatpush1.xpose.msra.mxu0 0.0
        %3180 = vmatprep.subr.mxu0 0.0
        %3181 = vmatpush1.xpose.msra.mxu0 0.0
        %3182 = vmatprep.subr.mxu0 0.0
        %3183 = vmatpush1.xpose.msra.mxu0 0.0
        %3184 = vmatprep.subr.mxu0 0.0
        %3185 = vmatpush1.xpose.msra.mxu0 0.0
        %3186 = vmatprep.subr.mxu0 0.0
        %3187 = vmatpush1.xpose.msra.mxu0 0.0
        %3188 = vmatprep.subr.mxu0 0.0
        %3189 = vmatpush1.xpose.msra.mxu0 0.0
        %3190 = vmatprep.subr.mxu0 0.0
        %3191 = vmatpush1.xpose.msra.mxu0 0.0
        %3192 = vmatprep.subr.mxu0 0.0
        %3193 = vmatpush1.xpose.msra.mxu0 %v3085
        %3194 = vmatprep.subr.mxu0 0.0
        %3195 = vmatpush2.xpose.msra.mxu0 0.0
        %3196 = vmatprep.subr.mxu0 0.0
        %3197 = vmatpush2.xpose.msra.mxu0 0.0
        %3198 = vmatprep.subr.mxu0 0.0
        %3199 = vmatpush2.xpose.msra.mxu0 0.0
        %3200 = vmatprep.subr.mxu0 0.0
        %3201 = vmatpush2.xpose.msra.mxu0 0.0
        %3202 = vmatprep.subr.mxu0 0.0
        %3203 = vmatpush2.xpose.msra.mxu0 0.0
        %3204 = vmatprep.subr.mxu0 0.0
        %3205 = vmatpush2.xpose.msra.mxu0 0.0
        %3206 = vmatprep.subr.mxu0 0.0
        %3207 = vmatpush2.xpose.msra.mxu0 0.0
        %3208 = vmatprep.subr.mxu0 0.0
        %3209 = vmatpush2.xpose.msra.mxu0 0.0
        %3210 = vmatprep.subr.mxu0 0.0
        %3211 = vmatpush2.xpose.msra.mxu0 0.0
        %3212 = vmatprep.subr.mxu0 0.0
        %3213 = vmatpush2.xpose.msra.mxu0 0.0
        %3214 = vmatprep.subr.mxu0 0.0
        %3215 = vmatpush2.xpose.msra.mxu0 0.0
        %3216 = vmatprep.subr.mxu0 0.0
        %3217 = vmatpush2.xpose.msra.mxu0 0.0
        %3218 = vmatprep.subr.mxu0 0.0
        %3219 = vmatpush2.xpose.msra.mxu0 0.0
        %3220 = vmatprep.subr.mxu0 0.0
        %3221 = vmatpush2.xpose.msra.mxu0 0.0
        %3222 = vmatprep.subr.mxu0 0.0
        %3223 = vmatpush2.xpose.msra.mxu0 0.0
        %3224 = vmatprep.subr.mxu0 0.0
        %3225 = vmatpush2.xpose.msra.mxu0 0.0
        %3226 = vmatprep.mubr.f32.mxu0 0.0
        %3227 = vmatmul.mubr.f32.gmra.mxu0 %v3004
        %v3228 = vpop.f32.mrf.mxu0
        %v3229 = vadd.f32 0.0, %v3228
        %v3230 = vpop.f32.mrf.mxu0
        %3231 = vdwg.mxu0
        %v3232 = vmul.f32 %v3229, 0.17677669
        %vm3233 = vcmp.le.s32.totalorder %v934, 2
        %v3234 = vsel %vm3233, %v3232, -3.4028235e+38
        %v3235 = vsel %vm1293, %v3234, -inf
        %3236 = vmax.xlane.f32.xlu0 %v3235
        %v3237 = vpop.xlane.xlu0 %3236
        %v3238 = vsub.f32 %v3234, %v3237
        %v3239 = vmul.f32 %v3238, 1.442695
        %v3240 = vpow.pop %v3239
        %v3241 = vsel %vm1293, %v3240, 0.0
        %3242 = vadd.xlane.f32.xlu0 %v3241
        %v3243 = vpop.xlane.xlu0 %3242
        %v3244 = vrcp.pop %v3243
        %v3245 = vmul.f32 %v3240, %v3244
        %v3247 = vsel %vm1305, %v3245, 0
        %3249 = vmatprep.subr.mxu0 0.0
        %3250 = vmatpush1.msra.mxu0 0.0
        %3251 = vmatprep.subr.mxu0 0.0
        %3252 = vmatpush1.msra.mxu0 0.0
        %3253 = vmatprep.subr.mxu0 0.0
        %3254 = vmatpush1.msra.mxu0 0.0
        %3255 = vmatprep.subr.mxu0 0.0
        %3256 = vmatpush1.msra.mxu0 0.0
        %3257 = vmatprep.subr.mxu0 0.0
        %3258 = vmatpush1.msra.mxu0 0.0
        %3259 = vmatprep.subr.mxu0 0.0
        %3260 = vmatpush1.msra.mxu0 0.0
        %3261 = vmatprep.subr.mxu0 0.0
        %3262 = vmatpush1.msra.mxu0 0.0
        %3263 = vmatprep.subr.mxu0 0.0
        %3264 = vmatpush1.msra.mxu0 0.0
        %3265 = vmatprep.subr.mxu0 0.0
        %3266 = vmatpush1.msra.mxu0 0.0
        %3267 = vmatprep.subr.mxu0 0.0
        %3268 = vmatpush1.msra.mxu0 0.0
        %3269 = vmatprep.subr.mxu0 0.0
        %3270 = vmatpush1.msra.mxu0 0.0
        %3271 = vmatprep.subr.mxu0 0.0
        %3272 = vmatpush1.msra.mxu0 0.0
        %3273 = vmatprep.subr.mxu0 0.0
        %3274 = vmatpush1.msra.mxu0 0.0
        %3275 = vmatprep.subr.mxu0 0.0
        %3276 = vmatpush1.msra.mxu0 0.0
        %3277 = vmatprep.subr.mxu0 0.0
        %3278 = vmatpush1.msra.mxu0 0.0
        %3279 = vmatprep.subr.mxu0 0.0
        %3280 = vmatpush1.msra.mxu0 %v3161
        %3281 = vmatprep.subr.mxu0 0.0
        %3282 = vmatpush2.msra.mxu0 0.0
        %3283 = vmatprep.subr.mxu0 0.0
        %3284 = vmatpush2.msra.mxu0 0.0
        %3285 = vmatprep.subr.mxu0 0.0
        %3286 = vmatpush2.msra.mxu0 0.0
        %3287 = vmatprep.subr.mxu0 0.0
        %3288 = vmatpush2.msra.mxu0 0.0
        %3289 = vmatprep.subr.mxu0 0.0
        %3290 = vmatpush2.msra.mxu0 0.0
        %3291 = vmatprep.subr.mxu0 0.0
        %3292 = vmatpush2.msra.mxu0 0.0
        %3293 = vmatprep.subr.mxu0 0.0
        %3294 = vmatpush2.msra.mxu0 0.0
        %3295 = vmatprep.subr.mxu0 0.0
        %3296 = vmatpush2.msra.mxu0 0.0
        %3297 = vmatprep.subr.mxu0 0.0
        %3298 = vmatpush2.msra.mxu0 0.0
        %3299 = vmatprep.subr.mxu0 0.0
        %3300 = vmatpush2.msra.mxu0 0.0
        %3301 = vmatprep.subr.mxu0 0.0
        %3302 = vmatpush2.msra.mxu0 0.0
        %3303 = vmatprep.subr.mxu0 0.0
        %3304 = vmatpush2.msra.mxu0 0.0
        %3305 = vmatprep.subr.mxu0 0.0
        %3306 = vmatpush2.msra.mxu0 0.0
        %3307 = vmatprep.subr.mxu0 0.0
        %3308 = vmatpush2.msra.mxu0 0.0
        %3309 = vmatprep.subr.mxu0 0.0
        %3310 = vmatpush2.msra.mxu0 0.0
        %3311 = vmatprep.subr.mxu0 0.0
        %3312 = vmatpush2.msra.mxu0 0.0
        %3313 = vmatprep.mubr.f32.mxu0 0.0
        %3314 = vmatmul.mubr.f32.gmra.mxu0 %v3247
        %v3315 = vpop.f32.mrf.mxu0
        %v3316 = vadd.f32 %v2934, %v3315
        %v3317 = vpop.f32.mrf.mxu0
        %3318 = vdwg.mxu0
        %3319 = vmatprep.subr.mxu0 0.0
        %3320 = vmatpush1.msra.mxu0 %v1394
        %3321 = vmatprep.subr.mxu0 0.0
        %3322 = vmatpush1.msra.mxu0 %v1393
        %3323 = vmatprep.subr.mxu0 0.0
        %3324 = vmatpush1.msra.mxu0 %v1392
        %3325 = vmatprep.subr.mxu0 0.0
        %3326 = vmatpush1.msra.mxu0 %v1391
        %3327 = vmatprep.subr.mxu0 0.0
        %3328 = vmatpush1.msra.mxu0 %v1390
        %3329 = vmatprep.subr.mxu0 0.0
        %3330 = vmatpush1.msra.mxu0 %v1389
        %3331 = vmatprep.subr.mxu0 0.0
        %3332 = vmatpush1.msra.mxu0 %v1388
        %3333 = vmatprep.subr.mxu0 0.0
        %3334 = vmatpush1.msra.mxu0 %v1387
        %3335 = vmatprep.subr.mxu0 0.0
        %3336 = vmatpush1.msra.mxu0 %v1386
        %3337 = vmatprep.subr.mxu0 0.0
        %3338 = vmatpush1.msra.mxu0 %v1385
        %3339 = vmatprep.subr.mxu0 0.0
        %3340 = vmatpush1.msra.mxu0 %v1384
        %3341 = vmatprep.subr.mxu0 0.0
        %3342 = vmatpush1.msra.mxu0 %v1383
        %3343 = vmatprep.subr.mxu0 0.0
        %3344 = vmatpush1.msra.mxu0 %v1382
        %3345 = vmatprep.subr.mxu0 0.0
        %3346 = vmatpush1.msra.mxu0 %v1381
        %3347 = vmatprep.subr.mxu0 0.0
        %3348 = vmatpush1.msra.mxu0 %v1380
        %3349 = vmatprep.subr.mxu0 0.0
        %3350 = vmatpush1.msra.mxu0 %v1379
        %3351 = vmatprep.subr.mxu0 0.0
        %3352 = vmatpush2.msra.mxu0 0.0
        %3353 = vmatprep.subr.mxu0 0.0
        %3354 = vmatpush2.msra.mxu0 0.0
        %3355 = vmatprep.subr.mxu0 0.0
        %3356 = vmatpush2.msra.mxu0 0.0
        %3357 = vmatprep.subr.mxu0 0.0
        %3358 = vmatpush2.msra.mxu0 0.0
        %3359 = vmatprep.subr.mxu0 0.0
        %3360 = vmatpush2.msra.mxu0 0.0
        %3361 = vmatprep.subr.mxu0 0.0
        %3362 = vmatpush2.msra.mxu0 0.0
        %3363 = vmatprep.subr.mxu0 0.0
        %3364 = vmatpush2.msra.mxu0 0.0
        %3365 = vmatprep.subr.mxu0 0.0
        %3366 = vmatpush2.msra.mxu0 0.0
        %3367 = vmatprep.subr.mxu0 0.0
        %3368 = vmatpush2.msra.mxu0 0.0
        %3369 = vmatprep.subr.mxu0 0.0
        %3370 = vmatpush2.msra.mxu0 0.0
        %3371 = vmatprep.subr.mxu0 0.0
        %3372 = vmatpush2.msra.mxu0 0.0
        %3373 = vmatprep.subr.mxu0 0.0
        %3374 = vmatpush2.msra.mxu0 0.0
        %3375 = vmatprep.subr.mxu0 0.0
        %3376 = vmatpush2.msra.mxu0 0.0
        %3377 = vmatprep.subr.mxu0 0.0
        %3378 = vmatpush2.msra.mxu0 0.0
        %3379 = vmatprep.subr.mxu0 0.0
        %3380 = vmatpush2.msra.mxu0 0.0
        %3381 = vmatprep.subr.mxu0 0.0
        %3382 = vmatpush2.msra.mxu0 0.0
        %3383 = vmatprep.mubr.f32.mxu0 0.0
        %3384 = vmatmul.mubr.f32.gmra.mxu0 %v3316
        %v3385 = vpop.f32.mrf.mxu0
        %v3386 = vadd.f32 0.0, %v3385
        %v3387 = vpop.f32.mrf.mxu0
        %3388 = vdwg.mxu0
        %3389 = vmatprep.subr.mxu0 0.0
        %3390 = vmatpush1.xpose.msra.mxu0 0.0
        %3391 = vmatprep.subr.mxu0 0.0
        %3392 = vmatpush1.xpose.msra.mxu0 0.0
        %3393 = vmatprep.subr.mxu0 0.0
        %3394 = vmatpush1.xpose.msra.mxu0 0.0
        %3395 = vmatprep.subr.mxu0 0.0
        %3396 = vmatpush1.xpose.msra.mxu0 0.0
        %3397 = vmatprep.subr.mxu0 0.0
        %3398 = vmatpush1.xpose.msra.mxu0 0.0
        %3399 = vmatprep.subr.mxu0 0.0
        %3400 = vmatpush1.xpose.msra.mxu0 0.0
        %3401 = vmatprep.subr.mxu0 0.0
        %3402 = vmatpush1.xpose.msra.mxu0 0.0
        %3403 = vmatprep.subr.mxu0 0.0
        %3404 = vmatpush1.xpose.msra.mxu0 0.0
        %3405 = vmatprep.subr.mxu0 0.0
        %3406 = vmatpush1.xpose.msra.mxu0 0.0
        %3407 = vmatprep.subr.mxu0 0.0
        %3408 = vmatpush1.xpose.msra.mxu0 0.0
        %3409 = vmatprep.subr.mxu0 0.0
        %3410 = vmatpush1.xpose.msra.mxu0 0.0
        %3411 = vmatprep.subr.mxu0 0.0
        %3412 = vmatpush1.xpose.msra.mxu0 0.0
        %3413 = vmatprep.subr.mxu0 0.0
        %3414 = vmatpush1.xpose.msra.mxu0 0.0
        %3415 = vmatprep.subr.mxu0 0.0
        %3416 = vmatpush1.xpose.msra.mxu0 0.0
        %3417 = vmatprep.subr.mxu0 0.0
        %3418 = vmatpush1.xpose.msra.mxu0 0.0
        %3419 = vmatprep.subr.mxu0 0.0
        %3420 = vmatpush1.xpose.msra.mxu0 %v841
        %3421 = vmatprep.subr.mxu0 0.0
        %3422 = vmatpush2.xpose.msra.mxu0 0.0
        %3423 = vmatprep.subr.mxu0 0.0
        %3424 = vmatpush2.xpose.msra.mxu0 0.0
        %3425 = vmatprep.subr.mxu0 0.0
        %3426 = vmatpush2.xpose.msra.mxu0 0.0
        %3427 = vmatprep.subr.mxu0 0.0
        %3428 = vmatpush2.xpose.msra.mxu0 0.0
        %3429 = vmatprep.subr.mxu0 0.0
        %3430 = vmatpush2.xpose.msra.mxu0 0.0
        %3431 = vmatprep.subr.mxu0 0.0
        %3432 = vmatpush2.xpose.msra.mxu0 0.0
        %3433 = vmatprep.subr.mxu0 0.0
        %3434 = vmatpush2.xpose.msra.mxu0 0.0
        %3435 = vmatprep.subr.mxu0 0.0
        %3436 = vmatpush2.xpose.msra.mxu0 0.0
        %3437 = vmatprep.subr.mxu0 0.0
        %3438 = vmatpush2.xpose.msra.mxu0 0.0
        %3439 = vmatprep.subr.mxu0 0.0
        %3440 = vmatpush2.xpose.msra.mxu0 0.0
        %3441 = vmatprep.subr.mxu0 0.0
        %3442 = vmatpush2.xpose.msra.mxu0 0.0
        %3443 = vmatprep.subr.mxu0 0.0
        %3444 = vmatpush2.xpose.msra.mxu0 0.0
        %3445 = vmatprep.subr.mxu0 0.0
        %3446 = vmatpush2.xpose.msra.mxu0 0.0
        %3447 = vmatprep.subr.mxu0 0.0
        %3448 = vmatpush2.xpose.msra.mxu0 0.0
        %3449 = vmatprep.subr.mxu0 0.0
        %3450 = vmatpush2.xpose.msra.mxu0 0.0
        %3451 = vmatprep.subr.mxu0 0.0
        %3452 = vmatpush2.xpose.msra.mxu0 0.0
        %3453 = vmatprep.mubr.f32.mxu0 0.0
        %3454 = vmatmul.mubr.f32.gmra.mxu0 %v3386
        %v3455 = vpop.f32.mrf.mxu0
        %v3456 = vadd.f32 0.0, %v3455
        %v3457 = vpop.f32.mrf.mxu0
        %3458 = vdwg.mxu0
        %v3459 = vmul.f32 %v3456, 0.17677669
        %v3460 = vsel %vm1536, %v3459, -3.4028235e+38
        %v3461 = vsel %vm1293, %v3460, -inf
        %3462 = vmax.xlane.f32.xlu0 %v3461
        %v3463 = vpop.xlane.xlu0 %3462
        %v3464 = vsub.f32 %v3460, %v3463
        %v3465 = vmul.f32 %v3464, 1.442695
        %v3466 = vpow.pop %v3465
        %v3467 = vsel %vm1293, %v3466, 0.0
        %3468 = vadd.xlane.f32.xlu0 %v3467
        %v3469 = vpop.xlane.xlu0 %3468
        %v3470 = vrcp.pop %v3469
        %v3471 = vmul.f32 %v3466, %v3470
        %v3473 = vsel %vm1305, %v3471, 0
        %3475 = vmatprep.subr.mxu0 0.0
        %3476 = vmatpush1.msra.mxu0 0.0
        %3477 = vmatprep.subr.mxu0 0.0
        %3478 = vmatpush1.msra.mxu0 0.0
        %3479 = vmatprep.subr.mxu0 0.0
        %3480 = vmatpush1.msra.mxu0 0.0
        %3481 = vmatprep.subr.mxu0 0.0
        %3482 = vmatpush1.msra.mxu0 0.0
        %3483 = vmatprep.subr.mxu0 0.0
        %3484 = vmatpush1.msra.mxu0 0.0
        %3485 = vmatprep.subr.mxu0 0.0
        %3486 = vmatpush1.msra.mxu0 0.0
        %3487 = vmatprep.subr.mxu0 0.0
        %3488 = vmatpush1.msra.mxu0 0.0
        %3489 = vmatprep.subr.mxu0 0.0
        %3490 = vmatpush1.msra.mxu0 0.0
        %3491 = vmatprep.subr.mxu0 0.0
        %3492 = vmatpush1.msra.mxu0 0.0
        %3493 = vmatprep.subr.mxu0 0.0
        %3494 = vmatpush1.msra.mxu0 0.0
        %3495 = vmatprep.subr.mxu0 0.0
        %3496 = vmatpush1.msra.mxu0 0.0
        %3497 = vmatprep.subr.mxu0 0.0
        %3498 = vmatpush1.msra.mxu0 0.0
        %3499 = vmatprep.subr.mxu0 0.0
        %3500 = vmatpush1.msra.mxu0 0.0
        %3501 = vmatprep.subr.mxu0 0.0
        %3502 = vmatpush1.msra.mxu0 0.0
        %3503 = vmatprep.subr.mxu0 0.0
        %3504 = vmatpush1.msra.mxu0 0.0
        %3505 = vmatprep.subr.mxu0 0.0
        %3506 = vmatpush1.msra.mxu0 %v927
        %3507 = vmatprep.subr.mxu0 0.0
        %3508 = vmatpush2.msra.mxu0 0.0
        %3509 = vmatprep.subr.mxu0 0.0
        %3510 = vmatpush2.msra.mxu0 0.0
        %3511 = vmatprep.subr.mxu0 0.0
        %3512 = vmatpush2.msra.mxu0 0.0
        %3513 = vmatprep.subr.mxu0 0.0
        %3514 = vmatpush2.msra.mxu0 0.0
        %3515 = vmatprep.subr.mxu0 0.0
        %3516 = vmatpush2.msra.mxu0 0.0
        %3517 = vmatprep.subr.mxu0 0.0
        %3518 = vmatpush2.msra.mxu0 0.0
        %3519 = vmatprep.subr.mxu0 0.0
        %3520 = vmatpush2.msra.mxu0 0.0
        %3521 = vmatprep.subr.mxu0 0.0
        %3522 = vmatpush2.msra.mxu0 0.0
        %3523 = vmatprep.subr.mxu0 0.0
        %3524 = vmatpush2.msra.mxu0 0.0
        %3525 = vmatprep.subr.mxu0 0.0
        %3526 = vmatpush2.msra.mxu0 0.0
        %3527 = vmatprep.subr.mxu0 0.0
        %3528 = vmatpush2.msra.mxu0 0.0
        %3529 = vmatprep.subr.mxu0 0.0
        %3530 = vmatpush2.msra.mxu0 0.0
        %3531 = vmatprep.subr.mxu0 0.0
        %3532 = vmatpush2.msra.mxu0 0.0
        %3533 = vmatprep.subr.mxu0 0.0
        %3534 = vmatpush2.msra.mxu0 0.0
        %3535 = vmatprep.subr.mxu0 0.0
        %3536 = vmatpush2.msra.mxu0 0.0
        %3537 = vmatprep.subr.mxu0 0.0
        %3538 = vmatpush2.msra.mxu0 0.0
        %3539 = vmatprep.mubr.f32.mxu0 0.0
        %3540 = vmatmul.mubr.f32.gmra.mxu0 %v3473
        %v3541 = vpop.f32.mrf.mxu0
        %v3542 = vadd.f32 0.0, %v3541
        %v3543 = vpop.f32.mrf.mxu0
        %3544 = vdwg.mxu0
        %3545 = vmatprep.subr.mxu0 0.0
        %3546 = vmatpush1.msra.mxu0 %v1637
        %3547 = vmatprep.subr.mxu0 0.0
        %3548 = vmatpush1.msra.mxu0 %v1636
        %3549 = vmatprep.subr.mxu0 0.0
        %3550 = vmatpush1.msra.mxu0 %v1635
        %3551 = vmatprep.subr.mxu0 0.0
        %3552 = vmatpush1.msra.mxu0 %v1634
        %3553 = vmatprep.subr.mxu0 0.0
        %3554 = vmatpush1.msra.mxu0 %v1633
        %3555 = vmatprep.subr.mxu0 0.0
        %3556 = vmatpush1.msra.mxu0 %v1632
        %3557 = vmatprep.subr.mxu0 0.0
        %3558 = vmatpush1.msra.mxu0 %v1631
        %3559 = vmatprep.subr.mxu0 0.0
        %3560 = vmatpush1.msra.mxu0 %v1630
        %3561 = vmatprep.subr.mxu0 0.0
        %3562 = vmatpush1.msra.mxu0 %v1629
        %3563 = vmatprep.subr.mxu0 0.0
        %3564 = vmatpush1.msra.mxu0 %v1628
        %3565 = vmatprep.subr.mxu0 0.0
        %3566 = vmatpush1.msra.mxu0 %v1627
        %3567 = vmatprep.subr.mxu0 0.0
        %3568 = vmatpush1.msra.mxu0 %v1626
        %3569 = vmatprep.subr.mxu0 0.0
        %3570 = vmatpush1.msra.mxu0 %v1625
        %3571 = vmatprep.subr.mxu0 0.0
        %3572 = vmatpush1.msra.mxu0 %v1624
        %3573 = vmatprep.subr.mxu0 0.0
        %3574 = vmatpush1.msra.mxu0 %v1623
        %3575 = vmatprep.subr.mxu0 0.0
        %3576 = vmatpush1.msra.mxu0 %v1622
        %3577 = vmatprep.subr.mxu0 0.0
        %3578 = vmatpush2.msra.mxu0 0.0
        %3579 = vmatprep.subr.mxu0 0.0
        %3580 = vmatpush2.msra.mxu0 0.0
        %3581 = vmatprep.subr.mxu0 0.0
        %3582 = vmatpush2.msra.mxu0 0.0
        %3583 = vmatprep.subr.mxu0 0.0
        %3584 = vmatpush2.msra.mxu0 0.0
        %3585 = vmatprep.subr.mxu0 0.0
        %3586 = vmatpush2.msra.mxu0 0.0
        %3587 = vmatprep.subr.mxu0 0.0
        %3588 = vmatpush2.msra.mxu0 0.0
        %3589 = vmatprep.subr.mxu0 0.0
        %3590 = vmatpush2.msra.mxu0 0.0
        %3591 = vmatprep.subr.mxu0 0.0
        %3592 = vmatpush2.msra.mxu0 0.0
        %3593 = vmatprep.subr.mxu0 0.0
        %3594 = vmatpush2.msra.mxu0 0.0
        %3595 = vmatprep.subr.mxu0 0.0
        %3596 = vmatpush2.msra.mxu0 0.0
        %3597 = vmatprep.subr.mxu0 0.0
        %3598 = vmatpush2.msra.mxu0 0.0
        %3599 = vmatprep.subr.mxu0 0.0
        %3600 = vmatpush2.msra.mxu0 0.0
        %3601 = vmatprep.subr.mxu0 0.0
        %3602 = vmatpush2.msra.mxu0 0.0
        %3603 = vmatprep.subr.mxu0 0.0
        %3604 = vmatpush2.msra.mxu0 0.0
        %3605 = vmatprep.subr.mxu0 0.0
        %3606 = vmatpush2.msra.mxu0 0.0
        %3607 = vmatprep.subr.mxu0 0.0
        %3608 = vmatpush2.msra.mxu0 0.0
        %3609 = vmatprep.mubr.f32.mxu0 0.0
        %3610 = vmatmul.mubr.f32.gmra.mxu0 %v3542
        %v3611 = vpop.f32.mrf.mxu0
        %v3612 = vadd.f32 %v3316, %v3611
        %v3613 = vpop.f32.mrf.mxu0
        %3614 = vdwg.mxu0
        %3615 = vmatprep.subr.mxu0 0.0
        %3616 = vmatpush1.msra.mxu0 %v1723
        %3617 = vmatprep.subr.mxu0 0.0
        %3618 = vmatpush1.msra.mxu0 %v1722
        %3619 = vmatprep.subr.mxu0 0.0
        %3620 = vmatpush1.msra.mxu0 %v1721
        %3621 = vmatprep.subr.mxu0 0.0
        %3622 = vmatpush1.msra.mxu0 %v1720
        %3623 = vmatprep.subr.mxu0 0.0
        %3624 = vmatpush1.msra.mxu0 %v1719
        %3625 = vmatprep.subr.mxu0 0.0
        %3626 = vmatpush1.msra.mxu0 %v1718
        %3627 = vmatprep.subr.mxu0 0.0
        %3628 = vmatpush1.msra.mxu0 %v1717
        %3629 = vmatprep.subr.mxu0 0.0
        %3630 = vmatpush1.msra.mxu0 %v1716
        %3631 = vmatprep.subr.mxu0 0.0
        %3632 = vmatpush1.msra.mxu0 %v1715
        %3633 = vmatprep.subr.mxu0 0.0
        %3634 = vmatpush1.msra.mxu0 %v1714
        %3635 = vmatprep.subr.mxu0 0.0
        %3636 = vmatpush1.msra.mxu0 %v1713
        %3637 = vmatprep.subr.mxu0 0.0
        %3638 = vmatpush1.msra.mxu0 %v1712
        %3639 = vmatprep.subr.mxu0 0.0
        %3640 = vmatpush1.msra.mxu0 %v1711
        %3641 = vmatprep.subr.mxu0 0.0
        %3642 = vmatpush1.msra.mxu0 %v1710
        %3643 = vmatprep.subr.mxu0 0.0
        %3644 = vmatpush1.msra.mxu0 %v1709
        %3645 = vmatprep.subr.mxu0 0.0
        %3646 = vmatpush1.msra.mxu0 %v1708
        %3647 = vmatprep.subr.mxu0 0.0
        %3648 = vmatpush2.msra.mxu0 0.0
        %3649 = vmatprep.subr.mxu0 0.0
        %3650 = vmatpush2.msra.mxu0 0.0
        %3651 = vmatprep.subr.mxu0 0.0
        %3652 = vmatpush2.msra.mxu0 0.0
        %3653 = vmatprep.subr.mxu0 0.0
        %3654 = vmatpush2.msra.mxu0 0.0
        %3655 = vmatprep.subr.mxu0 0.0
        %3656 = vmatpush2.msra.mxu0 0.0
        %3657 = vmatprep.subr.mxu0 0.0
        %3658 = vmatpush2.msra.mxu0 0.0
        %3659 = vmatprep.subr.mxu0 0.0
        %3660 = vmatpush2.msra.mxu0 0.0
        %3661 = vmatprep.subr.mxu0 0.0
        %3662 = vmatpush2.msra.mxu0 0.0
        %3663 = vmatprep.subr.mxu0 0.0
        %3664 = vmatpush2.msra.mxu0 0.0
        %3665 = vmatprep.subr.mxu0 0.0
        %3666 = vmatpush2.msra.mxu0 0.0
        %3667 = vmatprep.subr.mxu0 0.0
        %3668 = vmatpush2.msra.mxu0 0.0
        %3669 = vmatprep.subr.mxu0 0.0
        %3670 = vmatpush2.msra.mxu0 0.0
        %3671 = vmatprep.subr.mxu0 0.0
        %3672 = vmatpush2.msra.mxu0 0.0
        %3673 = vmatprep.subr.mxu0 0.0
        %3674 = vmatpush2.msra.mxu0 0.0
        %3675 = vmatprep.subr.mxu0 0.0
        %3676 = vmatpush2.msra.mxu0 0.0
        %3677 = vmatprep.subr.mxu0 0.0
        %3678 = vmatpush2.msra.mxu0 0.0
        %3679 = vmatprep.mubr.f32.mxu0 0.0
        %3680 = vmatmul.mubr.f32.gmra.mxu0 %v3612
        %v3681 = vpop.f32.mrf.mxu0
        %v3682 = vadd.f32 %v1724, %v3681
        %v3683 = vpop.f32.mrf.mxu0
        %3684 = vdwg.mxu0
        %v3685 = vsel %vm1795, %v3682, 0.0
        %v3686 = vsel %vm1797, %v3685, 0.0
        %3687 = vadd.xlane.f32.xlu0 %v3686
        %v3688 = vpop.xlane.xlu0 %3687
        %v3689 = vsub.f32 0.0, %v3688
        %v3690 = vmul.f32 %v3689, 1.442695
        %v3691 = vpow.pop %v3690
        %v3692 = vadd.f32 %v3691, 1.0
        %v3693 = vrcp.pop %v3692
        %v3694 = vsel %vm1806, %v3682, -3.4028235e+38
        %v3695 = vsel %vm1797, %v3694, -inf
        %3696 = vmax.xlane.f32.xlu0 %v3695
        %v3697 = vpop.xlane.xlu0 %3696
        %v3698 = vsub.f32 %v3694, %v3697
        %v3699 = vmul.f32 %v3698, 1.442695
        %v3700 = vpow.pop %v3699
        %v3701 = vsel %vm1797, %v3700, 0.0
        %3702 = vadd.xlane.f32.xlu0 %v3701
        %v3703 = vpop.xlane.xlu0 %3702
        %v3704 = vrcp.pop %v3703
        %v3705 = vmul.f32 %v3700, %v3704
        %v3706 = vsub.f32 1.0, %v3693
        %v3707 = vmul.f32 %v3706, %v3471
        %v3708 = vmul.f32 %v3707, %v931
        %v3709 = vmul.f32 %v3693, %v3705
        %v3711 = vsel %vm1305, %v3708, 0
        %3713 = vmatprep.subr.mxu0 0.0
        %3714 = vmatpush1.msra.mxu0 0.0
        %3715 = vmatprep.subr.mxu0 0.0
        %3716 = vmatpush1.msra.mxu0 0.0
        %3717 = vmatprep.subr.mxu0 0.0
        %3718 = vmatpush1.msra.mxu0 0.0
        %3719 = vmatprep.subr.mxu0 0.0
        %3720 = vmatpush1.msra.mxu0 0.0
        %3721 = vmatprep.subr.mxu0 0.0
        %3722 = vmatpush1.msra.mxu0 0.0
        %3723 = vmatprep.subr.mxu0 0.0
        %3724 = vmatpush1.msra.mxu0 0.0
        %3725 = vmatprep.subr.mxu0 0.0
        %3726 = vmatpush1.msra.mxu0 0.0
        %3727 = vmatprep.subr.mxu0 0.0
        %3728 = vmatpush1.msra.mxu0 0.0
        %3729 = vmatprep.subr.mxu0 0.0
        %3730 = vmatpush1.msra.mxu0 0.0
        %3731 = vmatprep.subr.mxu0 0.0
        %3732 = vmatpush1.msra.mxu0 0.0
        %3733 = vmatprep.subr.mxu0 0.0
        %3734 = vmatpush1.msra.mxu0 0.0
        %3735 = vmatprep.subr.mxu0 0.0
        %3736 = vmatpush1.msra.mxu0 0.0
        %3737 = vmatprep.subr.mxu0 0.0
        %3738 = vmatpush1.msra.mxu0 0.0
        %3739 = vmatprep.subr.mxu0 0.0
        %3740 = vmatpush1.msra.mxu0 0.0
        %3741 = vmatprep.subr.mxu0 0.0
        %3742 = vmatpush1.msra.mxu0 0.0
        %3743 = vmatprep.subr.mxu0 0.0
        %3744 = vmatpush1.msra.mxu0 %v941
        %3745 = vmatprep.subr.mxu0 0.0
        %3746 = vmatpush2.msra.mxu0 0.0
        %3747 = vmatprep.subr.mxu0 0.0
        %3748 = vmatpush2.msra.mxu0 0.0
        %3749 = vmatprep.subr.mxu0 0.0
        %3750 = vmatpush2.msra.mxu0 0.0
        %3751 = vmatprep.subr.mxu0 0.0
        %3752 = vmatpush2.msra.mxu0 0.0
        %3753 = vmatprep.subr.mxu0 0.0
        %3754 = vmatpush2.msra.mxu0 0.0
        %3755 = vmatprep.subr.mxu0 0.0
        %3756 = vmatpush2.msra.mxu0 0.0
        %3757 = vmatprep.subr.mxu0 0.0
        %3758 = vmatpush2.msra.mxu0 0.0
        %3759 = vmatprep.subr.mxu0 0.0
        %3760 = vmatpush2.msra.mxu0 0.0
        %3761 = vmatprep.subr.mxu0 0.0
        %3762 = vmatpush2.msra.mxu0 0.0
        %3763 = vmatprep.subr.mxu0 0.0
        %3764 = vmatpush2.msra.mxu0 0.0
        %3765 = vmatprep.subr.mxu0 0.0
        %3766 = vmatpush2.msra.mxu0 0.0
        %3767 = vmatprep.subr.mxu0 0.0
        %3768 = vmatpush2.msra.mxu0 0.0
        %3769 = vmatprep.subr.mxu0 0.0
        %3770 = vmatpush2.msra.mxu0 0.0
        %3771 = vmatprep.subr.mxu0 0.0
        %3772 = vmatpush2.msra.mxu0 0.0
        %3773 = vmatprep.subr.mxu0 0.0
        %3774 = vmatpush2.msra.mxu0 0.0
        %3775 = vmatprep.subr.mxu0 0.0
        %3776 = vmatpush2.msra.mxu0 0.0
        %3777 = vmatprep.mubr.f32.mxu0 0.0
        %3778 = vmatmul.mubr.f32.gmra.mxu0 %v3711
        %v3779 = vpop.f32.mrf.mxu0
        %v3780 = vadd.f32 0.0, %v3779
        %v3781 = vpop.f32.mrf.mxu0
        %3782 = vdwg.mxu0
        %v3783 = vadd.f32 %v3709, %v3780
        %v3784 = vsel %vm1897, %v3783, -1.0
        %v3785 = vsel %vm1797, %v3784, -inf
        %3786 = vmax.xlane.f32.xlu0 %v3785
        %v3787 = vpop.xlane.xlu0 %3786
        %vm3788 = vcmp.ge.f32.partialorder %v3784, %v3787
        %v3789 = vsel %vm3788, %v935, 128.0
        %v3790 = vsel %vm1797, %v3789, inf
        %3791 = vmin.xlane.f32.xlu0 %v3790
        %v3792 = vpop.xlane.xlu0 %3791
        %vm3793 = vcmp.eq.s32.totalorder %v934, 3
        %v3794 = vsel %vm3793, 1, 0
        %v3795 = vcvt.s32.f32 %v3794
        %v3796 = vmul.f32 %v3792, %v3795
        %v3797 = vadd.f32 %v2862, %v3796
        %v3798 = vmin.f32 %v3792, 63.0
        %vm3799 = vcmp.eq.f32.partialorder %v935, %v3798
        %v3800 = vsel %vm3799, 1, 0
        %v3801 = vcvt.s32.f32 %v3800
        %3802 = vmatprep.subr.mxu0 0.0
        %3803 = vmatpush1.msra.mxu0 %v1931
        %3804 = vmatprep.subr.mxu0 0.0
        %3805 = vmatpush1.msra.mxu0 %v1930
        %3806 = vmatprep.subr.mxu0 0.0
        %3807 = vmatpush1.msra.mxu0 %v1929
        %3808 = vmatprep.subr.mxu0 0.0
        %3809 = vmatpush1.msra.mxu0 %v1928
        %3810 = vmatprep.subr.mxu0 0.0
        %3811 = vmatpush1.msra.mxu0 %v1927
        %3812 = vmatprep.subr.mxu0 0.0
        %3813 = vmatpush1.msra.mxu0 %v1926
        %3814 = vmatprep.subr.mxu0 0.0
        %3815 = vmatpush1.msra.mxu0 %v1925
        %3816 = vmatprep.subr.mxu0 0.0
        %3817 = vmatpush1.msra.mxu0 %v1924
        %3818 = vmatprep.subr.mxu0 0.0
        %3819 = vmatpush1.msra.mxu0 %v1923
        %3820 = vmatprep.subr.mxu0 0.0
        %3821 = vmatpush1.msra.mxu0 %v1922
        %3822 = vmatprep.subr.mxu0 0.0
        %3823 = vmatpush1.msra.mxu0 %v1921
        %3824 = vmatprep.subr.mxu0 0.0
        %3825 = vmatpush1.msra.mxu0 %v1920
        %3826 = vmatprep.subr.mxu0 0.0
        %3827 = vmatpush1.msra.mxu0 %v1919
        %3828 = vmatprep.subr.mxu0 0.0
        %3829 = vmatpush1.msra.mxu0 %v1918
        %3830 = vmatprep.subr.mxu0 0.0
        %3831 = vmatpush1.msra.mxu0 %v1917
        %3832 = vmatprep.subr.mxu0 0.0
        %3833 = vmatpush1.msra.mxu0 %v1916
        %3834 = vmatprep.subr.mxu0 0.0
        %3835 = vmatpush2.msra.mxu0 0.0
        %3836 = vmatprep.subr.mxu0 0.0
        %3837 = vmatpush2.msra.mxu0 0.0
        %3838 = vmatprep.subr.mxu0 0.0
        %3839 = vmatpush2.msra.mxu0 0.0
        %3840 = vmatprep.subr.mxu0 0.0
        %3841 = vmatpush2.msra.mxu0 0.0
        %3842 = vmatprep.subr.mxu0 0.0
        %3843 = vmatpush2.msra.mxu0 0.0
        %3844 = vmatprep.subr.mxu0 0.0
        %3845 = vmatpush2.msra.mxu0 0.0
        %3846 = vmatprep.subr.mxu0 0.0
        %3847 = vmatpush2.msra.mxu0 0.0
        %3848 = vmatprep.subr.mxu0 0.0
        %3849 = vmatpush2.msra.mxu0 0.0
        %3850 = vmatprep.subr.mxu0 0.0
        %3851 = vmatpush2.msra.mxu0 0.0
        %3852 = vmatprep.subr.mxu0 0.0
        %3853 = vmatpush2.msra.mxu0 0.0
        %3854 = vmatprep.subr.mxu0 0.0
        %3855 = vmatpush2.msra.mxu0 0.0
        %3856 = vmatprep.subr.mxu0 0.0
        %3857 = vmatpush2.msra.mxu0 0.0
        %3858 = vmatprep.subr.mxu0 0.0
        %3859 = vmatpush2.msra.mxu0 0.0
        %3860 = vmatprep.subr.mxu0 0.0
        %3861 = vmatpush2.msra.mxu0 0.0
        %3862 = vmatprep.subr.mxu0 0.0
        %3863 = vmatpush2.msra.mxu0 0.0
        %3864 = vmatprep.subr.mxu0 0.0
        %3865 = vmatpush2.msra.mxu0 0.0
        %3866 = vmatprep.mubr.f32.mxu0 0.0
        %3867 = vmatmul.mubr.f32.gmra.mxu0 %v3801
        %v3868 = vpop.f32.mrf.mxu0
        %v3869 = vadd.f32 0.0, %v3868
        %v3870 = vpop.f32.mrf.mxu0
        %3871 = vdwg.mxu0
        %3872 = vmatprep.subr.mxu0 0.0
        %3873 = vmatpush1.msra.mxu0 %v962
        %3874 = vmatprep.subr.mxu0 0.0
        %3875 = vmatpush1.msra.mxu0 %v961
        %3876 = vmatprep.subr.mxu0 0.0
        %3877 = vmatpush1.msra.mxu0 %v960
        %3878 = vmatprep.subr.mxu0 0.0
        %3879 = vmatpush1.msra.mxu0 %v959
        %3880 = vmatprep.subr.mxu0 0.0
        %3881 = vmatpush1.msra.mxu0 %v958
        %3882 = vmatprep.subr.mxu0 0.0
        %3883 = vmatpush1.msra.mxu0 %v957
        %3884 = vmatprep.subr.mxu0 0.0
        %3885 = vmatpush1.msra.mxu0 %v956
        %3886 = vmatprep.subr.mxu0 0.0
        %3887 = vmatpush1.msra.mxu0 %v955
        %3888 = vmatprep.subr.mxu0 0.0
        %3889 = vmatpush1.msra.mxu0 %v954
        %3890 = vmatprep.subr.mxu0 0.0
        %3891 = vmatpush1.msra.mxu0 %v953
        %3892 = vmatprep.subr.mxu0 0.0
        %3893 = vmatpush1.msra.mxu0 %v952
        %3894 = vmatprep.subr.mxu0 0.0
        %3895 = vmatpush1.msra.mxu0 %v951
        %3896 = vmatprep.subr.mxu0 0.0
        %3897 = vmatpush1.msra.mxu0 %v950
        %3898 = vmatprep.subr.mxu0 0.0
        %3899 = vmatpush1.msra.mxu0 %v949
        %3900 = vmatprep.subr.mxu0 0.0
        %3901 = vmatpush1.msra.mxu0 %v948
        %3902 = vmatprep.subr.mxu0 0.0
        %3903 = vmatpush1.msra.mxu0 %v947
        %3904 = vmatprep.subr.mxu0 0.0
        %3905 = vmatpush2.msra.mxu0 0.0
        %3906 = vmatprep.subr.mxu0 0.0
        %3907 = vmatpush2.msra.mxu0 0.0
        %3908 = vmatprep.subr.mxu0 0.0
        %3909 = vmatpush2.msra.mxu0 0.0
        %3910 = vmatprep.subr.mxu0 0.0
        %3911 = vmatpush2.msra.mxu0 0.0
        %3912 = vmatprep.subr.mxu0 0.0
        %3913 = vmatpush2.msra.mxu0 0.0
        %3914 = vmatprep.subr.mxu0 0.0
        %3915 = vmatpush2.msra.mxu0 0.0
        %3916 = vmatprep.subr.mxu0 0.0
        %3917 = vmatpush2.msra.mxu0 0.0
        %3918 = vmatprep.subr.mxu0 0.0
        %3919 = vmatpush2.msra.mxu0 0.0
        %3920 = vmatprep.subr.mxu0 0.0
        %3921 = vmatpush2.msra.mxu0 0.0
        %3922 = vmatprep.subr.mxu0 0.0
        %3923 = vmatpush2.msra.mxu0 0.0
        %3924 = vmatprep.subr.mxu0 0.0
        %3925 = vmatpush2.msra.mxu0 0.0
        %3926 = vmatprep.subr.mxu0 0.0
        %3927 = vmatpush2.msra.mxu0 0.0
        %3928 = vmatprep.subr.mxu0 0.0
        %3929 = vmatpush2.msra.mxu0 0.0
        %3930 = vmatprep.subr.mxu0 0.0
        %3931 = vmatpush2.msra.mxu0 0.0
        %3932 = vmatprep.subr.mxu0 0.0
        %3933 = vmatpush2.msra.mxu0 0.0
        %3934 = vmatprep.subr.mxu0 0.0
        %3935 = vmatpush2.msra.mxu0 0.0
        %3936 = vmatprep.mubr.f32.mxu0 0.0
        %3937 = vmatmul.mubr.f32.gmra.mxu0 %v3869
        %v3938 = vpop.f32.mrf.mxu0
        %v3939 = vadd.f32 0.0, %v3938
        %v3940 = vpop.f32.mrf.mxu0
        %3941 = vdwg.mxu0
        %vm3942 = vcmp.eq.s32.totalorder %v943, 3
        %v3943 = vsel %vm3942, 1, 0
        %v3944 = vcvt.s32.f32 %v3943
        %3945 = vmatprep.subr.mxu0 0.0
        %3946 = vmatpush1.msra.mxu0 %v1051
        %3947 = vmatprep.subr.mxu0 0.0
        %3948 = vmatpush1.msra.mxu0 %v1050
        %3949 = vmatprep.subr.mxu0 0.0
        %3950 = vmatpush1.msra.mxu0 %v1049
        %3951 = vmatprep.subr.mxu0 0.0
        %3952 = vmatpush1.msra.mxu0 %v1048
        %3953 = vmatprep.subr.mxu0 0.0
        %3954 = vmatpush1.msra.mxu0 %v1047
        %3955 = vmatprep.subr.mxu0 0.0
        %3956 = vmatpush1.msra.mxu0 %v1046
        %3957 = vmatprep.subr.mxu0 0.0
        %3958 = vmatpush1.msra.mxu0 %v1045
        %3959 = vmatprep.subr.mxu0 0.0
        %3960 = vmatpush1.msra.mxu0 %v1044
        %3961 = vmatprep.subr.mxu0 0.0
        %3962 = vmatpush1.msra.mxu0 %v1043
        %3963 = vmatprep.subr.mxu0 0.0
        %3964 = vmatpush1.msra.mxu0 %v1042
        %3965 = vmatprep.subr.mxu0 0.0
        %3966 = vmatpush1.msra.mxu0 %v1041
        %3967 = vmatprep.subr.mxu0 0.0
        %3968 = vmatpush1.msra.mxu0 %v1040
        %3969 = vmatprep.subr.mxu0 0.0
        %3970 = vmatpush1.msra.mxu0 %v1039
        %3971 = vmatprep.subr.mxu0 0.0
        %3972 = vmatpush1.msra.mxu0 %v1038
        %3973 = vmatprep.subr.mxu0 0.0
        %3974 = vmatpush1.msra.mxu0 %v1037
        %3975 = vmatprep.subr.mxu0 0.0
        %3976 = vmatpush1.msra.mxu0 %v1036
        %3977 = vmatprep.subr.mxu0 0.0
        %3978 = vmatpush2.msra.mxu0 0.0
        %3979 = vmatprep.subr.mxu0 0.0
        %3980 = vmatpush2.msra.mxu0 0.0
        %3981 = vmatprep.subr.mxu0 0.0
        %3982 = vmatpush2.msra.mxu0 0.0
        %3983 = vmatprep.subr.mxu0 0.0
        %3984 = vmatpush2.msra.mxu0 0.0
        %3985 = vmatprep.subr.mxu0 0.0
        %3986 = vmatpush2.msra.mxu0 0.0
        %3987 = vmatprep.subr.mxu0 0.0
        %3988 = vmatpush2.msra.mxu0 0.0
        %3989 = vmatprep.subr.mxu0 0.0
        %3990 = vmatpush2.msra.mxu0 0.0
        %3991 = vmatprep.subr.mxu0 0.0
        %3992 = vmatpush2.msra.mxu0 0.0
        %3993 = vmatprep.subr.mxu0 0.0
        %3994 = vmatpush2.msra.mxu0 0.0
        %3995 = vmatprep.subr.mxu0 0.0
        %3996 = vmatpush2.msra.mxu0 0.0
        %3997 = vmatprep.subr.mxu0 0.0
        %3998 = vmatpush2.msra.mxu0 0.0
        %3999 = vmatprep.subr.mxu0 0.0
        %4000 = vmatpush2.msra.mxu0 0.0
        %4001 = vmatprep.subr.mxu0 0.0
        %4002 = vmatpush2.msra.mxu0 0.0
        %4003 = vmatprep.subr.mxu0 0.0
        %4004 = vmatpush2.msra.mxu0 0.0
        %4005 = vmatprep.subr.mxu0 0.0
        %4006 = vmatpush2.msra.mxu0 0.0
        %4007 = vmatprep.subr.mxu0 0.0
        %4008 = vmatpush2.msra.mxu0 0.0
        %4009 = vmatprep.mubr.f32.mxu0 0.0
        %4010 = vmatmul.mubr.f32.gmra.mxu0 %v3869
        %v4011 = vpop.f32.mrf.mxu0
        %v4012 = vadd.f32 0.0, %v4011
        %v4013 = vpop.f32.mrf.mxu0
        %4014 = vdwg.mxu0
        %v4015 = vlaneseq
        %v4016 = vshrl.u32 %v4015, 7
        %v4017 = vsub.s32 0, %v4016
        %v4018 = vrot.slane %v4012, %v4017
        %v4019 = vmul.f32 %v3944, %v4018
        %v4020 = vadd.f32 %v3085, %v4019
        %4021 = vmatprep.subr.mxu0 0.0
        %4022 = vmatpush1.msra.mxu0 %v1143
        %4023 = vmatprep.subr.mxu0 0.0
        %4024 = vmatpush1.msra.mxu0 %v1142
        %4025 = vmatprep.subr.mxu0 0.0
        %4026 = vmatpush1.msra.mxu0 %v1141
        %4027 = vmatprep.subr.mxu0 0.0
        %4028 = vmatpush1.msra.mxu0 %v1140
        %4029 = vmatprep.subr.mxu0 0.0
        %4030 = vmatpush1.msra.mxu0 %v1139
        %4031 = vmatprep.subr.mxu0 0.0
        %4032 = vmatpush1.msra.mxu0 %v1138
        %4033 = vmatprep.subr.mxu0 0.0
        %4034 = vmatpush1.msra.mxu0 %v1137
        %4035 = vmatprep.subr.mxu0 0.0
        %4036 = vmatpush1.msra.mxu0 %v1136
        %4037 = vmatprep.subr.mxu0 0.0
        %4038 = vmatpush1.msra.mxu0 %v1135
        %4039 = vmatprep.subr.mxu0 0.0
        %4040 = vmatpush1.msra.mxu0 %v1134
        %4041 = vmatprep.subr.mxu0 0.0
        %4042 = vmatpush1.msra.mxu0 %v1133
        %4043 = vmatprep.subr.mxu0 0.0
        %4044 = vmatpush1.msra.mxu0 %v1132
        %4045 = vmatprep.subr.mxu0 0.0
        %4046 = vmatpush1.msra.mxu0 %v1131
        %4047 = vmatprep.subr.mxu0 0.0
        %4048 = vmatpush1.msra.mxu0 %v1130
        %4049 = vmatprep.subr.mxu0 0.0
        %4050 = vmatpush1.msra.mxu0 %v1129
        %4051 = vmatprep.subr.mxu0 0.0
        %4052 = vmatpush1.msra.mxu0 %v1128
        %4053 = vmatprep.subr.mxu0 0.0
        %4054 = vmatpush2.msra.mxu0 0.0
        %4055 = vmatprep.subr.mxu0 0.0
        %4056 = vmatpush2.msra.mxu0 0.0
        %4057 = vmatprep.subr.mxu0 0.0
        %4058 = vmatpush2.msra.mxu0 0.0
        %4059 = vmatprep.subr.mxu0 0.0
        %4060 = vmatpush2.msra.mxu0 0.0
        %4061 = vmatprep.subr.mxu0 0.0
        %4062 = vmatpush2.msra.mxu0 0.0
        %4063 = vmatprep.subr.mxu0 0.0
        %4064 = vmatpush2.msra.mxu0 0.0
        %4065 = vmatprep.subr.mxu0 0.0
        %4066 = vmatpush2.msra.mxu0 0.0
        %4067 = vmatprep.subr.mxu0 0.0
        %4068 = vmatpush2.msra.mxu0 0.0
        %4069 = vmatprep.subr.mxu0 0.0
        %4070 = vmatpush2.msra.mxu0 0.0
        %4071 = vmatprep.subr.mxu0 0.0
        %4072 = vmatpush2.msra.mxu0 0.0
        %4073 = vmatprep.subr.mxu0 0.0
        %4074 = vmatpush2.msra.mxu0 0.0
        %4075 = vmatprep.subr.mxu0 0.0
        %4076 = vmatpush2.msra.mxu0 0.0
        %4077 = vmatprep.subr.mxu0 0.0
        %4078 = vmatpush2.msra.mxu0 0.0
        %4079 = vmatprep.subr.mxu0 0.0
        %4080 = vmatpush2.msra.mxu0 0.0
        %4081 = vmatprep.subr.mxu0 0.0
        %4082 = vmatpush2.msra.mxu0 0.0
        %4083 = vmatprep.subr.mxu0 0.0
        %4084 = vmatpush2.msra.mxu0 0.0
        %4085 = vmatprep.mubr.f32.mxu0 0.0
        %4086 = vmatmul.mubr.f32.gmra.mxu0 %v3869
        %v4087 = vpop.f32.mrf.mxu0
        %v4088 = vadd.f32 0.0, %v4087
        %v4089 = vpop.f32.mrf.mxu0
        %4090 = vdwg.mxu0
        %v4091 = vlaneseq
        %v4092 = vshrl.u32 %v4091, 7
        %v4093 = vsub.s32 0, %v4092
        %v4094 = vrot.slane %v4088, %v4093
        %v4095 = vmul.f32 %v3944, %v4094
        %v4096 = vadd.f32 %v3161, %v4095
        %4097 = vmatprep.subr.mxu0 0.0
        %4098 = vmatpush1.xpose.msra.mxu0 0.0
        %4099 = vmatprep.subr.mxu0 0.0
        %4100 = vmatpush1.xpose.msra.mxu0 0.0
        %4101 = vmatprep.subr.mxu0 0.0
        %4102 = vmatpush1.xpose.msra.mxu0 0.0
        %4103 = vmatprep.subr.mxu0 0.0
        %4104 = vmatpush1.xpose.msra.mxu0 0.0
        %4105 = vmatprep.subr.mxu0 0.0
        %4106 = vmatpush1.xpose.msra.mxu0 0.0
        %4107 = vmatprep.subr.mxu0 0.0
        %4108 = vmatpush1.xpose.msra.mxu0 0.0
        %4109 = vmatprep.subr.mxu0 0.0
        %4110 = vmatpush1.xpose.msra.mxu0 0.0
        %4111 = vmatprep.subr.mxu0 0.0
        %4112 = vmatpush1.xpose.msra.mxu0 0.0
        %4113 = vmatprep.subr.mxu0 0.0
        %4114 = vmatpush1.xpose.msra.mxu0 0.0
        %4115 = vmatprep.subr.mxu0 0.0
        %4116 = vmatpush1.xpose.msra.mxu0 0.0
        %4117 = vmatprep.subr.mxu0 0.0
        %4118 = vmatpush1.xpose.msra.mxu0 0.0
        %4119 = vmatprep.subr.mxu0 0.0
        %4120 = vmatpush1.xpose.msra.mxu0 0.0
        %4121 = vmatprep.subr.mxu0 0.0
        %4122 = vmatpush1.xpose.msra.mxu0 0.0
        %4123 = vmatprep.subr.mxu0 0.0
        %4124 = vmatpush1.xpose.msra.mxu0 0.0
        %4125 = vmatprep.subr.mxu0 0.0
        %4126 = vmatpush1.xpose.msra.mxu0 0.0
        %4127 = vmatprep.subr.mxu0 0.0
        %4128 = vmatpush1.xpose.msra.mxu0 %v4020
        %4129 = vmatprep.subr.mxu0 0.0
        %4130 = vmatpush2.xpose.msra.mxu0 0.0
        %4131 = vmatprep.subr.mxu0 0.0
        %4132 = vmatpush2.xpose.msra.mxu0 0.0
        %4133 = vmatprep.subr.mxu0 0.0
        %4134 = vmatpush2.xpose.msra.mxu0 0.0
        %4135 = vmatprep.subr.mxu0 0.0
        %4136 = vmatpush2.xpose.msra.mxu0 0.0
        %4137 = vmatprep.subr.mxu0 0.0
        %4138 = vmatpush2.xpose.msra.mxu0 0.0
        %4139 = vmatprep.subr.mxu0 0.0
        %4140 = vmatpush2.xpose.msra.mxu0 0.0
        %4141 = vmatprep.subr.mxu0 0.0
        %4142 = vmatpush2.xpose.msra.mxu0 0.0
        %4143 = vmatprep.subr.mxu0 0.0
        %4144 = vmatpush2.xpose.msra.mxu0 0.0
        %4145 = vmatprep.subr.mxu0 0.0
        %4146 = vmatpush2.xpose.msra.mxu0 0.0
        %4147 = vmatprep.subr.mxu0 0.0
        %4148 = vmatpush2.xpose.msra.mxu0 0.0
        %4149 = vmatprep.subr.mxu0 0.0
        %4150 = vmatpush2.xpose.msra.mxu0 0.0
        %4151 = vmatprep.subr.mxu0 0.0
        %4152 = vmatpush2.xpose.msra.mxu0 0.0
        %4153 = vmatprep.subr.mxu0 0.0
        %4154 = vmatpush2.xpose.msra.mxu0 0.0
        %4155 = vmatprep.subr.mxu0 0.0
        %4156 = vmatpush2.xpose.msra.mxu0 0.0
        %4157 = vmatprep.subr.mxu0 0.0
        %4158 = vmatpush2.xpose.msra.mxu0 0.0
        %4159 = vmatprep.subr.mxu0 0.0
        %4160 = vmatpush2.xpose.msra.mxu0 0.0
        %4161 = vmatprep.mubr.f32.mxu0 0.0
        %4162 = vmatmul.mubr.f32.gmra.mxu0 %v3939
        %v4163 = vpop.f32.mrf.mxu0
        %v4164 = vadd.f32 0.0, %v4163
        %v4165 = vpop.f32.mrf.mxu0
        %4166 = vdwg.mxu0
        %v4167 = vmul.f32 %v4164, 0.17677669
        %vm4168 = vcmp.le.s32.totalorder %v934, 3
        %v4169 = vsel %vm4168, %v4167, -3.4028235e+38
        %v4170 = vsel %vm1293, %v4169, -inf
        %4171 = vmax.xlane.f32.xlu0 %v4170
        %v4172 = vpop.xlane.xlu0 %4171
        %v4173 = vsub.f32 %v4169, %v4172
        %v4174 = vmul.f32 %v4173, 1.442695
        %v4175 = vpow.pop %v4174
        %v4176 = vsel %vm1293, %v4175, 0.0
        %4177 = vadd.xlane.f32.xlu0 %v4176
        %v4178 = vpop.xlane.xlu0 %4177
        %v4179 = vrcp.pop %v4178
        %v4180 = vmul.f32 %v4175, %v4179
        %v4182 = vsel %vm1305, %v4180, 0
        %4184 = vmatprep.subr.mxu0 0.0
        %4185 = vmatpush1.msra.mxu0 0.0
        %4186 = vmatprep.subr.mxu0 0.0
        %4187 = vmatpush1.msra.mxu0 0.0
        %4188 = vmatprep.subr.mxu0 0.0
        %4189 = vmatpush1.msra.mxu0 0.0
        %4190 = vmatprep.subr.mxu0 0.0
        %4191 = vmatpush1.msra.mxu0 0.0
        %4192 = vmatprep.subr.mxu0 0.0
        %4193 = vmatpush1.msra.mxu0 0.0
        %4194 = vmatprep.subr.mxu0 0.0
        %4195 = vmatpush1.msra.mxu0 0.0
        %4196 = vmatprep.subr.mxu0 0.0
        %4197 = vmatpush1.msra.mxu0 0.0
        %4198 = vmatprep.subr.mxu0 0.0
        %4199 = vmatpush1.msra.mxu0 0.0
        %4200 = vmatprep.subr.mxu0 0.0
        %4201 = vmatpush1.msra.mxu0 0.0
        %4202 = vmatprep.subr.mxu0 0.0
        %4203 = vmatpush1.msra.mxu0 0.0
        %4204 = vmatprep.subr.mxu0 0.0
        %4205 = vmatpush1.msra.mxu0 0.0
        %4206 = vmatprep.subr.mxu0 0.0
        %4207 = vmatpush1.msra.mxu0 0.0
        %4208 = vmatprep.subr.mxu0 0.0
        %4209 = vmatpush1.msra.mxu0 0.0
        %4210 = vmatprep.subr.mxu0 0.0
        %4211 = vmatpush1.msra.mxu0 0.0
        %4212 = vmatprep.subr.mxu0 0.0
        %4213 = vmatpush1.msra.mxu0 0.0
        %4214 = vmatprep.subr.mxu0 0.0
        %4215 = vmatpush1.msra.mxu0 %v4096
        %4216 = vmatprep.subr.mxu0 0.0
        %4217 = vmatpush2.msra.mxu0 0.0
        %4218 = vmatprep.subr.mxu0 0.0
        %4219 = vmatpush2.msra.mxu0 0.0
        %4220 = vmatprep.subr.mxu0 0.0
        %4221 = vmatpush2.msra.mxu0 0.0
        %4222 = vmatprep.subr.mxu0 0.0
        %4223 = vmatpush2.msra.mxu0 0.0
        %4224 = vmatprep.subr.mxu0 0.0
        %4225 = vmatpush2.msra.mxu0 0.0
        %4226 = vmatprep.subr.mxu0 0.0
        %4227 = vmatpush2.msra.mxu0 0.0
        %4228 = vmatprep.subr.mxu0 0.0
        %4229 = vmatpush2.msra.mxu0 0.0
        %4230 = vmatprep.subr.mxu0 0.0
        %4231 = vmatpush2.msra.mxu0 0.0
        %4232 = vmatprep.subr.mxu0 0.0
        %4233 = vmatpush2.msra.mxu0 0.0
        %4234 = vmatprep.subr.mxu0 0.0
        %4235 = vmatpush2.msra.mxu0 0.0
        %4236 = vmatprep.subr.mxu0 0.0
        %4237 = vmatpush2.msra.mxu0 0.0
        %4238 = vmatprep.subr.mxu0 0.0
        %4239 = vmatpush2.msra.mxu0 0.0
        %4240 = vmatprep.subr.mxu0 0.0
        %4241 = vmatpush2.msra.mxu0 0.0
        %4242 = vmatprep.subr.mxu0 0.0
        %4243 = vmatpush2.msra.mxu0 0.0
        %4244 = vmatprep.subr.mxu0 0.0
        %4245 = vmatpush2.msra.mxu0 0.0
        %4246 = vmatprep.subr.mxu0 0.0
        %4247 = vmatpush2.msra.mxu0 0.0
        %4248 = vmatprep.mubr.f32.mxu0 0.0
        %4249 = vmatmul.mubr.f32.gmra.mxu0 %v4182
        %v4250 = vpop.f32.mrf.mxu0
        %v4251 = vadd.f32 %v3869, %v4250
        %v4252 = vpop.f32.mrf.mxu0
        %4253 = vdwg.mxu0
        %4254 = vmatprep.subr.mxu0 0.0
        %4255 = vmatpush1.msra.mxu0 %v1394
        %4256 = vmatprep.subr.mxu0 0.0
        %4257 = vmatpush1.msra.mxu0 %v1393
        %4258 = vmatprep.subr.mxu0 0.0
        %4259 = vmatpush1.msra.mxu0 %v1392
        %4260 = vmatprep.subr.mxu0 0.0
        %4261 = vmatpush1.msra.mxu0 %v1391
        %4262 = vmatprep.subr.mxu0 0.0
        %4263 = vmatpush1.msra.mxu0 %v1390
        %4264 = vmatprep.subr.mxu0 0.0
        %4265 = vmatpush1.msra.mxu0 %v1389
        %4266 = vmatprep.subr.mxu0 0.0
        %4267 = vmatpush1.msra.mxu0 %v1388
        %4268 = vmatprep.subr.mxu0 0.0
        %4269 = vmatpush1.msra.mxu0 %v1387
        %4270 = vmatprep.subr.mxu0 0.0
        %4271 = vmatpush1.msra.mxu0 %v1386
        %4272 = vmatprep.subr.mxu0 0.0
        %4273 = vmatpush1.msra.mxu0 %v1385
        %4274 = vmatprep.subr.mxu0 0.0
        %4275 = vmatpush1.msra.mxu0 %v1384
        %4276 = vmatprep.subr.mxu0 0.0
        %4277 = vmatpush1.msra.mxu0 %v1383
        %4278 = vmatprep.subr.mxu0 0.0
        %4279 = vmatpush1.msra.mxu0 %v1382
        %4280 = vmatprep.subr.mxu0 0.0
        %4281 = vmatpush1.msra.mxu0 %v1381
        %4282 = vmatprep.subr.mxu0 0.0
        %4283 = vmatpush1.msra.mxu0 %v1380
        %4284 = vmatprep.subr.mxu0 0.0
        %4285 = vmatpush1.msra.mxu0 %v1379
        %4286 = vmatprep.subr.mxu0 0.0
        %4287 = vmatpush2.msra.mxu0 0.0
        %4288 = vmatprep.subr.mxu0 0.0
        %4289 = vmatpush2.msra.mxu0 0.0
        %4290 = vmatprep.subr.mxu0 0.0
        %4291 = vmatpush2.msra.mxu0 0.0
        %4292 = vmatprep.subr.mxu0 0.0
        %4293 = vmatpush2.msra.mxu0 0.0
        %4294 = vmatprep.subr.mxu0 0.0
        %4295 = vmatpush2.msra.mxu0 0.0
        %4296 = vmatprep.subr.mxu0 0.0
        %4297 = vmatpush2.msra.mxu0 0.0
        %4298 = vmatprep.subr.mxu0 0.0
        %4299 = vmatpush2.msra.mxu0 0.0
        %4300 = vmatprep.subr.mxu0 0.0
        %4301 = vmatpush2.msra.mxu0 0.0
        %4302 = vmatprep.subr.mxu0 0.0
        %4303 = vmatpush2.msra.mxu0 0.0
        %4304 = vmatprep.subr.mxu0 0.0
        %4305 = vmatpush2.msra.mxu0 0.0
        %4306 = vmatprep.subr.mxu0 0.0
        %4307 = vmatpush2.msra.mxu0 0.0
        %4308 = vmatprep.subr.mxu0 0.0
        %4309 = vmatpush2.msra.mxu0 0.0
        %4310 = vmatprep.subr.mxu0 0.0
        %4311 = vmatpush2.msra.mxu0 0.0
        %4312 = vmatprep.subr.mxu0 0.0
        %4313 = vmatpush2.msra.mxu0 0.0
        %4314 = vmatprep.subr.mxu0 0.0
        %4315 = vmatpush2.msra.mxu0 0.0
        %4316 = vmatprep.subr.mxu0 0.0
        %4317 = vmatpush2.msra.mxu0 0.0
        %4318 = vmatprep.mubr.f32.mxu0 0.0
        %4319 = vmatmul.mubr.f32.gmra.mxu0 %v4251
        %v4320 = vpop.f32.mrf.mxu0
        %v4321 = vadd.f32 0.0, %v4320
        %v4322 = vpop.f32.mrf.mxu0
        %4323 = vdwg.mxu0
        %4324 = vmatprep.subr.mxu0 0.0
        %4325 = vmatpush1.xpose.msra.mxu0 0.0
        %4326 = vmatprep.subr.mxu0 0.0
        %4327 = vmatpush1.xpose.msra.mxu0 0.0
        %4328 = vmatprep.subr.mxu0 0.0
        %4329 = vmatpush1.xpose.msra.mxu0 0.0
        %4330 = vmatprep.subr.mxu0 0.0
        %4331 = vmatpush1.xpose.msra.mxu0 0.0
        %4332 = vmatprep.subr.mxu0 0.0
        %4333 = vmatpush1.xpose.msra.mxu0 0.0
        %4334 = vmatprep.subr.mxu0 0.0
        %4335 = vmatpush1.xpose.msra.mxu0 0.0
        %4336 = vmatprep.subr.mxu0 0.0
        %4337 = vmatpush1.xpose.msra.mxu0 0.0
        %4338 = vmatprep.subr.mxu0 0.0
        %4339 = vmatpush1.xpose.msra.mxu0 0.0
        %4340 = vmatprep.subr.mxu0 0.0
        %4341 = vmatpush1.xpose.msra.mxu0 0.0
        %4342 = vmatprep.subr.mxu0 0.0
        %4343 = vmatpush1.xpose.msra.mxu0 0.0
        %4344 = vmatprep.subr.mxu0 0.0
        %4345 = vmatpush1.xpose.msra.mxu0 0.0
        %4346 = vmatprep.subr.mxu0 0.0
        %4347 = vmatpush1.xpose.msra.mxu0 0.0
        %4348 = vmatprep.subr.mxu0 0.0
        %4349 = vmatpush1.xpose.msra.mxu0 0.0
        %4350 = vmatprep.subr.mxu0 0.0
        %4351 = vmatpush1.xpose.msra.mxu0 0.0
        %4352 = vmatprep.subr.mxu0 0.0
        %4353 = vmatpush1.xpose.msra.mxu0 0.0
        %4354 = vmatprep.subr.mxu0 0.0
        %4355 = vmatpush1.xpose.msra.mxu0 %v841
        %4356 = vmatprep.subr.mxu0 0.0
        %4357 = vmatpush2.xpose.msra.mxu0 0.0
        %4358 = vmatprep.subr.mxu0 0.0
        %4359 = vmatpush2.xpose.msra.mxu0 0.0
        %4360 = vmatprep.subr.mxu0 0.0
        %4361 = vmatpush2.xpose.msra.mxu0 0.0
        %4362 = vmatprep.subr.mxu0 0.0
        %4363 = vmatpush2.xpose.msra.mxu0 0.0
        %4364 = vmatprep.subr.mxu0 0.0
        %4365 = vmatpush2.xpose.msra.mxu0 0.0
        %4366 = vmatprep.subr.mxu0 0.0
        %4367 = vmatpush2.xpose.msra.mxu0 0.0
        %4368 = vmatprep.subr.mxu0 0.0
        %4369 = vmatpush2.xpose.msra.mxu0 0.0
        %4370 = vmatprep.subr.mxu0 0.0
        %4371 = vmatpush2.xpose.msra.mxu0 0.0
        %4372 = vmatprep.subr.mxu0 0.0
        %4373 = vmatpush2.xpose.msra.mxu0 0.0
        %4374 = vmatprep.subr.mxu0 0.0
        %4375 = vmatpush2.xpose.msra.mxu0 0.0
        %4376 = vmatprep.subr.mxu0 0.0
        %4377 = vmatpush2.xpose.msra.mxu0 0.0
        %4378 = vmatprep.subr.mxu0 0.0
        %4379 = vmatpush2.xpose.msra.mxu0 0.0
        %4380 = vmatprep.subr.mxu0 0.0
        %4381 = vmatpush2.xpose.msra.mxu0 0.0
        %4382 = vmatprep.subr.mxu0 0.0
        %4383 = vmatpush2.xpose.msra.mxu0 0.0
        %4384 = vmatprep.subr.mxu0 0.0
        %4385 = vmatpush2.xpose.msra.mxu0 0.0
        %4386 = vmatprep.subr.mxu0 0.0
        %4387 = vmatpush2.xpose.msra.mxu0 0.0
        %4388 = vmatprep.mubr.f32.mxu0 0.0
        %4389 = vmatmul.mubr.f32.gmra.mxu0 %v4321
        %v4390 = vpop.f32.mrf.mxu0
        %v4391 = vadd.f32 0.0, %v4390
        %v4392 = vpop.f32.mrf.mxu0
        %4393 = vdwg.mxu0
        %v4394 = vmul.f32 %v4391, 0.17677669
        %v4395 = vsel %vm1536, %v4394, -3.4028235e+38
        %v4396 = vsel %vm1293, %v4395, -inf
        %4397 = vmax.xlane.f32.xlu0 %v4396
        %v4398 = vpop.xlane.xlu0 %4397
        %v4399 = vsub.f32 %v4395, %v4398
        %v4400 = vmul.f32 %v4399, 1.442695
        %v4401 = vpow.pop %v4400
        %v4402 = vsel %vm1293, %v4401, 0.0
        %4403 = vadd.xlane.f32.xlu0 %v4402
        %v4404 = vpop.xlane.xlu0 %4403
        %v4405 = vrcp.pop %v4404
        %v4406 = vmul.f32 %v4401, %v4405
        %v4408 = vsel %vm1305, %v4406, 0
        %4410 = vmatprep.subr.mxu0 0.0
        %4411 = vmatpush1.msra.mxu0 0.0
        %4412 = vmatprep.subr.mxu0 0.0
        %4413 = vmatpush1.msra.mxu0 0.0
        %4414 = vmatprep.subr.mxu0 0.0
        %4415 = vmatpush1.msra.mxu0 0.0
        %4416 = vmatprep.subr.mxu0 0.0
        %4417 = vmatpush1.msra.mxu0 0.0
        %4418 = vmatprep.subr.mxu0 0.0
        %4419 = vmatpush1.msra.mxu0 0.0
        %4420 = vmatprep.subr.mxu0 0.0
        %4421 = vmatpush1.msra.mxu0 0.0
        %4422 = vmatprep.subr.mxu0 0.0
        %4423 = vmatpush1.msra.mxu0 0.0
        %4424 = vmatprep.subr.mxu0 0.0
        %4425 = vmatpush1.msra.mxu0 0.0
        %4426 = vmatprep.subr.mxu0 0.0
        %4427 = vmatpush1.msra.mxu0 0.0
        %4428 = vmatprep.subr.mxu0 0.0
        %4429 = vmatpush1.msra.mxu0 0.0
        %4430 = vmatprep.subr.mxu0 0.0
        %4431 = vmatpush1.msra.mxu0 0.0
        %4432 = vmatprep.subr.mxu0 0.0
        %4433 = vmatpush1.msra.mxu0 0.0
        %4434 = vmatprep.subr.mxu0 0.0
        %4435 = vmatpush1.msra.mxu0 0.0
        %4436 = vmatprep.subr.mxu0 0.0
        %4437 = vmatpush1.msra.mxu0 0.0
        %4438 = vmatprep.subr.mxu0 0.0
        %4439 = vmatpush1.msra.mxu0 0.0
        %4440 = vmatprep.subr.mxu0 0.0
        %4441 = vmatpush1.msra.mxu0 %v927
        %4442 = vmatprep.subr.mxu0 0.0
        %4443 = vmatpush2.msra.mxu0 0.0
        %4444 = vmatprep.subr.mxu0 0.0
        %4445 = vmatpush2.msra.mxu0 0.0
        %4446 = vmatprep.subr.mxu0 0.0
        %4447 = vmatpush2.msra.mxu0 0.0
        %4448 = vmatprep.subr.mxu0 0.0
        %4449 = vmatpush2.msra.mxu0 0.0
        %4450 = vmatprep.subr.mxu0 0.0
        %4451 = vmatpush2.msra.mxu0 0.0
        %4452 = vmatprep.subr.mxu0 0.0
        %4453 = vmatpush2.msra.mxu0 0.0
        %4454 = vmatprep.subr.mxu0 0.0
        %4455 = vmatpush2.msra.mxu0 0.0
        %4456 = vmatprep.subr.mxu0 0.0
        %4457 = vmatpush2.msra.mxu0 0.0
        %4458 = vmatprep.subr.mxu0 0.0
        %4459 = vmatpush2.msra.mxu0 0.0
        %4460 = vmatprep.subr.mxu0 0.0
        %4461 = vmatpush2.msra.mxu0 0.0
        %4462 = vmatprep.subr.mxu0 0.0
        %4463 = vmatpush2.msra.mxu0 0.0
        %4464 = vmatprep.subr.mxu0 0.0
        %4465 = vmatpush2.msra.mxu0 0.0
        %4466 = vmatprep.subr.mxu0 0.0
        %4467 = vmatpush2.msra.mxu0 0.0
        %4468 = vmatprep.subr.mxu0 0.0
        %4469 = vmatpush2.msra.mxu0 0.0
        %4470 = vmatprep.subr.mxu0 0.0
        %4471 = vmatpush2.msra.mxu0 0.0
        %4472 = vmatprep.subr.mxu0 0.0
        %4473 = vmatpush2.msra.mxu0 0.0
        %4474 = vmatprep.mubr.f32.mxu0 0.0
        %4475 = vmatmul.mubr.f32.gmra.mxu0 %v4408
        %v4476 = vpop.f32.mrf.mxu0
        %v4477 = vadd.f32 0.0, %v4476
        %v4478 = vpop.f32.mrf.mxu0
        %4479 = vdwg.mxu0
        %4480 = vmatprep.subr.mxu0 0.0
        %4481 = vmatpush1.msra.mxu0 %v1637
        %4482 = vmatprep.subr.mxu0 0.0
        %4483 = vmatpush1.msra.mxu0 %v1636
        %4484 = vmatprep.subr.mxu0 0.0
        %4485 = vmatpush1.msra.mxu0 %v1635
        %4486 = vmatprep.subr.mxu0 0.0
        %4487 = vmatpush1.msra.mxu0 %v1634
        %4488 = vmatprep.subr.mxu0 0.0
        %4489 = vmatpush1.msra.mxu0 %v1633
        %4490 = vmatprep.subr.mxu0 0.0
        %4491 = vmatpush1.msra.mxu0 %v1632
        %4492 = vmatprep.subr.mxu0 0.0
        %4493 = vmatpush1.msra.mxu0 %v1631
        %4494 = vmatprep.subr.mxu0 0.0
        %4495 = vmatpush1.msra.mxu0 %v1630
        %4496 = vmatprep.subr.mxu0 0.0
        %4497 = vmatpush1.msra.mxu0 %v1629
        %4498 = vmatprep.subr.mxu0 0.0
        %4499 = vmatpush1.msra.mxu0 %v1628
        %4500 = vmatprep.subr.mxu0 0.0
        %4501 = vmatpush1.msra.mxu0 %v1627
        %4502 = vmatprep.subr.mxu0 0.0
        %4503 = vmatpush1.msra.mxu0 %v1626
        %4504 = vmatprep.subr.mxu0 0.0
        %4505 = vmatpush1.msra.mxu0 %v1625
        %4506 = vmatprep.subr.mxu0 0.0
        %4507 = vmatpush1.msra.mxu0 %v1624
        %4508 = vmatprep.subr.mxu0 0.0
        %4509 = vmatpush1.msra.mxu0 %v1623
        %4510 = vmatprep.subr.mxu0 0.0
        %4511 = vmatpush1.msra.mxu0 %v1622
        %4512 = vmatprep.subr.mxu0 0.0
        %4513 = vmatpush2.msra.mxu0 0.0
        %4514 = vmatprep.subr.mxu0 0.0
        %4515 = vmatpush2.msra.mxu0 0.0
        %4516 = vmatprep.subr.mxu0 0.0
        %4517 = vmatpush2.msra.mxu0 0.0
        %4518 = vmatprep.subr.mxu0 0.0
        %4519 = vmatpush2.msra.mxu0 0.0
        %4520 = vmatprep.subr.mxu0 0.0
        %4521 = vmatpush2.msra.mxu0 0.0
        %4522 = vmatprep.subr.mxu0 0.0
        %4523 = vmatpush2.msra.mxu0 0.0
        %4524 = vmatprep.subr.mxu0 0.0
        %4525 = vmatpush2.msra.mxu0 0.0
        %4526 = vmatprep.subr.mxu0 0.0
        %4527 = vmatpush2.msra.mxu0 0.0
        %4528 = vmatprep.subr.mxu0 0.0
        %4529 = vmatpush2.msra.mxu0 0.0
        %4530 = vmatprep.subr.mxu0 0.0
        %4531 = vmatpush2.msra.mxu0 0.0
        %4532 = vmatprep.subr.mxu0 0.0
        %4533 = vmatpush2.msra.mxu0 0.0
        %4534 = vmatprep.subr.mxu0 0.0
        %4535 = vmatpush2.msra.mxu0 0.0
        %4536 = vmatprep.subr.mxu0 0.0
        %4537 = vmatpush2.msra.mxu0 0.0
        %4538 = vmatprep.subr.mxu0 0.0
        %4539 = vmatpush2.msra.mxu0 0.0
        %4540 = vmatprep.subr.mxu0 0.0
        %4541 = vmatpush2.msra.mxu0 0.0
        %4542 = vmatprep.subr.mxu0 0.0
        %4543 = vmatpush2.msra.mxu0 0.0
        %4544 = vmatprep.mubr.f32.mxu0 0.0
        %4545 = vmatmul.mubr.f32.gmra.mxu0 %v4477
        %v4546 = vpop.f32.mrf.mxu0
        %v4547 = vadd.f32 %v4251, %v4546
        %v4548 = vpop.f32.mrf.mxu0
        %4549 = vdwg.mxu0
        %4550 = vmatprep.subr.mxu0 0.0
        %4551 = vmatpush1.msra.mxu0 %v1723
        %4552 = vmatprep.subr.mxu0 0.0
        %4553 = vmatpush1.msra.mxu0 %v1722
        %4554 = vmatprep.subr.mxu0 0.0
        %4555 = vmatpush1.msra.mxu0 %v1721
        %4556 = vmatprep.subr.mxu0 0.0
        %4557 = vmatpush1.msra.mxu0 %v1720
        %4558 = vmatprep.subr.mxu0 0.0
        %4559 = vmatpush1.msra.mxu0 %v1719
        %4560 = vmatprep.subr.mxu0 0.0
        %4561 = vmatpush1.msra.mxu0 %v1718
        %4562 = vmatprep.subr.mxu0 0.0
        %4563 = vmatpush1.msra.mxu0 %v1717
        %4564 = vmatprep.subr.mxu0 0.0
        %4565 = vmatpush1.msra.mxu0 %v1716
        %4566 = vmatprep.subr.mxu0 0.0
        %4567 = vmatpush1.msra.mxu0 %v1715
        %4568 = vmatprep.subr.mxu0 0.0
        %4569 = vmatpush1.msra.mxu0 %v1714
        %4570 = vmatprep.subr.mxu0 0.0
        %4571 = vmatpush1.msra.mxu0 %v1713
        %4572 = vmatprep.subr.mxu0 0.0
        %4573 = vmatpush1.msra.mxu0 %v1712
        %4574 = vmatprep.subr.mxu0 0.0
        %4575 = vmatpush1.msra.mxu0 %v1711
        %4576 = vmatprep.subr.mxu0 0.0
        %4577 = vmatpush1.msra.mxu0 %v1710
        %4578 = vmatprep.subr.mxu0 0.0
        %4579 = vmatpush1.msra.mxu0 %v1709
        %4580 = vmatprep.subr.mxu0 0.0
        %4581 = vmatpush1.msra.mxu0 %v1708
        %4582 = vmatprep.subr.mxu0 0.0
        %4583 = vmatpush2.msra.mxu0 0.0
        %4584 = vmatprep.subr.mxu0 0.0
        %4585 = vmatpush2.msra.mxu0 0.0
        %4586 = vmatprep.subr.mxu0 0.0
        %4587 = vmatpush2.msra.mxu0 0.0
        %4588 = vmatprep.subr.mxu0 0.0
        %4589 = vmatpush2.msra.mxu0 0.0
        %4590 = vmatprep.subr.mxu0 0.0
        %4591 = vmatpush2.msra.mxu0 0.0
        %4592 = vmatprep.subr.mxu0 0.0
        %4593 = vmatpush2.msra.mxu0 0.0
        %4594 = vmatprep.subr.mxu0 0.0
        %4595 = vmatpush2.msra.mxu0 0.0
        %4596 = vmatprep.subr.mxu0 0.0
        %4597 = vmatpush2.msra.mxu0 0.0
        %4598 = vmatprep.subr.mxu0 0.0
        %4599 = vmatpush2.msra.mxu0 0.0
        %4600 = vmatprep.subr.mxu0 0.0
        %4601 = vmatpush2.msra.mxu0 0.0
        %4602 = vmatprep.subr.mxu0 0.0
        %4603 = vmatpush2.msra.mxu0 0.0
        %4604 = vmatprep.subr.mxu0 0.0
        %4605 = vmatpush2.msra.mxu0 0.0
        %4606 = vmatprep.subr.mxu0 0.0
        %4607 = vmatpush2.msra.mxu0 0.0
        %4608 = vmatprep.subr.mxu0 0.0
        %4609 = vmatpush2.msra.mxu0 0.0
        %4610 = vmatprep.subr.mxu0 0.0
        %4611 = vmatpush2.msra.mxu0 0.0
        %4612 = vmatprep.subr.mxu0 0.0
        %4613 = vmatpush2.msra.mxu0 0.0
        %4614 = vmatprep.mubr.f32.mxu0 0.0
        %4615 = vmatmul.mubr.f32.gmra.mxu0 %v4547
        %v4616 = vpop.f32.mrf.mxu0
        %v4617 = vadd.f32 %v1724, %v4616
        %v4618 = vpop.f32.mrf.mxu0
        %4619 = vdwg.mxu0
        %v4620 = vsel %vm1795, %v4617, 0.0
        %v4621 = vsel %vm1797, %v4620, 0.0
        %4622 = vadd.xlane.f32.xlu0 %v4621
        %v4623 = vpop.xlane.xlu0 %4622
        %v4624 = vsub.f32 0.0, %v4623
        %v4625 = vmul.f32 %v4624, 1.442695
        %v4626 = vpow.pop %v4625
        %v4627 = vadd.f32 %v4626, 1.0
        %v4628 = vrcp.pop %v4627
        %v4629 = vsel %vm1806, %v4617, -3.4028235e+38
        %v4630 = vsel %vm1797, %v4629, -inf
        %4631 = vmax.xlane.f32.xlu0 %v4630
        %v4632 = vpop.xlane.xlu0 %4631
        %v4633 = vsub.f32 %v4629, %v4632
        %v4634 = vmul.f32 %v4633, 1.442695
        %v4635 = vpow.pop %v4634
        %v4636 = vsel %vm1797, %v4635, 0.0
        %4637 = vadd.xlane.f32.xlu0 %v4636
        %v4638 = vpop.xlane.xlu0 %4637
        %v4639 = vrcp.pop %v4638
        %v4640 = vmul.f32 %v4635, %v4639
        %v4641 = vsub.f32 1.0, %v4628
        %v4642 = vmul.f32 %v4641, %v4406
        %v4643 = vmul.f32 %v4642, %v931
        %v4644 = vmul.f32 %v4628, %v4640
        %v4646 = vsel %vm1305, %v4643, 0
        %4648 = vmatprep.subr.mxu0 0.0
        %4649 = vmatpush1.msra.mxu0 0.0
        %4650 = vmatprep.subr.mxu0 0.0
        %4651 = vmatpush1.msra.mxu0 0.0
        %4652 = vmatprep.subr.mxu0 0.0
        %4653 = vmatpush1.msra.mxu0 0.0
        %4654 = vmatprep.subr.mxu0 0.0
        %4655 = vmatpush1.msra.mxu0 0.0
        %4656 = vmatprep.subr.mxu0 0.0
        %4657 = vmatpush1.msra.mxu0 0.0
        %4658 = vmatprep.subr.mxu0 0.0
        %4659 = vmatpush1.msra.mxu0 0.0
        %4660 = vmatprep.subr.mxu0 0.0
        %4661 = vmatpush1.msra.mxu0 0.0
        %4662 = vmatprep.subr.mxu0 0.0
        %4663 = vmatpush1.msra.mxu0 0.0
        %4664 = vmatprep.subr.mxu0 0.0
        %4665 = vmatpush1.msra.mxu0 0.0
        %4666 = vmatprep.subr.mxu0 0.0
        %4667 = vmatpush1.msra.mxu0 0.0
        %4668 = vmatprep.subr.mxu0 0.0
        %4669 = vmatpush1.msra.mxu0 0.0
        %4670 = vmatprep.subr.mxu0 0.0
        %4671 = vmatpush1.msra.mxu0 0.0
        %4672 = vmatprep.subr.mxu0 0.0
        %4673 = vmatpush1.msra.mxu0 0.0
        %4674 = vmatprep.subr.mxu0 0.0
        %4675 = vmatpush1.msra.mxu0 0.0
        %4676 = vmatprep.subr.mxu0 0.0
        %4677 = vmatpush1.msra.mxu0 0.0
        %4678 = vmatprep.subr.mxu0 0.0
        %4679 = vmatpush1.msra.mxu0 %v941
        %4680 = vmatprep.subr.mxu0 0.0
        %4681 = vmatpush2.msra.mxu0 0.0
        %4682 = vmatprep.subr.mxu0 0.0
        %4683 = vmatpush2.msra.mxu0 0.0
        %4684 = vmatprep.subr.mxu0 0.0
        %4685 = vmatpush2.msra.mxu0 0.0
        %4686 = vmatprep.subr.mxu0 0.0
        %4687 = vmatpush2.msra.mxu0 0.0
        %4688 = vmatprep.subr.mxu0 0.0
        %4689 = vmatpush2.msra.mxu0 0.0
        %4690 = vmatprep.subr.mxu0 0.0
        %4691 = vmatpush2.msra.mxu0 0.0
        %4692 = vmatprep.subr.mxu0 0.0
        %4693 = vmatpush2.msra.mxu0 0.0
        %4694 = vmatprep.subr.mxu0 0.0
        %4695 = vmatpush2.msra.mxu0 0.0
        %4696 = vmatprep.subr.mxu0 0.0
        %4697 = vmatpush2.msra.mxu0 0.0
        %4698 = vmatprep.subr.mxu0 0.0
        %4699 = vmatpush2.msra.mxu0 0.0
        %4700 = vmatprep.subr.mxu0 0.0
        %4701 = vmatpush2.msra.mxu0 0.0
        %4702 = vmatprep.subr.mxu0 0.0
        %4703 = vmatpush2.msra.mxu0 0.0
        %4704 = vmatprep.subr.mxu0 0.0
        %4705 = vmatpush2.msra.mxu0 0.0
        %4706 = vmatprep.subr.mxu0 0.0
        %4707 = vmatpush2.msra.mxu0 0.0
        %4708 = vmatprep.subr.mxu0 0.0
        %4709 = vmatpush2.msra.mxu0 0.0
        %4710 = vmatprep.subr.mxu0 0.0
        %4711 = vmatpush2.msra.mxu0 0.0
        %4712 = vmatprep.mubr.f32.mxu0 0.0
        %4713 = vmatmul.mubr.f32.gmra.mxu0 %v4646
        %v4714 = vpop.f32.mrf.mxu0
        %v4715 = vadd.f32 0.0, %v4714
        %v4716 = vpop.f32.mrf.mxu0
        %4717 = vdwg.mxu0
        %v4718 = vadd.f32 %v4644, %v4715
        %v4719 = vsel %vm1897, %v4718, -1.0
        %v4720 = vsel %vm1797, %v4719, -inf
        %4721 = vmax.xlane.f32.xlu0 %v4720
        %v4722 = vpop.xlane.xlu0 %4721
        %vm4723 = vcmp.ge.f32.partialorder %v4719, %v4722
        %v4724 = vsel %vm4723, %v935, 128.0
        %v4725 = vsel %vm1797, %v4724, inf
        %4726 = vmin.xlane.f32.xlu0 %v4725
        %v4727 = vpop.xlane.xlu0 %4726
        %vm4728 = vcmp.eq.s32.totalorder %v934, 4
        %v4729 = vsel %vm4728, 1, 0
        %v4730 = vcvt.s32.f32 %v4729
        %v4731 = vmul.f32 %v4727, %v4730
        %v4732 = vadd.f32 %v3797, %v4731
        %v4733 = vcvt.f32.s32.to.zero.pseudo %v4732
        %vm4734 = vcmask 32768
        %4735 = vst.msk [vmem:[%s648] sm:$0x1] %vm4734, %v4733
        %s4736 = sand.u32 %s398, 1
        %s4737 = scalar_lea.sflag [#allocation4], %s4736
        %s4738 = sand.u32 %s398, 1
        %s4739 = scalar_lea.vmem [#allocation14], %s4738
        // Predicated region
        $region113: #{run.1} parent=83 // pred_check
          %p4740 = pneg %p408
        $region114: #{run.1} parent=83 // pred_check_branch
          %4742 = sbr.rel (%p4740) target = $region116
        $region115: #{run.1} parent=83 // pred_region
          %s4744 = ssub.s32 16, 16
          %4745 = vsyncadd %s4737, %s4744
          %s4746 = smul.addr %s34, 16
          %s4747 = scalar_lea.hbm %s16, %s4746
          %s4749 = sshll.u32 %s4739, 4
          %s4750 = int_to_ptr.vmem [resolvable:$true] %s4749
          %4752 = dma.vmem_to_hbm [thread:$0]  %s4750, 16, %s4747, %s4737
        $region116: #{run.1} parent=83 // pred_fallthru
          _
      $region84: #{run.1} parent=5 // pred_fallthru
        _
      %p4753 = scmp.le.s32.totalorder 2, %s29
      // Predicated region
      $region117: #{run.1} parent=5 // pred_check
        %p4754 = pneg %p4753
      $region118: #{run.1} parent=5 // pred_check_branch
        %4756 = sbr.rel (%p4754) target = $region120
      $region119: #{run.1} parent=5 // pred_region
        %s4757 = ssub.s32 %s29, 2
        // Predicated region
        $region121: #{run.1} parent=119 // pred_check
          %p4758 = pneg %p414
        $region122: #{run.1} parent=119 // pred_check_branch
          %4760 = sbr.rel (%p4758) target = $region124
        $region123: #{run.1} parent=119 // pred_region
          %s4761 = sand.u32 %s399, 1
          %s4762 = scalar_lea.sflag [#allocation4], %s4761
          %s4763 = sand.u32 %s399, 1
          %s4764 = scalar_lea.vmem [#allocation14], %s4763
          %4765 = dma.done %s4762, 16
        $region124: #{run.1} parent=119 // pred_fallthru
          _
      $region120: #{run.1} parent=5 // pred_fallthru
        _
    $region6: #{run.1} parent=1 // loop_footer
      %s33 = sadd.s32 1, %s29
    $region7: #{run.1} parent=1 // loop_footer_branch
      %28 = sbr.rel target = $region3
    $region8: #{run.1} parent=1 // loop_exit
      _
    %4766 = vsyncpa [#allocation3], 1
    %s4767 = scalar_lea.sflag [#allocation3], 1
    %4768 = vsyncpa %s4767, 1
    %4769 = vsyncpa [#allocation6], 1
    %4770 = vsyncpa [#allocation9], 1
    %4771 = vsyncpa [#allocation12], 1
    %4772 = vsyncpa [#allocation4], 1
    %s4773 = scalar_lea.sflag [#allocation4], 1
    %4774 = vsyncpa %s4773, 1

</llo_original>
